<compile_context>
chip_gen: v7x
topology: tpu7x:2x2x1
jax: 0.10.0
libtpu: 0.0.40
codegen_flags: <defaults>
</compile_context>

<pallas_src>
import functools

import jax
import jax.numpy as jnp
from jax.experimental import pallas as pl
from jax.experimental.pallas import tpu as pltpu


# ----------------------------------------------------------------------------
# Pallas kernel: one LSTM layer, full sequence, grid over directions.
# The recurrence runs as an unrolled in-kernel loop; h/c are value carries.
# ----------------------------------------------------------------------------
def _lstm_layer_kernel(len_ref, gx_ref, whh_ref, y_ref, hn_ref, *,
                       hidden_size, seq_len):
    H = hidden_size
    T = seq_len
    B = len_ref.shape[0]                       # padded batch (multiple of 8)

    is_rev = pl.program_id(0) == 1             # direction 0 = forward, 1 = reverse
    lens = len_ref[...]                        # (B, 1) int32
    whh = whh_ref[...]                         # (H, 4H), loop-invariant

    def step(t, carry):
        h_prev, c_prev = carry
        t_idx = jnp.where(is_rev, T - 1 - t, t)

        # Recurrent projection only; the x projection was hoisted into gx.
        gates = gx_ref[t_idx] + jnp.dot(h_prev, whh,
                                        preferred_element_type=jnp.float32)

        # PyTorch gate order [i, f, g, o]
        i_g = jax.nn.sigmoid(gates[:, 0 * H:1 * H])
        f_g = jax.nn.sigmoid(gates[:, 1 * H:2 * H])
        g_g = jnp.tanh(gates[:, 2 * H:3 * H])
        o_g = jax.nn.sigmoid(gates[:, 3 * H:4 * H])

        c_new = f_g * c_prev + i_g * g_g
        h_new = o_g * jnp.tanh(c_new)

        valid = (t_idx < lens).astype(jnp.float32)          # (B, 1)
        h_next = valid * h_new + (1.0 - valid) * h_prev
        c_next = valid * c_new + (1.0 - valid) * c_prev

        y_ref[t_idx] = valid * h_new                        # padded positions -> 0
        return h_next, c_next

    h0 = jnp.zeros((B, H), jnp.float32)
    c0 = jnp.zeros((B, H), jnp.float32)
    h_fin, _ = jax.lax.fori_loop(0, T, step, (h0, c0), unroll=True)
    hn_ref[...] = h_fin


def lstm_layer(x, lens2d, layer_params, *, bidirectional):
    """One LSTM layer (both directions fused into a single pallas_call).

    x:       (T, B_pad, D_in) float32
    lens2d:  (B_pad, 1) int32
    returns  y (T, B_pad, num_dirs*H), h_n (num_dirs, B_pad, H)
    """
    T, B_pad, _ = x.shape
    num_dirs = 2 if bidirectional else 1
    H = layer_params[0]["w_hh_t"].shape[0]

    w_ih_t = jnp.stack([layer_params[d]["w_ih_t"] for d in range(num_dirs)])  # (D, Din, 4H)
    w_hh_t = jnp.stack([layer_params[d]["w_hh_t"] for d in range(num_dirs)])  # (D, H, 4H)
    bias = jnp.stack([layer_params[d]["bias"] for d in range(num_dirs)])      # (D, 1, 4H)

    # Hoisted input projection: one big matmul per direction, outside the
    # sequential recurrence (plain XLA / MXU-friendly tall LHS).
    gx = jnp.einsum("tbi,dig->dtbg", x, w_ih_t,
                    preferred_element_type=jnp.float32) + bias[:, None, :, :]
    # gx: (num_dirs, T, B_pad, 4H)

    kernel = functools.partial(_lstm_layer_kernel, hidden_size=H, seq_len=T)

    y, hn = pl.pallas_call(
        kernel,
        out_shape=(
            jax.ShapeDtypeStruct((num_dirs, T, B_pad, H), jnp.float32),
            jax.ShapeDtypeStruct((num_dirs, B_pad, H), jnp.float32),
        ),
        grid=(num_dirs,),
        in_specs=[
            pl.BlockSpec((B_pad, 1), lambda d: (0, 0)),
            pl.BlockSpec((None, T, B_pad, 4 * H), lambda d: (d, 0, 0, 0)),
            pl.BlockSpec((None, H, 4 * H), lambda d: (d, 0, 0)),
        ],
        out_specs=(
            pl.BlockSpec((None, T, B_pad, H), lambda d: (d, 0, 0, 0)),
            pl.BlockSpec((None, B_pad, H), lambda d: (d, 0, 0)),
        ),
        compiler_params=pltpu.CompilerParams(
            dimension_semantics=("parallel",)),
    )(lens2d, gx, w_hh_t)

    # (num_dirs, T, B_pad, H) -> (T, B_pad, num_dirs*H)   [fwd, rev] feature concat
    y = jnp.transpose(y, (1, 2, 0, 3)).reshape(T, B_pad, num_dirs * H)
    return y, hn


# ----------------------------------------------------------------------------
# Parameter init (mirrors the module's init_params, deterministically in JAX).
# ----------------------------------------------------------------------------
def _orthogonal(key, shape):
    a = jax.random.normal(key, shape, dtype=jnp.float32)
    q, r = jnp.linalg.qr(a)
    d = jnp.diagonal(r)
    q = q * jnp.where(d >= 0, 1.0, -1.0)[None, :]
    return q[: shape[0], : shape[1]]


def _kaiming_normal(key, shape):
    fan_in = shape[1]
    std = jnp.sqrt(2.0 / fan_in)
    return std * jax.random.normal(key, shape, dtype=jnp.float32)


def init_lstm_params(key, input_size, hidden_size, num_layers, bidirectional):
    num_dirs = 2 if bidirectional else 1
    params = []
    for layer in range(num_layers):
        layer_in = input_size if layer == 0 else hidden_size * num_dirs
        dirs = []
        for _ in range(num_dirs):
            key, k1, k2 = jax.random.split(key, 3)
            w_ih = _kaiming_normal(k1, (4 * hidden_size, layer_in))   # (4H, D_in)
            w_hh = _orthogonal(k2, (4 * hidden_size, hidden_size))    # (4H, H)
            b_ih = jnp.zeros((4 * hidden_size,), jnp.float32)
            b_hh = jnp.zeros((4 * hidden_size,), jnp.float32)
            # bias_hh.chunk(4)[1].fill_(1)  -> forget-gate bias = 1
            b_hh = b_hh.at[hidden_size:2 * hidden_size].set(1.0)
            dirs.append(dict(
                w_ih_t=w_ih.T,                       # (D_in, 4H)
                w_hh_t=w_hh.T,                       # (H, 4H)
                bias=(b_ih + b_hh)[None, :],         # (1, 4H)
            ))
        params.append(dirs)
    return params


# ----------------------------------------------------------------------------
# Full module forward: returns `hidden` exactly like the PyTorch module.
# ----------------------------------------------------------------------------
def lstm_forward(params, x, lengths, *, bidirectional):
    T, B, _ = x.shape

    # Pad batch to a multiple of 8 (f32 sublane); padded rows have length 0
    # so they stay exactly zero and are sliced off at the end.
    B_pad = max(8, ((B + 7) // 8) * 8)
    if B_pad != B:
        x = jnp.pad(x, ((0, 0), (0, B_pad - B), (0, 0)))
        lengths_p = jnp.pad(lengths.astype(jnp.int32), (0, B_pad - B))
    else:
        lengths_p = lengths.astype(jnp.int32)
    lens2d = lengths_p[:, None]                       # (B_pad, 1)

    layer_in = x
    h_finals = []
    for layer_params in params:
        y, hn = lstm_layer(layer_in, lens2d, layer_params,
                           bidirectional=bidirectional)
        layer_in = y
        h_finals.append(hn)                           # (num_dirs, B_pad, H)

    hidden = jnp.concatenate(h_finals, axis=0)        # (L*num_dirs, B_pad, H)
    return hidden[:, :B, :]


# ----------------------------------------------------------------------------
# Pure-JAX reference (lax.scan) for a correctness check.
# ----------------------------------------------------------------------------
def _lstm_reference(params, x, lengths, *, bidirectional):
    T, B, _ = x.shape
    num_dirs = 2 if bidirectional else 1
    layer_in = x
    h_fin = []
    for layer_params in params:
        ys = []
        for d in range(num_dirs):
            p = layer_params[d]
            H = p["w_hh_t"].shape[0]
            ts = jnp.arange(T) if d == 0 else jnp.arange(T - 1, -1, -1)

            def step(carry, t, p=p, H=H, layer_in=layer_in):
                h, c = carry
                g = layer_in[t] @ p["w_ih_t"] + h @ p["w_hh_t"] + p["bias"]
                i_g = jax.nn.sigmoid(g[:, :H])
                f_g = jax.nn.sigmoid(g[:, H:2 * H])
                g_g = jnp.tanh(g[:, 2 * H:3 * H])
                o_g = jax.nn.sigmoid(g[:, 3 * H:])
                c_new = f_g * c + i_g * g_g
                h_new = o_g * jnp.tanh(c_new)
                m = (t < lengths).astype(jnp.float32)[:, None]
                return (m * h_new + (1 - m) * h, m * c_new + (1 - m) * c), m * h_new

            init = (jnp.zeros((B, H), jnp.float32), jnp.zeros((B, H), jnp.float32))
            (h_T, _), y_d = jax.lax.scan(step, init, ts)
            if d == 1:
                y_d = y_d[::-1]
            ys.append(y_d)
            h_fin.append(h_T)
        layer_in = jnp.concatenate(ys, -1) if num_dirs == 2 else ys[0]
    return jnp.stack(h_fin, 0)


if __name__ == "__main__":
    INPUT_SIZE = 16
    HIDDEN_SIZE = 32
    NUM_LAYERS = 2
    BIDIRECTIONAL = True
    SEQ_LEN = 8
    BATCH = 4

    key = jax.random.PRNGKey(0)
    k_param, k_x = jax.random.split(key)

    params = init_lstm_params(k_param, INPUT_SIZE, HIDDEN_SIZE,
                              NUM_LAYERS, BIDIRECTIONAL)

    x = jax.random.normal(k_x, (SEQ_LEN, BATCH, INPUT_SIZE), dtype=jnp.float32)
    # pack_padded_sequence expects lengths sorted in decreasing order.
    lengths = jnp.array([8, 7, 5, 3], dtype=jnp.int32)

    fwd = jax.jit(functools.partial(lstm_forward, bidirectional=BIDIRECTIONAL))
    hidden = fwd(params, x, lengths)
    hidden = jax.block_until_ready(hidden)

    num_dirs = 2 if BIDIRECTIONAL else 1
    assert hidden.shape == (NUM_LAYERS * num_dirs, BATCH, HIDDEN_SIZE)
    assert bool(jnp.all(jnp.isfinite(hidden)))

    ref_hidden = _lstm_reference(params, x, lengths, bidirectional=BIDIRECTIONAL)
    max_err = float(jnp.max(jnp.abs(hidden - ref_hidden)))
    assert max_err < 2e-3, f"mismatch vs reference: max_err={max_err}"

    print("KERNEL_OK")
</pallas_src>

<mosaic_0001>
module attributes {stable_mosaic.version = 11 : i64} {
  func.func @_lstm_layer_kernel(%arg0: i32, %arg1: memref<8x1xi32, #tpu.memory_space<vmem>>, %arg2: memref<1x8x8x128xf32, #tpu.memory_space<vmem>>, %arg3: memref<1x32x128xf32, #tpu.memory_space<vmem>>, %arg4: memref<1x8x8x32xf32, #tpu.memory_space<vmem>>, %arg5: memref<1x8x32xf32, #tpu.memory_space<vmem>>) attributes {dimension_semantics = [#tpu.dimension_semantics<parallel>], iteration_bounds = array<i64: 2>, scalar_prefetch = 0 : i64, scratch_operands = 0 : i64, tpu.core_type = #tpu.core_type<tc>, window_params = [{pipeline_mode = #tpu.pipeline_mode<synchronous>, transform_indices = @transform_0, window_bounds = array<i64: 8, 1>}, {transform_indices = @transform_1, window_bounds = array<i64: 1, 8, 8, 128>}, {transform_indices = @transform_2, window_bounds = array<i64: 1, 32, 128>}, {transform_indices = @transform_3, window_bounds = array<i64: 1, 8, 8, 32>}, {transform_indices = @transform_4, window_bounds = array<i64: 1, 8, 32>}]} {
    %c1_i32 = arith.constant 1 : i32
    %0 = arith.cmpi eq, %arg0, %c1_i32 : i32
    %c0 = arith.constant 0 : index
    %c0_0 = arith.constant 0 : index
    %1 = vector.load %arg1[%c0, %c0_0] : memref<8x1xi32, #tpu.memory_space<vmem>>, vector<8x1xi32>
    %c0_1 = arith.constant 0 : index
    %c0_2 = arith.constant 0 : index
    %c0_3 = arith.constant 0 : index
    %2 = vector.load %arg3[%c0_1, %c0_2, %c0_3] : memref<1x32x128xf32, #tpu.memory_space<vmem>>, vector<1x32x128xf32>
    %3 = vector.shape_cast %2 : vector<1x32x128xf32> to vector<32x128xf32>
    %cst = arith.constant 0.000000e+00 : f32
    %4 = vector.broadcast %cst : f32 to vector<8x32xf32>
    %cst_4 = arith.constant 0.000000e+00 : f32
    %5 = vector.broadcast %cst_4 : f32 to vector<8x32xf32>
    %c0_i32 = arith.constant 0 : i32
    %c7_i32 = arith.constant 7 : i32
    %6 = arith.subi %c7_i32, %c0_i32 : i32
    %7 = arith.select %0, %6, %c0_i32 : i32
    %c0_5 = arith.constant 0 : index
    %8 = arith.index_cast %7 : i32 to index
    %c0_6 = arith.constant 0 : index
    %c0_7 = arith.constant 0 : index
    %9 = vector.load %arg2[%c0_5, %8, %c0_6, %c0_7] : memref<1x8x8x128xf32, #tpu.memory_space<vmem>>, vector<1x1x8x128xf32>
    %10 = vector.shape_cast %9 : vector<1x1x8x128xf32> to vector<8x128xf32>
    %cst_8 = arith.constant dense<0.000000e+00> : vector<8x128xf32>
    %11 = tpu.matmul %4, %3, %cst_8 {dimension_numbers = #tpu.dot_dimension_numbers<[1], [0], [0], [1], [0, 0, 1, 1], [], []>} : vector<8x32xf32>, vector<32x128xf32>, vector<8x128xf32> -> vector<8x128xf32>
    %12 = arith.addf %10, %11 : vector<8x128xf32>
    %13 = vector.extract_strided_slice %12 {offsets = [0, 0], sizes = [8, 32], strides = [1, 1]} : vector<8x128xf32> to vector<8x32xf32>
    %14 = arith.negf %13 : vector<8x32xf32>
    %15 = math.exp %14 : vector<8x32xf32>
    %cst_9 = arith.constant 1.000000e+00 : f32
    %16 = vector.broadcast %cst_9 : f32 to vector<8x32xf32>
    %17 = arith.addf %16, %15 : vector<8x32xf32>
    %18 = arith.divf %16, %17 : vector<8x32xf32>
    %19 = vector.extract_strided_slice %12 {offsets = [0, 32], sizes = [8, 32], strides = [1, 1]} : vector<8x128xf32> to vector<8x32xf32>
    %20 = arith.negf %19 : vector<8x32xf32>
    %21 = math.exp %20 : vector<8x32xf32>
    %cst_10 = arith.constant 1.000000e+00 : f32
    %22 = vector.broadcast %cst_10 : f32 to vector<8x32xf32>
    %23 = arith.addf %22, %21 : vector<8x32xf32>
    %24 = arith.divf %22, %23 : vector<8x32xf32>
    %25 = vector.extract_strided_slice %12 {offsets = [0, 64], sizes = [8, 32], strides = [1, 1]} : vector<8x128xf32> to vector<8x32xf32>
    %26 = math.tanh %25 : vector<8x32xf32>
    %27 = vector.extract_strided_slice %12 {offsets = [0, 96], sizes = [8, 32], strides = [1, 1]} : vector<8x128xf32> to vector<8x32xf32>
    %28 = arith.negf %27 : vector<8x32xf32>
    %29 = math.exp %28 : vector<8x32xf32>
    %cst_11 = arith.constant 1.000000e+00 : f32
    %30 = vector.broadcast %cst_11 : f32 to vector<8x32xf32>
    %31 = arith.addf %30, %29 : vector<8x32xf32>
    %32 = arith.divf %30, %31 : vector<8x32xf32>
    %33 = arith.mulf %24, %5 : vector<8x32xf32>
    %34 = arith.mulf %18, %26 : vector<8x32xf32>
    %35 = arith.addf %33, %34 : vector<8x32xf32>
    %36 = math.tanh %35 : vector<8x32xf32>
    %37 = arith.mulf %32, %36 : vector<8x32xf32>
    %38 = vector.broadcast %7 : i32 to vector<8x1xi32>
    %39 = arith.cmpi slt, %38, %1 : vector<8x1xi32>
    %40 = arith.extui %39 : vector<8x1xi1> to vector<8x1xi32>
    %41 = arith.sitofp %40 : vector<8x1xi32> to vector<8x1xf32>
    %42 = vector.broadcast %41 : vector<8x1xf32> to vector<8x32xf32>
    %43 = arith.mulf %42, %37 : vector<8x32xf32>
    %cst_12 = arith.constant 1.000000e+00 : f32
    %44 = vector.broadcast %cst_12 : f32 to vector<8x1xf32>
    %45 = arith.subf %44, %41 : vector<8x1xf32>
    %46 = vector.broadcast %45 : vector<8x1xf32> to vector<8x32xf32>
    %47 = arith.mulf %46, %4 : vector<8x32xf32>
    %48 = arith.addf %43, %47 : vector<8x32xf32>
    %49 = vector.broadcast %41 : vector<8x1xf32> to vector<8x32xf32>
    %50 = arith.mulf %49, %35 : vector<8x32xf32>
    %cst_13 = arith.constant 1.000000e+00 : f32
    %51 = vector.broadcast %cst_13 : f32 to vector<8x1xf32>
    %52 = arith.subf %51, %41 : vector<8x1xf32>
    %53 = vector.broadcast %52 : vector<8x1xf32> to vector<8x32xf32>
    %54 = arith.mulf %53, %5 : vector<8x32xf32>
    %55 = arith.addf %50, %54 : vector<8x32xf32>
    %56 = vector.broadcast %41 : vector<8x1xf32> to vector<8x32xf32>
    %57 = arith.mulf %56, %37 : vector<8x32xf32>
    %c0_14 = arith.constant 0 : index
    %58 = arith.index_cast %7 : i32 to index
    %c0_15 = arith.constant 0 : index
    %c0_16 = arith.constant 0 : index
    %59 = vector.load %arg4[%c0_14, %58, %c0_15, %c0_16] : memref<1x8x8x32xf32, #tpu.memory_space<vmem>>, vector<1x1x8x32xf32>
    %60 = vector.shape_cast %59 : vector<1x1x8x32xf32> to vector<8x32xf32>
    %61 = vector.shape_cast %57 : vector<8x32xf32> to vector<1x1x8x32xf32>
    tpu.vector_store %arg4[%c0_14, %58, %c0_15, %c0_16], %61 {strides = array<i32>} : memref<1x8x8x32xf32, #tpu.memory_space<vmem>>, vector<1x1x8x32xf32>,
    %c1_i32_17 = arith.constant 1 : i32
    %c7_i32_18 = arith.constant 7 : i32
    %62 = arith.subi %c7_i32_18, %c1_i32_17 : i32
    %63 = arith.select %0, %62, %c1_i32_17 : i32
    %c0_19 = arith.constant 0 : index
    %64 = arith.index_cast %63 : i32 to index
    %c0_20 = arith.constant 0 : index
    %c0_21 = arith.constant 0 : index
    %65 = vector.load %arg2[%c0_19, %64, %c0_20, %c0_21] : memref<1x8x8x128xf32, #tpu.memory_space<vmem>>, vector<1x1x8x128xf32>
    %66 = vector.shape_cast %65 : vector<1x1x8x128xf32> to vector<8x128xf32>
    %cst_22 = arith.constant dense<0.000000e+00> : vector<8x128xf32>
    %67 = tpu.matmul %48, %3, %cst_22 {dimension_numbers = #tpu.dot_dimension_numbers<[1], [0], [0], [1], [0, 0, 1, 1], [], []>} : vector<8x32xf32>, vector<32x128xf32>, vector<8x128xf32> -> vector<8x128xf32>
    %68 = arith.addf %66, %67 : vector<8x128xf32>
    %69 = vector.extract_strided_slice %68 {offsets = [0, 0], sizes = [8, 32], strides = [1, 1]} : vector<8x128xf32> to vector<8x32xf32>
    %70 = arith.negf %69 : vector<8x32xf32>
    %71 = math.exp %70 : vector<8x32xf32>
    %cst_23 = arith.constant 1.000000e+00 : f32
    %72 = vector.broadcast %cst_23 : f32 to vector<8x32xf32>
    %73 = arith.addf %72, %71 : vector<8x32xf32>
    %74 = arith.divf %72, %73 : vector<8x32xf32>
    %75 = vector.extract_strided_slice %68 {offsets = [0, 32], sizes = [8, 32], strides = [1, 1]} : vector<8x128xf32> to vector<8x32xf32>
    %76 = arith.negf %75 : vector<8x32xf32>
    %77 = math.exp %76 : vector<8x32xf32>
    %cst_24 = arith.constant 1.000000e+00 : f32
    %78 = vector.broadcast %cst_24 : f32 to vector<8x32xf32>
    %79 = arith.addf %78, %77 : vector<8x32xf32>
    %80 = arith.divf %78, %79 : vector<8x32xf32>
    %81 = vector.extract_strided_slice %68 {offsets = [0, 64], sizes = [8, 32], strides = [1, 1]} : vector<8x128xf32> to vector<8x32xf32>
    %82 = math.tanh %81 : vector<8x32xf32>
    %83 = vector.extract_strided_slice %68 {offsets = [0, 96], sizes = [8, 32], strides = [1, 1]} : vector<8x128xf32> to vector<8x32xf32>
    %84 = arith.negf %83 : vector<8x32xf32>
    %85 = math.exp %84 : vector<8x32xf32>
    %cst_25 = arith.constant 1.000000e+00 : f32
    %86 = vector.broadcast %cst_25 : f32 to vector<8x32xf32>
    %87 = arith.addf %86, %85 : vector<8x32xf32>
    %88 = arith.divf %86, %87 : vector<8x32xf32>
    %89 = arith.mulf %80, %55 : vector<8x32xf32>
    %90 = arith.mulf %74, %82 : vector<8x32xf32>
    %91 = arith.addf %89, %90 : vector<8x32xf32>
    %92 = math.tanh %91 : vector<8x32xf32>
    %93 = arith.mulf %88, %92 : vector<8x32xf32>
    %94 = vector.broadcast %63 : i32 to vector<8x1xi32>
    %95 = arith.cmpi slt, %94, %1 : vector<8x1xi32>
    %96 = arith.extui %95 : vector<8x1xi1> to vector<8x1xi32>
    %97 = arith.sitofp %96 : vector<8x1xi32> to vector<8x1xf32>
    %98 = vector.broadcast %97 : vector<8x1xf32> to vector<8x32xf32>
    %99 = arith.mulf %98, %93 : vector<8x32xf32>
    %cst_26 = arith.constant 1.000000e+00 : f32
    %100 = vector.broadcast %cst_26 : f32 to vector<8x1xf32>
    %101 = arith.subf %100, %97 : vector<8x1xf32>
    %102 = vector.broadcast %101 : vector<8x1xf32> to vector<8x32xf32>
    %103 = arith.mulf %102, %48 : vector<8x32xf32>
    %104 = arith.addf %99, %103 : vector<8x32xf32>
    %105 = vector.broadcast %97 : vector<8x1xf32> to vector<8x32xf32>
    %106 = arith.mulf %105, %91 : vector<8x32xf32>
    %cst_27 = arith.constant 1.000000e+00 : f32
    %107 = vector.broadcast %cst_27 : f32 to vector<8x1xf32>
    %108 = arith.subf %107, %97 : vector<8x1xf32>
    %109 = vector.broadcast %108 : vector<8x1xf32> to vector<8x32xf32>
    %110 = arith.mulf %109, %55 : vector<8x32xf32>
    %111 = arith.addf %106, %110 : vector<8x32xf32>
    %112 = vector.broadcast %97 : vector<8x1xf32> to vector<8x32xf32>
    %113 = arith.mulf %112, %93 : vector<8x32xf32>
    %c0_28 = arith.constant 0 : index
    %114 = arith.index_cast %63 : i32 to index
    %c0_29 = arith.constant 0 : index
    %c0_30 = arith.constant 0 : index
    %115 = vector.load %arg4[%c0_28, %114, %c0_29, %c0_30] : memref<1x8x8x32xf32, #tpu.memory_space<vmem>>, vector<1x1x8x32xf32>
    %116 = vector.shape_cast %115 : vector<1x1x8x32xf32> to vector<8x32xf32>
    %117 = vector.shape_cast %113 : vector<8x32xf32> to vector<1x1x8x32xf32>
    tpu.vector_store %arg4[%c0_28, %114, %c0_29, %c0_30], %117 {strides = array<i32>} : memref<1x8x8x32xf32, #tpu.memory_space<vmem>>, vector<1x1x8x32xf32>,
    %c2_i32 = arith.constant 2 : i32
    %c7_i32_31 = arith.constant 7 : i32
    %118 = arith.subi %c7_i32_31, %c2_i32 : i32
    %119 = arith.select %0, %118, %c2_i32 : i32
    %c0_32 = arith.constant 0 : index
    %120 = arith.index_cast %119 : i32 to index
    %c0_33 = arith.constant 0 : index
    %c0_34 = arith.constant 0 : index
    %121 = vector.load %arg2[%c0_32, %120, %c0_33, %c0_34] : memref<1x8x8x128xf32, #tpu.memory_space<vmem>>, vector<1x1x8x128xf32>
    %122 = vector.shape_cast %121 : vector<1x1x8x128xf32> to vector<8x128xf32>
    %cst_35 = arith.constant dense<0.000000e+00> : vector<8x128xf32>
    %123 = tpu.matmul %104, %3, %cst_35 {dimension_numbers = #tpu.dot_dimension_numbers<[1], [0], [0], [1], [0, 0, 1, 1], [], []>} : vector<8x32xf32>, vector<32x128xf32>, vector<8x128xf32> -> vector<8x128xf32>
    %124 = arith.addf %122, %123 : vector<8x128xf32>
    %125 = vector.extract_strided_slice %124 {offsets = [0, 0], sizes = [8, 32], strides = [1, 1]} : vector<8x128xf32> to vector<8x32xf32>
    %126 = arith.negf %125 : vector<8x32xf32>
    %127 = math.exp %126 : vector<8x32xf32>
    %cst_36 = arith.constant 1.000000e+00 : f32
    %128 = vector.broadcast %cst_36 : f32 to vector<8x32xf32>
    %129 = arith.addf %128, %127 : vector<8x32xf32>
    %130 = arith.divf %128, %129 : vector<8x32xf32>
    %131 = vector.extract_strided_slice %124 {offsets = [0, 32], sizes = [8, 32], strides = [1, 1]} : vector<8x128xf32> to vector<8x32xf32>
    %132 = arith.negf %131 : vector<8x32xf32>
    %133 = math.exp %132 : vector<8x32xf32>
    %cst_37 = arith.constant 1.000000e+00 : f32
    %134 = vector.broadcast %cst_37 : f32 to vector<8x32xf32>
    %135 = arith.addf %134, %133 : vector<8x32xf32>
    %136 = arith.divf %134, %135 : vector<8x32xf32>
    %137 = vector.extract_strided_slice %124 {offsets = [0, 64], sizes = [8, 32], strides = [1, 1]} : vector<8x128xf32> to vector<8x32xf32>
    %138 = math.tanh %137 : vector<8x32xf32>
    %139 = vector.extract_strided_slice %124 {offsets = [0, 96], sizes = [8, 32], strides = [1, 1]} : vector<8x128xf32> to vector<8x32xf32>
    %140 = arith.negf %139 : vector<8x32xf32>
    %141 = math.exp %140 : vector<8x32xf32>
    %cst_38 = arith.constant 1.000000e+00 : f32
    %142 = vector.broadcast %cst_38 : f32 to vector<8x32xf32>
    %143 = arith.addf %142, %141 : vector<8x32xf32>
    %144 = arith.divf %142, %143 : vector<8x32xf32>
    %145 = arith.mulf %136, %111 : vector<8x32xf32>
    %146 = arith.mulf %130, %138 : vector<8x32xf32>
    %147 = arith.addf %145, %146 : vector<8x32xf32>
    %148 = math.tanh %147 : vector<8x32xf32>
    %149 = arith.mulf %144, %148 : vector<8x32xf32>
    %150 = vector.broadcast %119 : i32 to vector<8x1xi32>
    %151 = arith.cmpi slt, %150, %1 : vector<8x1xi32>
    %152 = arith.extui %151 : vector<8x1xi1> to vector<8x1xi32>
    %153 = arith.sitofp %152 : vector<8x1xi32> to vector<8x1xf32>
    %154 = vector.broadcast %153 : vector<8x1xf32> to vector<8x32xf32>
    %155 = arith.mulf %154, %149 : vector<8x32xf32>
    %cst_39 = arith.constant 1.000000e+00 : f32
    %156 = vector.broadcast %cst_39 : f32 to vector<8x1xf32>
    %157 = arith.subf %156, %153 : vector<8x1xf32>
    %158 = vector.broadcast %157 : vector<8x1xf32> to vector<8x32xf32>
    %159 = arith.mulf %158, %104 : vector<8x32xf32>
    %160 = arith.addf %155, %159 : vector<8x32xf32>
    %161 = vector.broadcast %153 : vector<8x1xf32> to vector<8x32xf32>
    %162 = arith.mulf %161, %147 : vector<8x32xf32>
    %cst_40 = arith.constant 1.000000e+00 : f32
    %163 = vector.broadcast %cst_40 : f32 to vector<8x1xf32>
    %164 = arith.subf %163, %153 : vector<8x1xf32>
    %165 = vector.broadcast %164 : vector<8x1xf32> to vector<8x32xf32>
    %166 = arith.mulf %165, %111 : vector<8x32xf32>
    %167 = arith.addf %162, %166 : vector<8x32xf32>
    %168 = vector.broadcast %153 : vector<8x1xf32> to vector<8x32xf32>
    %169 = arith.mulf %168, %149 : vector<8x32xf32>
    %c0_41 = arith.constant 0 : index
    %170 = arith.index_cast %119 : i32 to index
    %c0_42 = arith.constant 0 : index
    %c0_43 = arith.constant 0 : index
    %171 = vector.load %arg4[%c0_41, %170, %c0_42, %c0_43] : memref<1x8x8x32xf32, #tpu.memory_space<vmem>>, vector<1x1x8x32xf32>
    %172 = vector.shape_cast %171 : vector<1x1x8x32xf32> to vector<8x32xf32>
    %173 = vector.shape_cast %169 : vector<8x32xf32> to vector<1x1x8x32xf32>
    tpu.vector_store %arg4[%c0_41, %170, %c0_42, %c0_43], %173 {strides = array<i32>} : memref<1x8x8x32xf32, #tpu.memory_space<vmem>>, vector<1x1x8x32xf32>,
    %c3_i32 = arith.constant 3 : i32
    %c7_i32_44 = arith.constant 7 : i32
    %174 = arith.subi %c7_i32_44, %c3_i32 : i32
    %175 = arith.select %0, %174, %c3_i32 : i32
    %c0_45 = arith.constant 0 : index
    %176 = arith.index_cast %175 : i32 to index
    %c0_46 = arith.constant 0 : index
    %c0_47 = arith.constant 0 : index
    %177 = vector.load %arg2[%c0_45, %176, %c0_46, %c0_47] : memref<1x8x8x128xf32, #tpu.memory_space<vmem>>, vector<1x1x8x128xf32>
    %178 = vector.shape_cast %177 : vector<1x1x8x128xf32> to vector<8x128xf32>
    %cst_48 = arith.constant dense<0.000000e+00> : vector<8x128xf32>
    %179 = tpu.matmul %160, %3, %cst_48 {dimension_numbers = #tpu.dot_dimension_numbers<[1], [0], [0], [1], [0, 0, 1, 1], [], []>} : vector<8x32xf32>, vector<32x128xf32>, vector<8x128xf32> -> vector<8x128xf32>
    %180 = arith.addf %178, %179 : vector<8x128xf32>
    %181 = vector.extract_strided_slice %180 {offsets = [0, 0], sizes = [8, 32], strides = [1, 1]} : vector<8x128xf32> to vector<8x32xf32>
    %182 = arith.negf %181 : vector<8x32xf32>
    %183 = math.exp %182 : vector<8x32xf32>
    %cst_49 = arith.constant 1.000000e+00 : f32
    %184 = vector.broadcast %cst_49 : f32 to vector<8x32xf32>
    %185 = arith.addf %184, %183 : vector<8x32xf32>
    %186 = arith.divf %184, %185 : vector<8x32xf32>
    %187 = vector.extract_strided_slice %180 {offsets = [0, 32], sizes = [8, 32], strides = [1, 1]} : vector<8x128xf32> to vector<8x32xf32>
    %188 = arith.negf %187 : vector<8x32xf32>
    %189 = math.exp %188 : vector<8x32xf32>
    %cst_50 = arith.constant 1.000000e+00 : f32
    %190 = vector.broadcast %cst_50 : f32 to vector<8x32xf32>
    %191 = arith.addf %190, %189 : vector<8x32xf32>
    %192 = arith.divf %190, %191 : vector<8x32xf32>
    %193 = vector.extract_strided_slice %180 {offsets = [0, 64], sizes = [8, 32], strides = [1, 1]} : vector<8x128xf32> to vector<8x32xf32>
    %194 = math.tanh %193 : vector<8x32xf32>
    %195 = vector.extract_strided_slice %180 {offsets = [0, 96], sizes = [8, 32], strides = [1, 1]} : vector<8x128xf32> to vector<8x32xf32>
    %196 = arith.negf %195 : vector<8x32xf32>
    %197 = math.exp %196 : vector<8x32xf32>
    %cst_51 = arith.constant 1.000000e+00 : f32
    %198 = vector.broadcast %cst_51 : f32 to vector<8x32xf32>
    %199 = arith.addf %198, %197 : vector<8x32xf32>
    %200 = arith.divf %198, %199 : vector<8x32xf32>
    %201 = arith.mulf %192, %167 : vector<8x32xf32>
    %202 = arith.mulf %186, %194 : vector<8x32xf32>
    %203 = arith.addf %201, %202 : vector<8x32xf32>
    %204 = math.tanh %203 : vector<8x32xf32>
    %205 = arith.mulf %200, %204 : vector<8x32xf32>
    %206 = vector.broadcast %175 : i32 to vector<8x1xi32>
    %207 = arith.cmpi slt, %206, %1 : vector<8x1xi32>
    %208 = arith.extui %207 : vector<8x1xi1> to vector<8x1xi32>
    %209 = arith.sitofp %208 : vector<8x1xi32> to vector<8x1xf32>
    %210 = vector.broadcast %209 : vector<8x1xf32> to vector<8x32xf32>
    %211 = arith.mulf %210, %205 : vector<8x32xf32>
    %cst_52 = arith.constant 1.000000e+00 : f32
    %212 = vector.broadcast %cst_52 : f32 to vector<8x1xf32>
    %213 = arith.subf %212, %209 : vector<8x1xf32>
    %214 = vector.broadcast %213 : vector<8x1xf32> to vector<8x32xf32>
    %215 = arith.mulf %214, %160 : vector<8x32xf32>
    %216 = arith.addf %211, %215 : vector<8x32xf32>
    %217 = vector.broadcast %209 : vector<8x1xf32> to vector<8x32xf32>
    %218 = arith.mulf %217, %203 : vector<8x32xf32>
    %cst_53 = arith.constant 1.000000e+00 : f32
    %219 = vector.broadcast %cst_53 : f32 to vector<8x1xf32>
    %220 = arith.subf %219, %209 : vector<8x1xf32>
    %221 = vector.broadcast %220 : vector<8x1xf32> to vector<8x32xf32>
    %222 = arith.mulf %221, %167 : vector<8x32xf32>
    %223 = arith.addf %218, %222 : vector<8x32xf32>
    %224 = vector.broadcast %209 : vector<8x1xf32> to vector<8x32xf32>
    %225 = arith.mulf %224, %205 : vector<8x32xf32>
    %c0_54 = arith.constant 0 : index
    %226 = arith.index_cast %175 : i32 to index
    %c0_55 = arith.constant 0 : index
    %c0_56 = arith.constant 0 : index
    %227 = vector.load %arg4[%c0_54, %226, %c0_55, %c0_56] : memref<1x8x8x32xf32, #tpu.memory_space<vmem>>, vector<1x1x8x32xf32>
    %228 = vector.shape_cast %227 : vector<1x1x8x32xf32> to vector<8x32xf32>
    %229 = vector.shape_cast %225 : vector<8x32xf32> to vector<1x1x8x32xf32>
    tpu.vector_store %arg4[%c0_54, %226, %c0_55, %c0_56], %229 {strides = array<i32>} : memref<1x8x8x32xf32, #tpu.memory_space<vmem>>, vector<1x1x8x32xf32>,
    %c4_i32 = arith.constant 4 : i32
    %c7_i32_57 = arith.constant 7 : i32
    %230 = arith.subi %c7_i32_57, %c4_i32 : i32
    %231 = arith.select %0, %230, %c4_i32 : i32
    %c0_58 = arith.constant 0 : index
    %232 = arith.index_cast %231 : i32 to index
    %c0_59 = arith.constant 0 : index
    %c0_60 = arith.constant 0 : index
    %233 = vector.load %arg2[%c0_58, %232, %c0_59, %c0_60] : memref<1x8x8x128xf32, #tpu.memory_space<vmem>>, vector<1x1x8x128xf32>
    %234 = vector.shape_cast %233 : vector<1x1x8x128xf32> to vector<8x128xf32>
    %cst_61 = arith.constant dense<0.000000e+00> : vector<8x128xf32>
    %235 = tpu.matmul %216, %3, %cst_61 {dimension_numbers = #tpu.dot_dimension_numbers<[1], [0], [0], [1], [0, 0, 1, 1], [], []>} : vector<8x32xf32>, vector<32x128xf32>, vector<8x128xf32> -> vector<8x128xf32>
    %236 = arith.addf %234, %235 : vector<8x128xf32>
    %237 = vector.extract_strided_slice %236 {offsets = [0, 0], sizes = [8, 32], strides = [1, 1]} : vector<8x128xf32> to vector<8x32xf32>
    %238 = arith.negf %237 : vector<8x32xf32>
    %239 = math.exp %238 : vector<8x32xf32>
    %cst_62 = arith.constant 1.000000e+00 : f32
    %240 = vector.broadcast %cst_62 : f32 to vector<8x32xf32>
    %241 = arith.addf %240, %239 : vector<8x32xf32>
    %242 = arith.divf %240, %241 : vector<8x32xf32>
    %243 = vector.extract_strided_slice %236 {offsets = [0, 32], sizes = [8, 32], strides = [1, 1]} : vector<8x128xf32> to vector<8x32xf32>
    %244 = arith.negf %243 : vector<8x32xf32>
    %245 = math.exp %244 : vector<8x32xf32>
    %cst_63 = arith.constant 1.000000e+00 : f32
    %246 = vector.broadcast %cst_63 : f32 to vector<8x32xf32>
    %247 = arith.addf %246, %245 : vector<8x32xf32>
    %248 = arith.divf %246, %247 : vector<8x32xf32>
    %249 = vector.extract_strided_slice %236 {offsets = [0, 64], sizes = [8, 32], strides = [1, 1]} : vector<8x128xf32> to vector<8x32xf32>
    %250 = math.tanh %249 : vector<8x32xf32>
    %251 = vector.extract_strided_slice %236 {offsets = [0, 96], sizes = [8, 32], strides = [1, 1]} : vector<8x128xf32> to vector<8x32xf32>
    %252 = arith.negf %251 : vector<8x32xf32>
    %253 = math.exp %252 : vector<8x32xf32>
    %cst_64 = arith.constant 1.000000e+00 : f32
    %254 = vector.broadcast %cst_64 : f32 to vector<8x32xf32>
    %255 = arith.addf %254, %253 : vector<8x32xf32>
    %256 = arith.divf %254, %255 : vector<8x32xf32>
    %257 = arith.mulf %248, %223 : vector<8x32xf32>
    %258 = arith.mulf %242, %250 : vector<8x32xf32>
    %259 = arith.addf %257, %258 : vector<8x32xf32>
    %260 = math.tanh %259 : vector<8x32xf32>
    %261 = arith.mulf %256, %260 : vector<8x32xf32>
    %262 = vector.broadcast %231 : i32 to vector<8x1xi32>
    %263 = arith.cmpi slt, %262, %1 : vector<8x1xi32>
    %264 = arith.extui %263 : vector<8x1xi1> to vector<8x1xi32>
    %265 = arith.sitofp %264 : vector<8x1xi32> to vector<8x1xf32>
    %266 = vector.broadcast %265 : vector<8x1xf32> to vector<8x32xf32>
    %267 = arith.mulf %266, %261 : vector<8x32xf32>
    %cst_65 = arith.constant 1.000000e+00 : f32
    %268 = vector.broadcast %cst_65 : f32 to vector<8x1xf32>
    %269 = arith.subf %268, %265 : vector<8x1xf32>
    %270 = vector.broadcast %269 : vector<8x1xf32> to vector<8x32xf32>
    %271 = arith.mulf %270, %216 : vector<8x32xf32>
    %272 = arith.addf %267, %271 : vector<8x32xf32>
    %273 = vector.broadcast %265 : vector<8x1xf32> to vector<8x32xf32>
    %274 = arith.mulf %273, %259 : vector<8x32xf32>
    %cst_66 = arith.constant 1.000000e+00 : f32
    %275 = vector.broadcast %cst_66 : f32 to vector<8x1xf32>
    %276 = arith.subf %275, %265 : vector<8x1xf32>
    %277 = vector.broadcast %276 : vector<8x1xf32> to vector<8x32xf32>
    %278 = arith.mulf %277, %223 : vector<8x32xf32>
    %279 = arith.addf %274, %278 : vector<8x32xf32>
    %280 = vector.broadcast %265 : vector<8x1xf32> to vector<8x32xf32>
    %281 = arith.mulf %280, %261 : vector<8x32xf32>
    %c0_67 = arith.constant 0 : index
    %282 = arith.index_cast %231 : i32 to index
    %c0_68 = arith.constant 0 : index
    %c0_69 = arith.constant 0 : index
    %283 = vector.load %arg4[%c0_67, %282, %c0_68, %c0_69] : memref<1x8x8x32xf32, #tpu.memory_space<vmem>>, vector<1x1x8x32xf32>
    %284 = vector.shape_cast %283 : vector<1x1x8x32xf32> to vector<8x32xf32>
    %285 = vector.shape_cast %281 : vector<8x32xf32> to vector<1x1x8x32xf32>
    tpu.vector_store %arg4[%c0_67, %282, %c0_68, %c0_69], %285 {strides = array<i32>} : memref<1x8x8x32xf32, #tpu.memory_space<vmem>>, vector<1x1x8x32xf32>,
    %c5_i32 = arith.constant 5 : i32
    %c7_i32_70 = arith.constant 7 : i32
    %286 = arith.subi %c7_i32_70, %c5_i32 : i32
    %287 = arith.select %0, %286, %c5_i32 : i32
    %c0_71 = arith.constant 0 : index
    %288 = arith.index_cast %287 : i32 to index
    %c0_72 = arith.constant 0 : index
    %c0_73 = arith.constant 0 : index
    %289 = vector.load %arg2[%c0_71, %288, %c0_72, %c0_73] : memref<1x8x8x128xf32, #tpu.memory_space<vmem>>, vector<1x1x8x128xf32>
    %290 = vector.shape_cast %289 : vector<1x1x8x128xf32> to vector<8x128xf32>
    %cst_74 = arith.constant dense<0.000000e+00> : vector<8x128xf32>
    %291 = tpu.matmul %272, %3, %cst_74 {dimension_numbers = #tpu.dot_dimension_numbers<[1], [0], [0], [1], [0, 0, 1, 1], [], []>} : vector<8x32xf32>, vector<32x128xf32>, vector<8x128xf32> -> vector<8x128xf32>
    %292 = arith.addf %290, %291 : vector<8x128xf32>
    %293 = vector.extract_strided_slice %292 {offsets = [0, 0], sizes = [8, 32], strides = [1, 1]} : vector<8x128xf32> to vector<8x32xf32>
    %294 = arith.negf %293 : vector<8x32xf32>
    %295 = math.exp %294 : vector<8x32xf32>
    %cst_75 = arith.constant 1.000000e+00 : f32
    %296 = vector.broadcast %cst_75 : f32 to vector<8x32xf32>
    %297 = arith.addf %296, %295 : vector<8x32xf32>
    %298 = arith.divf %296, %297 : vector<8x32xf32>
    %299 = vector.extract_strided_slice %292 {offsets = [0, 32], sizes = [8, 32], strides = [1, 1]} : vector<8x128xf32> to vector<8x32xf32>
    %300 = arith.negf %299 : vector<8x32xf32>
    %301 = math.exp %300 : vector<8x32xf32>
    %cst_76 = arith.constant 1.000000e+00 : f32
    %302 = vector.broadcast %cst_76 : f32 to vector<8x32xf32>
    %303 = arith.addf %302, %301 : vector<8x32xf32>
    %304 = arith.divf %302, %303 : vector<8x32xf32>
    %305 = vector.extract_strided_slice %292 {offsets = [0, 64], sizes = [8, 32], strides = [1, 1]} : vector<8x128xf32> to vector<8x32xf32>
    %306 = math.tanh %305 : vector<8x32xf32>
    %307 = vector.extract_strided_slice %292 {offsets = [0, 96], sizes = [8, 32], strides = [1, 1]} : vector<8x128xf32> to vector<8x32xf32>
    %308 = arith.negf %307 : vector<8x32xf32>
    %309 = math.exp %308 : vector<8x32xf32>
    %cst_77 = arith.constant 1.000000e+00 : f32
    %310 = vector.broadcast %cst_77 : f32 to vector<8x32xf32>
    %311 = arith.addf %310, %309 : vector<8x32xf32>
    %312 = arith.divf %310, %311 : vector<8x32xf32>
    %313 = arith.mulf %304, %279 : vector<8x32xf32>
    %314 = arith.mulf %298, %306 : vector<8x32xf32>
    %315 = arith.addf %313, %314 : vector<8x32xf32>
    %316 = math.tanh %315 : vector<8x32xf32>
    %317 = arith.mulf %312, %316 : vector<8x32xf32>
    %318 = vector.broadcast %287 : i32 to vector<8x1xi32>
    %319 = arith.cmpi slt, %318, %1 : vector<8x1xi32>
    %320 = arith.extui %319 : vector<8x1xi1> to vector<8x1xi32>
    %321 = arith.sitofp %320 : vector<8x1xi32> to vector<8x1xf32>
    %322 = vector.broadcast %321 : vector<8x1xf32> to vector<8x32xf32>
    %323 = arith.mulf %322, %317 : vector<8x32xf32>
    %cst_78 = arith.constant 1.000000e+00 : f32
    %324 = vector.broadcast %cst_78 : f32 to vector<8x1xf32>
    %325 = arith.subf %324, %321 : vector<8x1xf32>
    %326 = vector.broadcast %325 : vector<8x1xf32> to vector<8x32xf32>
    %327 = arith.mulf %326, %272 : vector<8x32xf32>
    %328 = arith.addf %323, %327 : vector<8x32xf32>
    %329 = vector.broadcast %321 : vector<8x1xf32> to vector<8x32xf32>
    %330 = arith.mulf %329, %315 : vector<8x32xf32>
    %cst_79 = arith.constant 1.000000e+00 : f32
    %331 = vector.broadcast %cst_79 : f32 to vector<8x1xf32>
    %332 = arith.subf %331, %321 : vector<8x1xf32>
    %333 = vector.broadcast %332 : vector<8x1xf32> to vector<8x32xf32>
    %334 = arith.mulf %333, %279 : vector<8x32xf32>
    %335 = arith.addf %330, %334 : vector<8x32xf32>
    %336 = vector.broadcast %321 : vector<8x1xf32> to vector<8x32xf32>
    %337 = arith.mulf %336, %317 : vector<8x32xf32>
    %c0_80 = arith.constant 0 : index
    %338 = arith.index_cast %287 : i32 to index
    %c0_81 = arith.constant 0 : index
    %c0_82 = arith.constant 0 : index
    %339 = vector.load %arg4[%c0_80, %338, %c0_81, %c0_82] : memref<1x8x8x32xf32, #tpu.memory_space<vmem>>, vector<1x1x8x32xf32>
    %340 = vector.shape_cast %339 : vector<1x1x8x32xf32> to vector<8x32xf32>
    %341 = vector.shape_cast %337 : vector<8x32xf32> to vector<1x1x8x32xf32>
    tpu.vector_store %arg4[%c0_80, %338, %c0_81, %c0_82], %341 {strides = array<i32>} : memref<1x8x8x32xf32, #tpu.memory_space<vmem>>, vector<1x1x8x32xf32>,
    %c6_i32 = arith.constant 6 : i32
    %c7_i32_83 = arith.constant 7 : i32
    %342 = arith.subi %c7_i32_83, %c6_i32 : i32
    %343 = arith.select %0, %342, %c6_i32 : i32
    %c0_84 = arith.constant 0 : index
    %344 = arith.index_cast %343 : i32 to index
    %c0_85 = arith.constant 0 : index
    %c0_86 = arith.constant 0 : index
    %345 = vector.load %arg2[%c0_84, %344, %c0_85, %c0_86] : memref<1x8x8x128xf32, #tpu.memory_space<vmem>>, vector<1x1x8x128xf32>
    %346 = vector.shape_cast %345 : vector<1x1x8x128xf32> to vector<8x128xf32>
    %cst_87 = arith.constant dense<0.000000e+00> : vector<8x128xf32>
    %347 = tpu.matmul %328, %3, %cst_87 {dimension_numbers = #tpu.dot_dimension_numbers<[1], [0], [0], [1], [0, 0, 1, 1], [], []>} : vector<8x32xf32>, vector<32x128xf32>, vector<8x128xf32> -> vector<8x128xf32>
    %348 = arith.addf %346, %347 : vector<8x128xf32>
    %349 = vector.extract_strided_slice %348 {offsets = [0, 0], sizes = [8, 32], strides = [1, 1]} : vector<8x128xf32> to vector<8x32xf32>
    %350 = arith.negf %349 : vector<8x32xf32>
    %351 = math.exp %350 : vector<8x32xf32>
    %cst_88 = arith.constant 1.000000e+00 : f32
    %352 = vector.broadcast %cst_88 : f32 to vector<8x32xf32>
    %353 = arith.addf %352, %351 : vector<8x32xf32>
    %354 = arith.divf %352, %353 : vector<8x32xf32>
    %355 = vector.extract_strided_slice %348 {offsets = [0, 32], sizes = [8, 32], strides = [1, 1]} : vector<8x128xf32> to vector<8x32xf32>
    %356 = arith.negf %355 : vector<8x32xf32>
    %357 = math.exp %356 : vector<8x32xf32>
    %cst_89 = arith.constant 1.000000e+00 : f32
    %358 = vector.broadcast %cst_89 : f32 to vector<8x32xf32>
    %359 = arith.addf %358, %357 : vector<8x32xf32>
    %360 = arith.divf %358, %359 : vector<8x32xf32>
    %361 = vector.extract_strided_slice %348 {offsets = [0, 64], sizes = [8, 32], strides = [1, 1]} : vector<8x128xf32> to vector<8x32xf32>
    %362 = math.tanh %361 : vector<8x32xf32>
    %363 = vector.extract_strided_slice %348 {offsets = [0, 96], sizes = [8, 32], strides = [1, 1]} : vector<8x128xf32> to vector<8x32xf32>
    %364 = arith.negf %363 : vector<8x32xf32>
    %365 = math.exp %364 : vector<8x32xf32>
    %cst_90 = arith.constant 1.000000e+00 : f32
    %366 = vector.broadcast %cst_90 : f32 to vector<8x32xf32>
    %367 = arith.addf %366, %365 : vector<8x32xf32>
    %368 = arith.divf %366, %367 : vector<8x32xf32>
    %369 = arith.mulf %360, %335 : vector<8x32xf32>
    %370 = arith.mulf %354, %362 : vector<8x32xf32>
    %371 = arith.addf %369, %370 : vector<8x32xf32>
    %372 = math.tanh %371 : vector<8x32xf32>
    %373 = arith.mulf %368, %372 : vector<8x32xf32>
    %374 = vector.broadcast %343 : i32 to vector<8x1xi32>
    %375 = arith.cmpi slt, %374, %1 : vector<8x1xi32>
    %376 = arith.extui %375 : vector<8x1xi1> to vector<8x1xi32>
    %377 = arith.sitofp %376 : vector<8x1xi32> to vector<8x1xf32>
    %378 = vector.broadcast %377 : vector<8x1xf32> to vector<8x32xf32>
    %379 = arith.mulf %378, %373 : vector<8x32xf32>
    %cst_91 = arith.constant 1.000000e+00 : f32
    %380 = vector.broadcast %cst_91 : f32 to vector<8x1xf32>
    %381 = arith.subf %380, %377 : vector<8x1xf32>
    %382 = vector.broadcast %381 : vector<8x1xf32> to vector<8x32xf32>
    %383 = arith.mulf %382, %328 : vector<8x32xf32>
    %384 = arith.addf %379, %383 : vector<8x32xf32>
    %385 = vector.broadcast %377 : vector<8x1xf32> to vector<8x32xf32>
    %386 = arith.mulf %385, %371 : vector<8x32xf32>
    %cst_92 = arith.constant 1.000000e+00 : f32
    %387 = vector.broadcast %cst_92 : f32 to vector<8x1xf32>
    %388 = arith.subf %387, %377 : vector<8x1xf32>
    %389 = vector.broadcast %388 : vector<8x1xf32> to vector<8x32xf32>
    %390 = arith.mulf %389, %335 : vector<8x32xf32>
    %391 = arith.addf %386, %390 : vector<8x32xf32>
    %392 = vector.broadcast %377 : vector<8x1xf32> to vector<8x32xf32>
    %393 = arith.mulf %392, %373 : vector<8x32xf32>
    %c0_93 = arith.constant 0 : index
    %394 = arith.index_cast %343 : i32 to index
    %c0_94 = arith.constant 0 : index
    %c0_95 = arith.constant 0 : index
    %395 = vector.load %arg4[%c0_93, %394, %c0_94, %c0_95] : memref<1x8x8x32xf32, #tpu.memory_space<vmem>>, vector<1x1x8x32xf32>
    %396 = vector.shape_cast %395 : vector<1x1x8x32xf32> to vector<8x32xf32>
    %397 = vector.shape_cast %393 : vector<8x32xf32> to vector<1x1x8x32xf32>
    tpu.vector_store %arg4[%c0_93, %394, %c0_94, %c0_95], %397 {strides = array<i32>} : memref<1x8x8x32xf32, #tpu.memory_space<vmem>>, vector<1x1x8x32xf32>,
    %c7_i32_96 = arith.constant 7 : i32
    %c7_i32_97 = arith.constant 7 : i32
    %398 = arith.subi %c7_i32_97, %c7_i32_96 : i32
    %399 = arith.select %0, %398, %c7_i32_96 : i32
    %c0_98 = arith.constant 0 : index
    %400 = arith.index_cast %399 : i32 to index
    %c0_99 = arith.constant 0 : index
    %c0_100 = arith.constant 0 : index
    %401 = vector.load %arg2[%c0_98, %400, %c0_99, %c0_100] : memref<1x8x8x128xf32, #tpu.memory_space<vmem>>, vector<1x1x8x128xf32>
    %402 = vector.shape_cast %401 : vector<1x1x8x128xf32> to vector<8x128xf32>
    %cst_101 = arith.constant dense<0.000000e+00> : vector<8x128xf32>
    %403 = tpu.matmul %384, %3, %cst_101 {dimension_numbers = #tpu.dot_dimension_numbers<[1], [0], [0], [1], [0, 0, 1, 1], [], []>} : vector<8x32xf32>, vector<32x128xf32>, vector<8x128xf32> -> vector<8x128xf32>
    %404 = arith.addf %402, %403 : vector<8x128xf32>
    %405 = vector.extract_strided_slice %404 {offsets = [0, 0], sizes = [8, 32], strides = [1, 1]} : vector<8x128xf32> to vector<8x32xf32>
    %406 = arith.negf %405 : vector<8x32xf32>
    %407 = math.exp %406 : vector<8x32xf32>
    %cst_102 = arith.constant 1.000000e+00 : f32
    %408 = vector.broadcast %cst_102 : f32 to vector<8x32xf32>
    %409 = arith.addf %408, %407 : vector<8x32xf32>
    %410 = arith.divf %408, %409 : vector<8x32xf32>
    %411 = vector.extract_strided_slice %404 {offsets = [0, 32], sizes = [8, 32], strides = [1, 1]} : vector<8x128xf32> to vector<8x32xf32>
    %412 = arith.negf %411 : vector<8x32xf32>
    %413 = math.exp %412 : vector<8x32xf32>
    %cst_103 = arith.constant 1.000000e+00 : f32
    %414 = vector.broadcast %cst_103 : f32 to vector<8x32xf32>
    %415 = arith.addf %414, %413 : vector<8x32xf32>
    %416 = arith.divf %414, %415 : vector<8x32xf32>
    %417 = vector.extract_strided_slice %404 {offsets = [0, 64], sizes = [8, 32], strides = [1, 1]} : vector<8x128xf32> to vector<8x32xf32>
    %418 = math.tanh %417 : vector<8x32xf32>
    %419 = vector.extract_strided_slice %404 {offsets = [0, 96], sizes = [8, 32], strides = [1, 1]} : vector<8x128xf32> to vector<8x32xf32>
    %420 = arith.negf %419 : vector<8x32xf32>
    %421 = math.exp %420 : vector<8x32xf32>
    %cst_104 = arith.constant 1.000000e+00 : f32
    %422 = vector.broadcast %cst_104 : f32 to vector<8x32xf32>
    %423 = arith.addf %422, %421 : vector<8x32xf32>
    %424 = arith.divf %422, %423 : vector<8x32xf32>
    %425 = arith.mulf %416, %391 : vector<8x32xf32>
    %426 = arith.mulf %410, %418 : vector<8x32xf32>
    %427 = arith.addf %425, %426 : vector<8x32xf32>
    %428 = math.tanh %427 : vector<8x32xf32>
    %429 = arith.mulf %424, %428 : vector<8x32xf32>
    %430 = vector.broadcast %399 : i32 to vector<8x1xi32>
    %431 = arith.cmpi slt, %430, %1 : vector<8x1xi32>
    %432 = arith.extui %431 : vector<8x1xi1> to vector<8x1xi32>
    %433 = arith.sitofp %432 : vector<8x1xi32> to vector<8x1xf32>
    %434 = vector.broadcast %433 : vector<8x1xf32> to vector<8x32xf32>
    %435 = arith.mulf %434, %429 : vector<8x32xf32>
    %cst_105 = arith.constant 1.000000e+00 : f32
    %436 = vector.broadcast %cst_105 : f32 to vector<8x1xf32>
    %437 = arith.subf %436, %433 : vector<8x1xf32>
    %438 = vector.broadcast %437 : vector<8x1xf32> to vector<8x32xf32>
    %439 = arith.mulf %438, %384 : vector<8x32xf32>
    %440 = arith.addf %435, %439 : vector<8x32xf32>
    %441 = vector.broadcast %433 : vector<8x1xf32> to vector<8x32xf32>
    %442 = arith.mulf %441, %427 : vector<8x32xf32>
    %cst_106 = arith.constant 1.000000e+00 : f32
    %443 = vector.broadcast %cst_106 : f32 to vector<8x1xf32>
    %444 = arith.subf %443, %433 : vector<8x1xf32>
    %445 = vector.broadcast %444 : vector<8x1xf32> to vector<8x32xf32>
    %446 = arith.mulf %445, %391 : vector<8x32xf32>
    %447 = arith.addf %442, %446 : vector<8x32xf32>
    %448 = vector.broadcast %433 : vector<8x1xf32> to vector<8x32xf32>
    %449 = arith.mulf %448, %429 : vector<8x32xf32>
    %c0_107 = arith.constant 0 : index
    %450 = arith.index_cast %399 : i32 to index
    %c0_108 = arith.constant 0 : index
    %c0_109 = arith.constant 0 : index
    %451 = vector.load %arg4[%c0_107, %450, %c0_108, %c0_109] : memref<1x8x8x32xf32, #tpu.memory_space<vmem>>, vector<1x1x8x32xf32>
    %452 = vector.shape_cast %451 : vector<1x1x8x32xf32> to vector<8x32xf32>
    %453 = vector.shape_cast %449 : vector<8x32xf32> to vector<1x1x8x32xf32>
    tpu.vector_store %arg4[%c0_107, %450, %c0_108, %c0_109], %453 {strides = array<i32>} : memref<1x8x8x32xf32, #tpu.memory_space<vmem>>, vector<1x1x8x32xf32>,
    %c8_i32 = arith.constant 8 : i32
    %c0_110 = arith.constant 0 : index
    %c0_111 = arith.constant 0 : index
    %c0_112 = arith.constant 0 : index
    %454 = vector.load %arg5[%c0_110, %c0_111, %c0_112] : memref<1x8x32xf32, #tpu.memory_space<vmem>>, vector<1x8x32xf32>
    %455 = vector.shape_cast %454 : vector<1x8x32xf32> to vector<8x32xf32>
    %456 = vector.shape_cast %440 : vector<8x32xf32> to vector<1x8x32xf32>
    tpu.vector_store %arg5[%c0_110, %c0_111, %c0_112], %456 {strides = array<i32>} : memref<1x8x32xf32, #tpu.memory_space<vmem>>, vector<1x8x32xf32>,
    return
  }
  func.func @transform_0(%arg0: i32) -> (i32, i32) {
    %c0_i32 = arith.constant 0 : i32
    %c0_i32_0 = arith.constant 0 : i32
    %c0_i32_1 = arith.constant 0 : i32
    return %c0_i32, %c0_i32_0 : i32, i32
  }
  func.func @transform_1(%arg0: i32) -> (i32, i32, i32, i32) {
    %c0_i32 = arith.constant 0 : i32
    %c0_i32_0 = arith.constant 0 : i32
    %c0_i32_1 = arith.constant 0 : i32
    %c0_i32_2 = arith.constant 0 : i32
    return %arg0, %c0_i32, %c0_i32_0, %c0_i32_1 : i32, i32, i32, i32
  }
  func.func @transform_2(%arg0: i32) -> (i32, i32, i32) {
    %c0_i32 = arith.constant 0 : i32
    %c0_i32_0 = arith.constant 0 : i32
    %c0_i32_1 = arith.constant 0 : i32
    return %arg0, %c0_i32, %c0_i32_0 : i32, i32, i32
  }
  func.func @transform_3(%arg0: i32) -> (i32, i32, i32, i32) {
    %c0_i32 = arith.constant 0 : i32
    %c0_i32_0 = arith.constant 0 : i32
    %c0_i32_1 = arith.constant 0 : i32
    %c0_i32_2 = arith.constant 0 : i32
    return %arg0, %c0_i32, %c0_i32_0, %c0_i32_1 : i32, i32, i32, i32
  }
  func.func @transform_4(%arg0: i32) -> (i32, i32, i32) {
    %c0_i32 = arith.constant 0 : i32
    %c0_i32_0 = arith.constant 0 : i32
    %c0_i32_1 = arith.constant 0 : i32
    return %arg0, %c0_i32, %c0_i32_0 : i32, i32, i32
  }
}

module attributes {stable_mosaic.version = 11 : i64} {
  func.func @_lstm_layer_kernel(%arg0: i32, %arg1: memref<8x1xi32, #tpu.memory_space<vmem>>, %arg2: memref<1x8x8x128xf32, #tpu.memory_space<vmem>>, %arg3: memref<1x32x128xf32, #tpu.memory_space<vmem>>, %arg4: memref<1x8x8x32xf32, #tpu.memory_space<vmem>>, %arg5: memref<1x8x32xf32, #tpu.memory_space<vmem>>) attributes {dimension_semantics = [#tpu.dimension_semantics<parallel>], iteration_bounds = array<i64: 2>, scalar_prefetch = 0 : i64, scratch_operands = 0 : i64, tpu.core_type = #tpu.core_type<tc>, window_params = [{pipeline_mode = #tpu.pipeline_mode<synchronous>, transform_indices = @transform_0, window_bounds = array<i64: 8, 1>}, {transform_indices = @transform_1, window_bounds = array<i64: 1, 8, 8, 128>}, {transform_indices = @transform_2, window_bounds = array<i64: 1, 32, 128>}, {transform_indices = @transform_3, window_bounds = array<i64: 1, 8, 8, 32>}, {transform_indices = @transform_4, window_bounds = array<i64: 1, 8, 32>}]} {
    %c1_i32 = arith.constant 1 : i32
    %0 = arith.cmpi eq, %arg0, %c1_i32 : i32
    %c0 = arith.constant 0 : index
    %c0_0 = arith.constant 0 : index
    %1 = vector.load %arg1[%c0, %c0_0] : memref<8x1xi32, #tpu.memory_space<vmem>>, vector<8x1xi32>
    %c0_1 = arith.constant 0 : index
    %c0_2 = arith.constant 0 : index
    %c0_3 = arith.constant 0 : index
    %2 = vector.load %arg3[%c0_1, %c0_2, %c0_3] : memref<1x32x128xf32, #tpu.memory_space<vmem>>, vector<1x32x128xf32>
    %3 = vector.shape_cast %2 : vector<1x32x128xf32> to vector<32x128xf32>
    %cst = arith.constant 0.000000e+00 : f32
    %4 = vector.broadcast %cst : f32 to vector<8x32xf32>
    %cst_4 = arith.constant 0.000000e+00 : f32
    %5 = vector.broadcast %cst_4 : f32 to vector<8x32xf32>
    %c0_i32 = arith.constant 0 : i32
    %c7_i32 = arith.constant 7 : i32
    %6 = arith.subi %c7_i32, %c0_i32 : i32
    %7 = arith.select %0, %6, %c0_i32 : i32
    %c0_5 = arith.constant 0 : index
    %8 = arith.index_cast %7 : i32 to index
    %c0_6 = arith.constant 0 : index
    %c0_7 = arith.constant 0 : index
    %9 = vector.load %arg2[%c0_5, %8, %c0_6, %c0_7] : memref<1x8x8x128xf32, #tpu.memory_space<vmem>>, vector<1x1x8x128xf32>
    %10 = vector.shape_cast %9 : vector<1x1x8x128xf32> to vector<8x128xf32>
    %cst_8 = arith.constant dense<0.000000e+00> : vector<8x128xf32>
    %11 = tpu.matmul %4, %3, %cst_8 {dimension_numbers = #tpu.dot_dimension_numbers<[1], [0], [0], [1], [0, 0, 1, 1], [], []>} : vector<8x32xf32>, vector<32x128xf32>, vector<8x128xf32> -> vector<8x128xf32>
    %12 = arith.addf %10, %11 : vector<8x128xf32>
    %13 = vector.extract_strided_slice %12 {offsets = [0, 0], sizes = [8, 32], strides = [1, 1]} : vector<8x128xf32> to vector<8x32xf32>
    %14 = arith.negf %13 : vector<8x32xf32>
    %15 = math.exp %14 : vector<8x32xf32>
    %cst_9 = arith.constant 1.000000e+00 : f32
    %16 = vector.broadcast %cst_9 : f32 to vector<8x32xf32>
    %17 = arith.addf %16, %15 : vector<8x32xf32>
    %18 = arith.divf %16, %17 : vector<8x32xf32>
    %19 = vector.extract_strided_slice %12 {offsets = [0, 32], sizes = [8, 32], strides = [1, 1]} : vector<8x128xf32> to vector<8x32xf32>
    %20 = arith.negf %19 : vector<8x32xf32>
    %21 = math.exp %20 : vector<8x32xf32>
    %cst_10 = arith.constant 1.000000e+00 : f32
    %22 = vector.broadcast %cst_10 : f32 to vector<8x32xf32>
    %23 = arith.addf %22, %21 : vector<8x32xf32>
    %24 = arith.divf %22, %23 : vector<8x32xf32>
    %25 = vector.extract_strided_slice %12 {offsets = [0, 64], sizes = [8, 32], strides = [1, 1]} : vector<8x128xf32> to vector<8x32xf32>
    %26 = math.tanh %25 : vector<8x32xf32>
    %27 = vector.extract_strided_slice %12 {offsets = [0, 96], sizes = [8, 32], strides = [1, 1]} : vector<8x128xf32> to vector<8x32xf32>
    %28 = arith.negf %27 : vector<8x32xf32>
    %29 = math.exp %28 : vector<8x32xf32>
    %cst_11 = arith.constant 1.000000e+00 : f32
    %30 = vector.broadcast %cst_11 : f32 to vector<8x32xf32>
    %31 = arith.addf %30, %29 : vector<8x32xf32>
    %32 = arith.divf %30, %31 : vector<8x32xf32>
    %33 = arith.mulf %24, %5 : vector<8x32xf32>
    %34 = arith.mulf %18, %26 : vector<8x32xf32>
    %35 = arith.addf %33, %34 : vector<8x32xf32>
    %36 = math.tanh %35 : vector<8x32xf32>
    %37 = arith.mulf %32, %36 : vector<8x32xf32>
    %38 = vector.broadcast %7 : i32 to vector<8x1xi32>
    %39 = arith.cmpi slt, %38, %1 : vector<8x1xi32>
    %40 = arith.extui %39 : vector<8x1xi1> to vector<8x1xi32>
    %41 = arith.sitofp %40 : vector<8x1xi32> to vector<8x1xf32>
    %42 = vector.broadcast %41 : vector<8x1xf32> to vector<8x32xf32>
    %43 = arith.mulf %42, %37 : vector<8x32xf32>
    %cst_12 = arith.constant 1.000000e+00 : f32
    %44 = vector.broadcast %cst_12 : f32 to vector<8x1xf32>
    %45 = arith.subf %44, %41 : vector<8x1xf32>
    %46 = vector.broadcast %45 : vector<8x1xf32> to vector<8x32xf32>
    %47 = arith.mulf %46, %4 : vector<8x32xf32>
    %48 = arith.addf %43, %47 : vector<8x32xf32>
    %49 = vector.broadcast %41 : vector<8x1xf32> to vector<8x32xf32>
    %50 = arith.mulf %49, %35 : vector<8x32xf32>
    %cst_13 = arith.constant 1.000000e+00 : f32
    %51 = vector.broadcast %cst_13 : f32 to vector<8x1xf32>
    %52 = arith.subf %51, %41 : vector<8x1xf32>
    %53 = vector.broadcast %52 : vector<8x1xf32> to vector<8x32xf32>
    %54 = arith.mulf %53, %5 : vector<8x32xf32>
    %55 = arith.addf %50, %54 : vector<8x32xf32>
    %56 = vector.broadcast %41 : vector<8x1xf32> to vector<8x32xf32>
    %57 = arith.mulf %56, %37 : vector<8x32xf32>
    %c0_14 = arith.constant 0 : index
    %58 = arith.index_cast %7 : i32 to index
    %c0_15 = arith.constant 0 : index
    %c0_16 = arith.constant 0 : index
    %59 = vector.load %arg4[%c0_14, %58, %c0_15, %c0_16] : memref<1x8x8x32xf32, #tpu.memory_space<vmem>>, vector<1x1x8x32xf32>
    %60 = vector.shape_cast %59 : vector<1x1x8x32xf32> to vector<8x32xf32>
    %61 = vector.shape_cast %57 : vector<8x32xf32> to vector<1x1x8x32xf32>
    tpu.vector_store %arg4[%c0_14, %58, %c0_15, %c0_16], %61 {strides = array<i32>} : memref<1x8x8x32xf32, #tpu.memory_space<vmem>>, vector<1x1x8x32xf32>,
    %c1_i32_17 = arith.constant 1 : i32
    %c7_i32_18 = arith.constant 7 : i32
    %62 = arith.subi %c7_i32_18, %c1_i32_17 : i32
    %63 = arith.select %0, %62, %c1_i32_17 : i32
    %c0_19 = arith.constant 0 : index
    %64 = arith.index_cast %63 : i32 to index
    %c0_20 = arith.constant 0 : index
    %c0_21 = arith.constant 0 : index
    %65 = vector.load %arg2[%c0_19, %64, %c0_20, %c0_21] : memref<1x8x8x128xf32, #tpu.memory_space<vmem>>, vector<1x1x8x128xf32>
    %66 = vector.shape_cast %65 : vector<1x1x8x128xf32> to vector<8x128xf32>
    %cst_22 = arith.constant dense<0.000000e+00> : vector<8x128xf32>
    %67 = tpu.matmul %48, %3, %cst_22 {dimension_numbers = #tpu.dot_dimension_numbers<[1], [0], [0], [1], [0, 0, 1, 1], [], []>} : vector<8x32xf32>, vector<32x128xf32>, vector<8x128xf32> -> vector<8x128xf32>
    %68 = arith.addf %66, %67 : vector<8x128xf32>
    %69 = vector.extract_strided_slice %68 {offsets = [0, 0], sizes = [8, 32], strides = [1, 1]} : vector<8x128xf32> to vector<8x32xf32>
    %70 = arith.negf %69 : vector<8x32xf32>
    %71 = math.exp %70 : vector<8x32xf32>
    %cst_23 = arith.constant 1.000000e+00 : f32
    %72 = vector.broadcast %cst_23 : f32 to vector<8x32xf32>
    %73 = arith.addf %72, %71 : vector<8x32xf32>
    %74 = arith.divf %72, %73 : vector<8x32xf32>
    %75 = vector.extract_strided_slice %68 {offsets = [0, 32], sizes = [8, 32], strides = [1, 1]} : vector<8x128xf32> to vector<8x32xf32>
    %76 = arith.negf %75 : vector<8x32xf32>
    %77 = math.exp %76 : vector<8x32xf32>
    %cst_24 = arith.constant 1.000000e+00 : f32
    %78 = vector.broadcast %cst_24 : f32 to vector<8x32xf32>
    %79 = arith.addf %78, %77 : vector<8x32xf32>
    %80 = arith.divf %78, %79 : vector<8x32xf32>
    %81 = vector.extract_strided_slice %68 {offsets = [0, 64], sizes = [8, 32], strides = [1, 1]} : vector<8x128xf32> to vector<8x32xf32>
    %82 = math.tanh %81 : vector<8x32xf32>
    %83 = vector.extract_strided_slice %68 {offsets = [0, 96], sizes = [8, 32], strides = [1, 1]} : vector<8x128xf32> to vector<8x32xf32>
    %84 = arith.negf %83 : vector<8x32xf32>
    %85 = math.exp %84 : vector<8x32xf32>
    %cst_25 = arith.constant 1.000000e+00 : f32
    %86 = vector.broadcast %cst_25 : f32 to vector<8x32xf32>
    %87 = arith.addf %86, %85 : vector<8x32xf32>
    %88 = arith.divf %86, %87 : vector<8x32xf32>
    %89 = arith.mulf %80, %55 : vector<8x32xf32>
    %90 = arith.mulf %74, %82 : vector<8x32xf32>
    %91 = arith.addf %89, %90 : vector<8x32xf32>
    %92 = math.tanh %91 : vector<8x32xf32>
    %93 = arith.mulf %88, %92 : vector<8x32xf32>
    %94 = vector.broadcast %63 : i32 to vector<8x1xi32>
    %95 = arith.cmpi slt, %94, %1 : vector<8x1xi32>
    %96 = arith.extui %95 : vector<8x1xi1> to vector<8x1xi32>
    %97 = arith.sitofp %96 : vector<8x1xi32> to vector<8x1xf32>
    %98 = vector.broadcast %97 : vector<8x1xf32> to vector<8x32xf32>
    %99 = arith.mulf %98, %93 : vector<8x32xf32>
    %cst_26 = arith.constant 1.000000e+00 : f32
    %100 = vector.broadcast %cst_26 : f32 to vector<8x1xf32>
    %101 = arith.subf %100, %97 : vector<8x1xf32>
    %102 = vector.broadcast %101 : vector<8x1xf32> to vector<8x32xf32>
    %103 = arith.mulf %102, %48 : vector<8x32xf32>
    %104 = arith.addf %99, %103 : vector<8x32xf32>
    %105 = vector.broadcast %97 : vector<8x1xf32> to vector<8x32xf32>
    %106 = arith.mulf %105, %91 : vector<8x32xf32>
    %cst_27 = arith.constant 1.000000e+00 : f32
    %107 = vector.broadcast %cst_27 : f32 to vector<8x1xf32>
    %108 = arith.subf %107, %97 : vector<8x1xf32>
    %109 = vector.broadcast %108 : vector<8x1xf32> to vector<8x32xf32>
    %110 = arith.mulf %109, %55 : vector<8x32xf32>
    %111 = arith.addf %106, %110 : vector<8x32xf32>
    %112 = vector.broadcast %97 : vector<8x1xf32> to vector<8x32xf32>
    %113 = arith.mulf %112, %93 : vector<8x32xf32>
    %c0_28 = arith.constant 0 : index
    %114 = arith.index_cast %63 : i32 to index
    %c0_29 = arith.constant 0 : index
    %c0_30 = arith.constant 0 : index
    %115 = vector.load %arg4[%c0_28, %114, %c0_29, %c0_30] : memref<1x8x8x32xf32, #tpu.memory_space<vmem>>, vector<1x1x8x32xf32>
    %116 = vector.shape_cast %115 : vector<1x1x8x32xf32> to vector<8x32xf32>
    %117 = vector.shape_cast %113 : vector<8x32xf32> to vector<1x1x8x32xf32>
    tpu.vector_store %arg4[%c0_28, %114, %c0_29, %c0_30], %117 {strides = array<i32>} : memref<1x8x8x32xf32, #tpu.memory_space<vmem>>, vector<1x1x8x32xf32>,
    %c2_i32 = arith.constant 2 : i32
    %c7_i32_31 = arith.constant 7 : i32
    %118 = arith.subi %c7_i32_31, %c2_i32 : i32
    %119 = arith.select %0, %118, %c2_i32 : i32
    %c0_32 = arith.constant 0 : index
    %120 = arith.index_cast %119 : i32 to index
    %c0_33 = arith.constant 0 : index
    %c0_34 = arith.constant 0 : index
    %121 = vector.load %arg2[%c0_32, %120, %c0_33, %c0_34] : memref<1x8x8x128xf32, #tpu.memory_space<vmem>>, vector<1x1x8x128xf32>
    %122 = vector.shape_cast %121 : vector<1x1x8x128xf32> to vector<8x128xf32>
    %cst_35 = arith.constant dense<0.000000e+00> : vector<8x128xf32>
    %123 = tpu.matmul %104, %3, %cst_35 {dimension_numbers = #tpu.dot_dimension_numbers<[1], [0], [0], [1], [0, 0, 1, 1], [], []>} : vector<8x32xf32>, vector<32x128xf32>, vector<8x128xf32> -> vector<8x128xf32>
    %124 = arith.addf %122, %123 : vector<8x128xf32>
    %125 = vector.extract_strided_slice %124 {offsets = [0, 0], sizes = [8, 32], strides = [1, 1]} : vector<8x128xf32> to vector<8x32xf32>
    %126 = arith.negf %125 : vector<8x32xf32>
    %127 = math.exp %126 : vector<8x32xf32>
    %cst_36 = arith.constant 1.000000e+00 : f32
    %128 = vector.broadcast %cst_36 : f32 to vector<8x32xf32>
    %129 = arith.addf %128, %127 : vector<8x32xf32>
    %130 = arith.divf %128, %129 : vector<8x32xf32>
    %131 = vector.extract_strided_slice %124 {offsets = [0, 32], sizes = [8, 32], strides = [1, 1]} : vector<8x128xf32> to vector<8x32xf32>
    %132 = arith.negf %131 : vector<8x32xf32>
    %133 = math.exp %132 : vector<8x32xf32>
    %cst_37 = arith.constant 1.000000e+00 : f32
    %134 = vector.broadcast %cst_37 : f32 to vector<8x32xf32>
    %135 = arith.addf %134, %133 : vector<8x32xf32>
    %136 = arith.divf %134, %135 : vector<8x32xf32>
    %137 = vector.extract_strided_slice %124 {offsets = [0, 64], sizes = [8, 32], strides = [1, 1]} : vector<8x128xf32> to vector<8x32xf32>
    %138 = math.tanh %137 : vector<8x32xf32>
    %139 = vector.extract_strided_slice %124 {offsets = [0, 96], sizes = [8, 32], strides = [1, 1]} : vector<8x128xf32> to vector<8x32xf32>
    %140 = arith.negf %139 : vector<8x32xf32>
    %141 = math.exp %140 : vector<8x32xf32>
    %cst_38 = arith.constant 1.000000e+00 : f32
    %142 = vector.broadcast %cst_38 : f32 to vector<8x32xf32>
    %143 = arith.addf %142, %141 : vector<8x32xf32>
    %144 = arith.divf %142, %143 : vector<8x32xf32>
    %145 = arith.mulf %136, %111 : vector<8x32xf32>
    %146 = arith.mulf %130, %138 : vector<8x32xf32>
    %147 = arith.addf %145, %146 : vector<8x32xf32>
    %148 = math.tanh %147 : vector<8x32xf32>
    %149 = arith.mulf %144, %148 : vector<8x32xf32>
    %150 = vector.broadcast %119 : i32 to vector<8x1xi32>
    %151 = arith.cmpi slt, %150, %1 : vector<8x1xi32>
    %152 = arith.extui %151 : vector<8x1xi1> to vector<8x1xi32>
    %153 = arith.sitofp %152 : vector<8x1xi32> to vector<8x1xf32>
    %154 = vector.broadcast %153 : vector<8x1xf32> to vector<8x32xf32>
    %155 = arith.mulf %154, %149 : vector<8x32xf32>
    %cst_39 = arith.constant 1.000000e+00 : f32
    %156 = vector.broadcast %cst_39 : f32 to vector<8x1xf32>
    %157 = arith.subf %156, %153 : vector<8x1xf32>
    %158 = vector.broadcast %157 : vector<8x1xf32> to vector<8x32xf32>
    %159 = arith.mulf %158, %104 : vector<8x32xf32>
    %160 = arith.addf %155, %159 : vector<8x32xf32>
    %161 = vector.broadcast %153 : vector<8x1xf32> to vector<8x32xf32>
    %162 = arith.mulf %161, %147 : vector<8x32xf32>
    %cst_40 = arith.constant 1.000000e+00 : f32
    %163 = vector.broadcast %cst_40 : f32 to vector<8x1xf32>
    %164 = arith.subf %163, %153 : vector<8x1xf32>
    %165 = vector.broadcast %164 : vector<8x1xf32> to vector<8x32xf32>
    %166 = arith.mulf %165, %111 : vector<8x32xf32>
    %167 = arith.addf %162, %166 : vector<8x32xf32>
    %168 = vector.broadcast %153 : vector<8x1xf32> to vector<8x32xf32>
    %169 = arith.mulf %168, %149 : vector<8x32xf32>
    %c0_41 = arith.constant 0 : index
    %170 = arith.index_cast %119 : i32 to index
    %c0_42 = arith.constant 0 : index
    %c0_43 = arith.constant 0 : index
    %171 = vector.load %arg4[%c0_41, %170, %c0_42, %c0_43] : memref<1x8x8x32xf32, #tpu.memory_space<vmem>>, vector<1x1x8x32xf32>
    %172 = vector.shape_cast %171 : vector<1x1x8x32xf32> to vector<8x32xf32>
    %173 = vector.shape_cast %169 : vector<8x32xf32> to vector<1x1x8x32xf32>
    tpu.vector_store %arg4[%c0_41, %170, %c0_42, %c0_43], %173 {strides = array<i32>} : memref<1x8x8x32xf32, #tpu.memory_space<vmem>>, vector<1x1x8x32xf32>,
    %c3_i32 = arith.constant 3 : i32
    %c7_i32_44 = arith.constant 7 : i32
    %174 = arith.subi %c7_i32_44, %c3_i32 : i32
    %175 = arith.select %0, %174, %c3_i32 : i32
    %c0_45 = arith.constant 0 : index
    %176 = arith.index_cast %175 : i32 to index
    %c0_46 = arith.constant 0 : index
    %c0_47 = arith.constant 0 : index
    %177 = vector.load %arg2[%c0_45, %176, %c0_46, %c0_47] : memref<1x8x8x128xf32, #tpu.memory_space<vmem>>, vector<1x1x8x128xf32>
    %178 = vector.shape_cast %177 : vector<1x1x8x128xf32> to vector<8x128xf32>
    %cst_48 = arith.constant dense<0.000000e+00> : vector<8x128xf32>
    %179 = tpu.matmul %160, %3, %cst_48 {dimension_numbers = #tpu.dot_dimension_numbers<[1], [0], [0], [1], [0, 0, 1, 1], [], []>} : vector<8x32xf32>, vector<32x128xf32>, vector<8x128xf32> -> vector<8x128xf32>
    %180 = arith.addf %178, %179 : vector<8x128xf32>
    %181 = vector.extract_strided_slice %180 {offsets = [0, 0], sizes = [8, 32], strides = [1, 1]} : vector<8x128xf32> to vector<8x32xf32>
    %182 = arith.negf %181 : vector<8x32xf32>
    %183 = math.exp %182 : vector<8x32xf32>
    %cst_49 = arith.constant 1.000000e+00 : f32
    %184 = vector.broadcast %cst_49 : f32 to vector<8x32xf32>
    %185 = arith.addf %184, %183 : vector<8x32xf32>
    %186 = arith.divf %184, %185 : vector<8x32xf32>
    %187 = vector.extract_strided_slice %180 {offsets = [0, 32], sizes = [8, 32], strides = [1, 1]} : vector<8x128xf32> to vector<8x32xf32>
    %188 = arith.negf %187 : vector<8x32xf32>
    %189 = math.exp %188 : vector<8x32xf32>
    %cst_50 = arith.constant 1.000000e+00 : f32
    %190 = vector.broadcast %cst_50 : f32 to vector<8x32xf32>
    %191 = arith.addf %190, %189 : vector<8x32xf32>
    %192 = arith.divf %190, %191 : vector<8x32xf32>
    %193 = vector.extract_strided_slice %180 {offsets = [0, 64], sizes = [8, 32], strides = [1, 1]} : vector<8x128xf32> to vector<8x32xf32>
    %194 = math.tanh %193 : vector<8x32xf32>
    %195 = vector.extract_strided_slice %180 {offsets = [0, 96], sizes = [8, 32], strides = [1, 1]} : vector<8x128xf32> to vector<8x32xf32>
    %196 = arith.negf %195 : vector<8x32xf32>
    %197 = math.exp %196 : vector<8x32xf32>
    %cst_51 = arith.constant 1.000000e+00 : f32
    %198 = vector.broadcast %cst_51 : f32 to vector<8x32xf32>
    %199 = arith.addf %198, %197 : vector<8x32xf32>
    %200 = arith.divf %198, %199 : vector<8x32xf32>
    %201 = arith.mulf %192, %167 : vector<8x32xf32>
    %202 = arith.mulf %186, %194 : vector<8x32xf32>
    %203 = arith.addf %201, %202 : vector<8x32xf32>
    %204 = math.tanh %203 : vector<8x32xf32>
    %205 = arith.mulf %200, %204 : vector<8x32xf32>
    %206 = vector.broadcast %175 : i32 to vector<8x1xi32>
    %207 = arith.cmpi slt, %206, %1 : vector<8x1xi32>
    %208 = arith.extui %207 : vector<8x1xi1> to vector<8x1xi32>
    %209 = arith.sitofp %208 : vector<8x1xi32> to vector<8x1xf32>
    %210 = vector.broadcast %209 : vector<8x1xf32> to vector<8x32xf32>
    %211 = arith.mulf %210, %205 : vector<8x32xf32>
    %cst_52 = arith.constant 1.000000e+00 : f32
    %212 = vector.broadcast %cst_52 : f32 to vector<8x1xf32>
    %213 = arith.subf %212, %209 : vector<8x1xf32>
    %214 = vector.broadcast %213 : vector<8x1xf32> to vector<8x32xf32>
    %215 = arith.mulf %214, %160 : vector<8x32xf32>
    %216 = arith.addf %211, %215 : vector<8x32xf32>
    %217 = vector.broadcast %209 : vector<8x1xf32> to vector<8x32xf32>
    %218 = arith.mulf %217, %203 : vector<8x32xf32>
    %cst_53 = arith.constant 1.000000e+00 : f32
    %219 = vector.broadcast %cst_53 : f32 to vector<8x1xf32>
    %220 = arith.subf %219, %209 : vector<8x1xf32>
    %221 = vector.broadcast %220 : vector<8x1xf32> to vector<8x32xf32>
    %222 = arith.mulf %221, %167 : vector<8x32xf32>
    %223 = arith.addf %218, %222 : vector<8x32xf32>
    %224 = vector.broadcast %209 : vector<8x1xf32> to vector<8x32xf32>
    %225 = arith.mulf %224, %205 : vector<8x32xf32>
    %c0_54 = arith.constant 0 : index
    %226 = arith.index_cast %175 : i32 to index
    %c0_55 = arith.constant 0 : index
    %c0_56 = arith.constant 0 : index
    %227 = vector.load %arg4[%c0_54, %226, %c0_55, %c0_56] : memref<1x8x8x32xf32, #tpu.memory_space<vmem>>, vector<1x1x8x32xf32>
    %228 = vector.shape_cast %227 : vector<1x1x8x32xf32> to vector<8x32xf32>
    %229 = vector.shape_cast %225 : vector<8x32xf32> to vector<1x1x8x32xf32>
    tpu.vector_store %arg4[%c0_54, %226, %c0_55, %c0_56], %229 {strides = array<i32>} : memref<1x8x8x32xf32, #tpu.memory_space<vmem>>, vector<1x1x8x32xf32>,
    %c4_i32 = arith.constant 4 : i32
    %c7_i32_57 = arith.constant 7 : i32
    %230 = arith.subi %c7_i32_57, %c4_i32 : i32
    %231 = arith.select %0, %230, %c4_i32 : i32
    %c0_58 = arith.constant 0 : index
    %232 = arith.index_cast %231 : i32 to index
    %c0_59 = arith.constant 0 : index
    %c0_60 = arith.constant 0 : index
    %233 = vector.load %arg2[%c0_58, %232, %c0_59, %c0_60] : memref<1x8x8x128xf32, #tpu.memory_space<vmem>>, vector<1x1x8x128xf32>
    %234 = vector.shape_cast %233 : vector<1x1x8x128xf32> to vector<8x128xf32>
    %cst_61 = arith.constant dense<0.000000e+00> : vector<8x128xf32>
    %235 = tpu.matmul %216, %3, %cst_61 {dimension_numbers = #tpu.dot_dimension_numbers<[1], [0], [0], [1], [0, 0, 1, 1], [], []>} : vector<8x32xf32>, vector<32x128xf32>, vector<8x128xf32> -> vector<8x128xf32>
    %236 = arith.addf %234, %235 : vector<8x128xf32>
    %237 = vector.extract_strided_slice %236 {offsets = [0, 0], sizes = [8, 32], strides = [1, 1]} : vector<8x128xf32> to vector<8x32xf32>
    %238 = arith.negf %237 : vector<8x32xf32>
    %239 = math.exp %238 : vector<8x32xf32>
    %cst_62 = arith.constant 1.000000e+00 : f32
    %240 = vector.broadcast %cst_62 : f32 to vector<8x32xf32>
    %241 = arith.addf %240, %239 : vector<8x32xf32>
    %242 = arith.divf %240, %241 : vector<8x32xf32>
    %243 = vector.extract_strided_slice %236 {offsets = [0, 32], sizes = [8, 32], strides = [1, 1]} : vector<8x128xf32> to vector<8x32xf32>
    %244 = arith.negf %243 : vector<8x32xf32>
    %245 = math.exp %244 : vector<8x32xf32>
    %cst_63 = arith.constant 1.000000e+00 : f32
    %246 = vector.broadcast %cst_63 : f32 to vector<8x32xf32>
    %247 = arith.addf %246, %245 : vector<8x32xf32>
    %248 = arith.divf %246, %247 : vector<8x32xf32>
    %249 = vector.extract_strided_slice %236 {offsets = [0, 64], sizes = [8, 32], strides = [1, 1]} : vector<8x128xf32> to vector<8x32xf32>
    %250 = math.tanh %249 : vector<8x32xf32>
    %251 = vector.extract_strided_slice %236 {offsets = [0, 96], sizes = [8, 32], strides = [1, 1]} : vector<8x128xf32> to vector<8x32xf32>
    %252 = arith.negf %251 : vector<8x32xf32>
    %253 = math.exp %252 : vector<8x32xf32>
    %cst_64 = arith.constant 1.000000e+00 : f32
    %254 = vector.broadcast %cst_64 : f32 to vector<8x32xf32>
    %255 = arith.addf %254, %253 : vector<8x32xf32>
    %256 = arith.divf %254, %255 : vector<8x32xf32>
    %257 = arith.mulf %248, %223 : vector<8x32xf32>
    %258 = arith.mulf %242, %250 : vector<8x32xf32>
    %259 = arith.addf %257, %258 : vector<8x32xf32>
    %260 = math.tanh %259 : vector<8x32xf32>
    %261 = arith.mulf %256, %260 : vector<8x32xf32>
    %262 = vector.broadcast %231 : i32 to vector<8x1xi32>
    %263 = arith.cmpi slt, %262, %1 : vector<8x1xi32>
    %264 = arith.extui %263 : vector<8x1xi1> to vector<8x1xi32>
    %265 = arith.sitofp %264 : vector<8x1xi32> to vector<8x1xf32>
    %266 = vector.broadcast %265 : vector<8x1xf32> to vector<8x32xf32>
    %267 = arith.mulf %266, %261 : vector<8x32xf32>
    %cst_65 = arith.constant 1.000000e+00 : f32
    %268 = vector.broadcast %cst_65 : f32 to vector<8x1xf32>
    %269 = arith.subf %268, %265 : vector<8x1xf32>
    %270 = vector.broadcast %269 : vector<8x1xf32> to vector<8x32xf32>
    %271 = arith.mulf %270, %216 : vector<8x32xf32>
    %272 = arith.addf %267, %271 : vector<8x32xf32>
    %273 = vector.broadcast %265 : vector<8x1xf32> to vector<8x32xf32>
    %274 = arith.mulf %273, %259 : vector<8x32xf32>
    %cst_66 = arith.constant 1.000000e+00 : f32
    %275 = vector.broadcast %cst_66 : f32 to vector<8x1xf32>
    %276 = arith.subf %275, %265 : vector<8x1xf32>
    %277 = vector.broadcast %276 : vector<8x1xf32> to vector<8x32xf32>
    %278 = arith.mulf %277, %223 : vector<8x32xf32>
    %279 = arith.addf %274, %278 : vector<8x32xf32>
    %280 = vector.broadcast %265 : vector<8x1xf32> to vector<8x32xf32>
    %281 = arith.mulf %280, %261 : vector<8x32xf32>
    %c0_67 = arith.constant 0 : index
    %282 = arith.index_cast %231 : i32 to index
    %c0_68 = arith.constant 0 : index
    %c0_69 = arith.constant 0 : index
    %283 = vector.load %arg4[%c0_67, %282, %c0_68, %c0_69] : memref<1x8x8x32xf32, #tpu.memory_space<vmem>>, vector<1x1x8x32xf32>
    %284 = vector.shape_cast %283 : vector<1x1x8x32xf32> to vector<8x32xf32>
    %285 = vector.shape_cast %281 : vector<8x32xf32> to vector<1x1x8x32xf32>
    tpu.vector_store %arg4[%c0_67, %282, %c0_68, %c0_69], %285 {strides = array<i32>} : memref<1x8x8x32xf32, #tpu.memory_space<vmem>>, vector<1x1x8x32xf32>,
    %c5_i32 = arith.constant 5 : i32
    %c7_i32_70 = arith.constant 7 : i32
    %286 = arith.subi %c7_i32_70, %c5_i32 : i32
    %287 = arith.select %0, %286, %c5_i32 : i32
    %c0_71 = arith.constant 0 : index
    %288 = arith.index_cast %287 : i32 to index
    %c0_72 = arith.constant 0 : index
    %c0_73 = arith.constant 0 : index
    %289 = vector.load %arg2[%c0_71, %288, %c0_72, %c0_73] : memref<1x8x8x128xf32, #tpu.memory_space<vmem>>, vector<1x1x8x128xf32>
    %290 = vector.shape_cast %289 : vector<1x1x8x128xf32> to vector<8x128xf32>
    %cst_74 = arith.constant dense<0.000000e+00> : vector<8x128xf32>
    %291 = tpu.matmul %272, %3, %cst_74 {dimension_numbers = #tpu.dot_dimension_numbers<[1], [0], [0], [1], [0, 0, 1, 1], [], []>} : vector<8x32xf32>, vector<32x128xf32>, vector<8x128xf32> -> vector<8x128xf32>
    %292 = arith.addf %290, %291 : vector<8x128xf32>
    %293 = vector.extract_strided_slice %292 {offsets = [0, 0], sizes = [8, 32], strides = [1, 1]} : vector<8x128xf32> to vector<8x32xf32>
    %294 = arith.negf %293 : vector<8x32xf32>
    %295 = math.exp %294 : vector<8x32xf32>
    %cst_75 = arith.constant 1.000000e+00 : f32
    %296 = vector.broadcast %cst_75 : f32 to vector<8x32xf32>
    %297 = arith.addf %296, %295 : vector<8x32xf32>
    %298 = arith.divf %296, %297 : vector<8x32xf32>
    %299 = vector.extract_strided_slice %292 {offsets = [0, 32], sizes = [8, 32], strides = [1, 1]} : vector<8x128xf32> to vector<8x32xf32>
    %300 = arith.negf %299 : vector<8x32xf32>
    %301 = math.exp %300 : vector<8x32xf32>
    %cst_76 = arith.constant 1.000000e+00 : f32
    %302 = vector.broadcast %cst_76 : f32 to vector<8x32xf32>
    %303 = arith.addf %302, %301 : vector<8x32xf32>
    %304 = arith.divf %302, %303 : vector<8x32xf32>
    %305 = vector.extract_strided_slice %292 {offsets = [0, 64], sizes = [8, 32], strides = [1, 1]} : vector<8x128xf32> to vector<8x32xf32>
    %306 = math.tanh %305 : vector<8x32xf32>
    %307 = vector.extract_strided_slice %292 {offsets = [0, 96], sizes = [8, 32], strides = [1, 1]} : vector<8x128xf32> to vector<8x32xf32>
    %308 = arith.negf %307 : vector<8x32xf32>
    %309 = math.exp %308 : vector<8x32xf32>
    %cst_77 = arith.constant 1.000000e+00 : f32
    %310 = vector.broadcast %cst_77 : f32 to vector<8x32xf32>
    %311 = arith.addf %310, %309 : vector<8x32xf32>
    %312 = arith.divf %310, %311 : vector<8x32xf32>
    %313 = arith.mulf %304, %279 : vector<8x32xf32>
    %314 = arith.mulf %298, %306 : vector<8x32xf32>
    %315 = arith.addf %313, %314 : vector<8x32xf32>
    %316 = math.tanh %315 : vector<8x32xf32>
    %317 = arith.mulf %312, %316 : vector<8x32xf32>
    %318 = vector.broadcast %287 : i32 to vector<8x1xi32>
    %319 = arith.cmpi slt, %318, %1 : vector<8x1xi32>
    %320 = arith.extui %319 : vector<8x1xi1> to vector<8x1xi32>
    %321 = arith.sitofp %320 : vector<8x1xi32> to vector<8x1xf32>
    %322 = vector.broadcast %321 : vector<8x1xf32> to vector<8x32xf32>
    %323 = arith.mulf %322, %317 : vector<8x32xf32>
    %cst_78 = arith.constant 1.000000e+00 : f32
    %324 = vector.broadcast %cst_78 : f32 to vector<8x1xf32>
    %325 = arith.subf %324, %321 : vector<8x1xf32>
    %326 = vector.broadcast %325 : vector<8x1xf32> to vector<8x32xf32>
    %327 = arith.mulf %326, %272 : vector<8x32xf32>
    %328 = arith.addf %323, %327 : vector<8x32xf32>
    %329 = vector.broadcast %321 : vector<8x1xf32> to vector<8x32xf32>
    %330 = arith.mulf %329, %315 : vector<8x32xf32>
    %cst_79 = arith.constant 1.000000e+00 : f32
    %331 = vector.broadcast %cst_79 : f32 to vector<8x1xf32>
    %332 = arith.subf %331, %321 : vector<8x1xf32>
    %333 = vector.broadcast %332 : vector<8x1xf32> to vector<8x32xf32>
    %334 = arith.mulf %333, %279 : vector<8x32xf32>
    %335 = arith.addf %330, %334 : vector<8x32xf32>
    %336 = vector.broadcast %321 : vector<8x1xf32> to vector<8x32xf32>
    %337 = arith.mulf %336, %317 : vector<8x32xf32>
    %c0_80 = arith.constant 0 : index
    %338 = arith.index_cast %287 : i32 to index
    %c0_81 = arith.constant 0 : index
    %c0_82 = arith.constant 0 : index
    %339 = vector.load %arg4[%c0_80, %338, %c0_81, %c0_82] : memref<1x8x8x32xf32, #tpu.memory_space<vmem>>, vector<1x1x8x32xf32>
    %340 = vector.shape_cast %339 : vector<1x1x8x32xf32> to vector<8x32xf32>
    %341 = vector.shape_cast %337 : vector<8x32xf32> to vector<1x1x8x32xf32>
    tpu.vector_store %arg4[%c0_80, %338, %c0_81, %c0_82], %341 {strides = array<i32>} : memref<1x8x8x32xf32, #tpu.memory_space<vmem>>, vector<1x1x8x32xf32>,
    %c6_i32 = arith.constant 6 : i32
    %c7_i32_83 = arith.constant 7 : i32
    %342 = arith.subi %c7_i32_83, %c6_i32 : i32
    %343 = arith.select %0, %342, %c6_i32 : i32
    %c0_84 = arith.constant 0 : index
    %344 = arith.index_cast %343 : i32 to index
    %c0_85 = arith.constant 0 : index
    %c0_86 = arith.constant 0 : index
    %345 = vector.load %arg2[%c0_84, %344, %c0_85, %c0_86] : memref<1x8x8x128xf32, #tpu.memory_space<vmem>>, vector<1x1x8x128xf32>
    %346 = vector.shape_cast %345 : vector<1x1x8x128xf32> to vector<8x128xf32>
    %cst_87 = arith.constant dense<0.000000e+00> : vector<8x128xf32>
    %347 = tpu.matmul %328, %3, %cst_87 {dimension_numbers = #tpu.dot_dimension_numbers<[1], [0], [0], [1], [0, 0, 1, 1], [], []>} : vector<8x32xf32>, vector<32x128xf32>, vector<8x128xf32> -> vector<8x128xf32>
    %348 = arith.addf %346, %347 : vector<8x128xf32>
    %349 = vector.extract_strided_slice %348 {offsets = [0, 0], sizes = [8, 32], strides = [1, 1]} : vector<8x128xf32> to vector<8x32xf32>
    %350 = arith.negf %349 : vector<8x32xf32>
    %351 = math.exp %350 : vector<8x32xf32>
    %cst_88 = arith.constant 1.000000e+00 : f32
    %352 = vector.broadcast %cst_88 : f32 to vector<8x32xf32>
    %353 = arith.addf %352, %351 : vector<8x32xf32>
    %354 = arith.divf %352, %353 : vector<8x32xf32>
    %355 = vector.extract_strided_slice %348 {offsets = [0, 32], sizes = [8, 32], strides = [1, 1]} : vector<8x128xf32> to vector<8x32xf32>
    %356 = arith.negf %355 : vector<8x32xf32>
    %357 = math.exp %356 : vector<8x32xf32>
    %cst_89 = arith.constant 1.000000e+00 : f32
    %358 = vector.broadcast %cst_89 : f32 to vector<8x32xf32>
    %359 = arith.addf %358, %357 : vector<8x32xf32>
    %360 = arith.divf %358, %359 : vector<8x32xf32>
    %361 = vector.extract_strided_slice %348 {offsets = [0, 64], sizes = [8, 32], strides = [1, 1]} : vector<8x128xf32> to vector<8x32xf32>
    %362 = math.tanh %361 : vector<8x32xf32>
    %363 = vector.extract_strided_slice %348 {offsets = [0, 96], sizes = [8, 32], strides = [1, 1]} : vector<8x128xf32> to vector<8x32xf32>
    %364 = arith.negf %363 : vector<8x32xf32>
    %365 = math.exp %364 : vector<8x32xf32>
    %cst_90 = arith.constant 1.000000e+00 : f32
    %366 = vector.broadcast %cst_90 : f32 to vector<8x32xf32>
    %367 = arith.addf %366, %365 : vector<8x32xf32>
    %368 = arith.divf %366, %367 : vector<8x32xf32>
    %369 = arith.mulf %360, %335 : vector<8x32xf32>
    %370 = arith.mulf %354, %362 : vector<8x32xf32>
    %371 = arith.addf %369, %370 : vector<8x32xf32>
    %372 = math.tanh %371 : vector<8x32xf32>
    %373 = arith.mulf %368, %372 : vector<8x32xf32>
    %374 = vector.broadcast %343 : i32 to vector<8x1xi32>
    %375 = arith.cmpi slt, %374, %1 : vector<8x1xi32>
    %376 = arith.extui %375 : vector<8x1xi1> to vector<8x1xi32>
    %377 = arith.sitofp %376 : vector<8x1xi32> to vector<8x1xf32>
    %378 = vector.broadcast %377 : vector<8x1xf32> to vector<8x32xf32>
    %379 = arith.mulf %378, %373 : vector<8x32xf32>
    %cst_91 = arith.constant 1.000000e+00 : f32
    %380 = vector.broadcast %cst_91 : f32 to vector<8x1xf32>
    %381 = arith.subf %380, %377 : vector<8x1xf32>
    %382 = vector.broadcast %381 : vector<8x1xf32> to vector<8x32xf32>
    %383 = arith.mulf %382, %328 : vector<8x32xf32>
    %384 = arith.addf %379, %383 : vector<8x32xf32>
    %385 = vector.broadcast %377 : vector<8x1xf32> to vector<8x32xf32>
    %386 = arith.mulf %385, %371 : vector<8x32xf32>
    %cst_92 = arith.constant 1.000000e+00 : f32
    %387 = vector.broadcast %cst_92 : f32 to vector<8x1xf32>
    %388 = arith.subf %387, %377 : vector<8x1xf32>
    %389 = vector.broadcast %388 : vector<8x1xf32> to vector<8x32xf32>
    %390 = arith.mulf %389, %335 : vector<8x32xf32>
    %391 = arith.addf %386, %390 : vector<8x32xf32>
    %392 = vector.broadcast %377 : vector<8x1xf32> to vector<8x32xf32>
    %393 = arith.mulf %392, %373 : vector<8x32xf32>
    %c0_93 = arith.constant 0 : index
    %394 = arith.index_cast %343 : i32 to index
    %c0_94 = arith.constant 0 : index
    %c0_95 = arith.constant 0 : index
    %395 = vector.load %arg4[%c0_93, %394, %c0_94, %c0_95] : memref<1x8x8x32xf32, #tpu.memory_space<vmem>>, vector<1x1x8x32xf32>
    %396 = vector.shape_cast %395 : vector<1x1x8x32xf32> to vector<8x32xf32>
    %397 = vector.shape_cast %393 : vector<8x32xf32> to vector<1x1x8x32xf32>
    tpu.vector_store %arg4[%c0_93, %394, %c0_94, %c0_95], %397 {strides = array<i32>} : memref<1x8x8x32xf32, #tpu.memory_space<vmem>>, vector<1x1x8x32xf32>,
    %c7_i32_96 = arith.constant 7 : i32
    %c7_i32_97 = arith.constant 7 : i32
    %398 = arith.subi %c7_i32_97, %c7_i32_96 : i32
    %399 = arith.select %0, %398, %c7_i32_96 : i32
    %c0_98 = arith.constant 0 : index
    %400 = arith.index_cast %399 : i32 to index
    %c0_99 = arith.constant 0 : index
    %c0_100 = arith.constant 0 : index
    %401 = vector.load %arg2[%c0_98, %400, %c0_99, %c0_100] : memref<1x8x8x128xf32, #tpu.memory_space<vmem>>, vector<1x1x8x128xf32>
    %402 = vector.shape_cast %401 : vector<1x1x8x128xf32> to vector<8x128xf32>
    %cst_101 = arith.constant dense<0.000000e+00> : vector<8x128xf32>
    %403 = tpu.matmul %384, %3, %cst_101 {dimension_numbers = #tpu.dot_dimension_numbers<[1], [0], [0], [1], [0, 0, 1, 1], [], []>} : vector<8x32xf32>, vector<32x128xf32>, vector<8x128xf32> -> vector<8x128xf32>
    %404 = arith.addf %402, %403 : vector<8x128xf32>
    %405 = vector.extract_strided_slice %404 {offsets = [0, 0], sizes = [8, 32], strides = [1, 1]} : vector<8x128xf32> to vector<8x32xf32>
    %406 = arith.negf %405 : vector<8x32xf32>
    %407 = math.exp %406 : vector<8x32xf32>
    %cst_102 = arith.constant 1.000000e+00 : f32
    %408 = vector.broadcast %cst_102 : f32 to vector<8x32xf32>
    %409 = arith.addf %408, %407 : vector<8x32xf32>
    %410 = arith.divf %408, %409 : vector<8x32xf32>
    %411 = vector.extract_strided_slice %404 {offsets = [0, 32], sizes = [8, 32], strides = [1, 1]} : vector<8x128xf32> to vector<8x32xf32>
    %412 = arith.negf %411 : vector<8x32xf32>
    %413 = math.exp %412 : vector<8x32xf32>
    %cst_103 = arith.constant 1.000000e+00 : f32
    %414 = vector.broadcast %cst_103 : f32 to vector<8x32xf32>
    %415 = arith.addf %414, %413 : vector<8x32xf32>
    %416 = arith.divf %414, %415 : vector<8x32xf32>
    %417 = vector.extract_strided_slice %404 {offsets = [0, 64], sizes = [8, 32], strides = [1, 1]} : vector<8x128xf32> to vector<8x32xf32>
    %418 = math.tanh %417 : vector<8x32xf32>
    %419 = vector.extract_strided_slice %404 {offsets = [0, 96], sizes = [8, 32], strides = [1, 1]} : vector<8x128xf32> to vector<8x32xf32>
    %420 = arith.negf %419 : vector<8x32xf32>
    %421 = math.exp %420 : vector<8x32xf32>
    %cst_104 = arith.constant 1.000000e+00 : f32
    %422 = vector.broadcast %cst_104 : f32 to vector<8x32xf32>
    %423 = arith.addf %422, %421 : vector<8x32xf32>
    %424 = arith.divf %422, %423 : vector<8x32xf32>
    %425 = arith.mulf %416, %391 : vector<8x32xf32>
    %426 = arith.mulf %410, %418 : vector<8x32xf32>
    %427 = arith.addf %425, %426 : vector<8x32xf32>
    %428 = math.tanh %427 : vector<8x32xf32>
    %429 = arith.mulf %424, %428 : vector<8x32xf32>
    %430 = vector.broadcast %399 : i32 to vector<8x1xi32>
    %431 = arith.cmpi slt, %430, %1 : vector<8x1xi32>
    %432 = arith.extui %431 : vector<8x1xi1> to vector<8x1xi32>
    %433 = arith.sitofp %432 : vector<8x1xi32> to vector<8x1xf32>
    %434 = vector.broadcast %433 : vector<8x1xf32> to vector<8x32xf32>
    %435 = arith.mulf %434, %429 : vector<8x32xf32>
    %cst_105 = arith.constant 1.000000e+00 : f32
    %436 = vector.broadcast %cst_105 : f32 to vector<8x1xf32>
    %437 = arith.subf %436, %433 : vector<8x1xf32>
    %438 = vector.broadcast %437 : vector<8x1xf32> to vector<8x32xf32>
    %439 = arith.mulf %438, %384 : vector<8x32xf32>
    %440 = arith.addf %435, %439 : vector<8x32xf32>
    %441 = vector.broadcast %433 : vector<8x1xf32> to vector<8x32xf32>
    %442 = arith.mulf %441, %427 : vector<8x32xf32>
    %cst_106 = arith.constant 1.000000e+00 : f32
    %443 = vector.broadcast %cst_106 : f32 to vector<8x1xf32>
    %444 = arith.subf %443, %433 : vector<8x1xf32>
    %445 = vector.broadcast %444 : vector<8x1xf32> to vector<8x32xf32>
    %446 = arith.mulf %445, %391 : vector<8x32xf32>
    %447 = arith.addf %442, %446 : vector<8x32xf32>
    %448 = vector.broadcast %433 : vector<8x1xf32> to vector<8x32xf32>
    %449 = arith.mulf %448, %429 : vector<8x32xf32>
    %c0_107 = arith.constant 0 : index
    %450 = arith.index_cast %399 : i32 to index
    %c0_108 = arith.constant 0 : index
    %c0_109 = arith.constant 0 : index
    %451 = vector.load %arg4[%c0_107, %450, %c0_108, %c0_109] : memref<1x8x8x32xf32, #tpu.memory_space<vmem>>, vector<1x1x8x32xf32>
    %452 = vector.shape_cast %451 : vector<1x1x8x32xf32> to vector<8x32xf32>
    %453 = vector.shape_cast %449 : vector<8x32xf32> to vector<1x1x8x32xf32>
    tpu.vector_store %arg4[%c0_107, %450, %c0_108, %c0_109], %453 {strides = array<i32>} : memref<1x8x8x32xf32, #tpu.memory_space<vmem>>, vector<1x1x8x32xf32>,
    %c8_i32 = arith.constant 8 : i32
    %c0_110 = arith.constant 0 : index
    %c0_111 = arith.constant 0 : index
    %c0_112 = arith.constant 0 : index
    %454 = vector.load %arg5[%c0_110, %c0_111, %c0_112] : memref<1x8x32xf32, #tpu.memory_space<vmem>>, vector<1x8x32xf32>
    %455 = vector.shape_cast %454 : vector<1x8x32xf32> to vector<8x32xf32>
    %456 = vector.shape_cast %440 : vector<8x32xf32> to vector<1x8x32xf32>
    tpu.vector_store %arg5[%c0_110, %c0_111, %c0_112], %456 {strides = array<i32>} : memref<1x8x32xf32, #tpu.memory_space<vmem>>, vector<1x8x32xf32>,
    return
  }
  func.func @transform_0(%arg0: i32) -> (i32, i32) {
    %c0_i32 = arith.constant 0 : i32
    %c0_i32_0 = arith.constant 0 : i32
    %c0_i32_1 = arith.constant 0 : i32
    return %c0_i32, %c0_i32_0 : i32, i32
  }
  func.func @transform_1(%arg0: i32) -> (i32, i32, i32, i32) {
    %c0_i32 = arith.constant 0 : i32
    %c0_i32_0 = arith.constant 0 : i32
    %c0_i32_1 = arith.constant 0 : i32
    %c0_i32_2 = arith.constant 0 : i32
    return %arg0, %c0_i32, %c0_i32_0, %c0_i32_1 : i32, i32, i32, i32
  }
  func.func @transform_2(%arg0: i32) -> (i32, i32, i32) {
    %c0_i32 = arith.constant 0 : i32
    %c0_i32_0 = arith.constant 0 : i32
    %c0_i32_1 = arith.constant 0 : i32
    return %arg0, %c0_i32, %c0_i32_0 : i32, i32, i32
  }
  func.func @transform_3(%arg0: i32) -> (i32, i32, i32, i32) {
    %c0_i32 = arith.constant 0 : i32
    %c0_i32_0 = arith.constant 0 : i32
    %c0_i32_1 = arith.constant 0 : i32
    %c0_i32_2 = arith.constant 0 : i32
    return %arg0, %c0_i32, %c0_i32_0, %c0_i32_1 : i32, i32, i32, i32
  }
  func.func @transform_4(%arg0: i32) -> (i32, i32, i32) {
    %c0_i32 = arith.constant 0 : i32
    %c0_i32_0 = arith.constant 0 : i32
    %c0_i32_1 = arith.constant 0 : i32
    return %arg0, %c0_i32, %c0_i32_0 : i32, i32, i32
  }
}

</mosaic_0001>

<llo_original>
// kernel: lstm_forward.2
$region0: #{lstm_forward.2}
  #allocation0 [shape = 'u32[]', space=smem, size = 0x4, offset = 0x4, fixed_abs, tag = 'smem constant byte address 0x4 - core index']
  #allocation1 [shape = 'u32[144,128]{1,0:T(1,128)}', space=vmem, size = 0x12000, scoped, tag = 'internal scratch']
  %s0 = inlined_call_operand.vmem [shape: s32[8,1], index: 0, kind: input, shape index: {}]
  %s1 = inlined_call_operand.vmem [shape: f32[2,8,8,128], index: 1, kind: input, shape index: {}]
  %s2 = inlined_call_operand.vmem [shape: f32[2,32,128], index: 2, kind: input, shape index: {}]
  %s3 = inlined_call_operand.vmem [shape: f32[2,8,8,32], index: 3, kind: output, shape index: {0}]
  %s4 = inlined_call_operand.vmem [shape: f32[2,8,32], index: 4, kind: output, shape index: {1}]
  %5 = xla_tuple %s3, %s4
  %s6 = sld [smem:[#allocation0]]
  $region53: #{lstm_forward.2} parent=0
    _
  %s8 = ssub.s32 1, %s6
  %s9 = scalar_select 0, %s8, %s6
  loop: start=0, step=1, limit=4
  $region2: #{lstm_forward.2} parent=0 // loop_pre_header
    _
  $region3: #{lstm_forward.2} parent=0 // loop_header
    %s11 = sphi 0, %s15
    %p12 = scmp.ge.s32.totalorder %s11, 4
    %s19 = sphi 0, %s19
    %s21 = sphi 0, %s19
    %s22 = sphi 0, %s21
    %s36 = sphi 0, %s22
    %s42 = sphi 0, %s44
    %s45 = sphi 0, %s42
    %s46 = sphi 0, %s45
    %s62 = sphi 0, %s46
    %s68 = sphi 0, %s70
    %s71 = sphi 0, %s68
    %s72 = sphi 0, %s71
    %s88 = sphi 0, %s72
    %s94 = sphi 0, %s96
    %s97 = sphi 0, %s94
    %s98 = sphi 0, %s97
    %s114 = sphi 0, %s98
    %s120 = sphi 0, %s122
    %s123 = sphi 0, %s120
    %s124 = sphi 0, %s123
    %s140 = sphi 0, %s124
  $region4: #{lstm_forward.2} parent=0 // loop_header_branch
    %14 = sbr.rel (%p12) target = $region8
  $region5: #{lstm_forward.2} parent=0 // loop_body
    %s16 = ssub.s32 %s11, 1
    %s17 = ssub.s32 %s11, 2
    %s18 = sadd.s32 %s11, 1
    %s20 = sadd.s32 %s19, 1
    %p23 = scmp.eq.s32.totalorder %s11, 1
    %p24 = scmp.ne.s32.totalorder %s19, %s21
    %p25 = scmp.eq.s32.totalorder %s11, 0
    %p26 = por %p24, %p25
    %p27 = scmp.ne.s32.totalorder %s19, %s21
    %p28 = scmp.eq.s32.totalorder %s16, 1
    %p29 = por %p27, %p28
    %p30 = scmp.ne.s32.totalorder %s21, %s22
    %p31 = scmp.eq.s32.totalorder %s16, 0
    %p32 = por %p30, %p31
    %p33 = scmp.ne.s32.totalorder %s21, %s22
    %p34 = scmp.eq.s32.totalorder %s17, 1
    %p35 = por %p33, %p34
    %p37 = scmp.ne.s32.totalorder %s22, %s36
    %p38 = scmp.eq.s32.totalorder %s17, 0
    %p39 = por %p37, %p38
    %s40 = ssub.s32 %s11, %s18
    %p41 = scmp.eq.s32.totalorder %s40, 0
    %s43 = sadd.s32 %s42, 1
    %s44 = scalar_select %p41, %s42, %s43
    %p47 = pneg %p41
    %p48 = scmp.eq.s32.totalorder %s11, 1
    %p49 = por %p47, %p48
    %p50 = scmp.ne.s32.totalorder %s42, %s45
    %p51 = scmp.eq.s32.totalorder %s11, 0
    %p52 = por %p50, %p51
    %p53 = scmp.ne.s32.totalorder %s42, %s45
    %p54 = scmp.eq.s32.totalorder %s16, 1
    %p55 = por %p53, %p54
    %p56 = scmp.ne.s32.totalorder %s45, %s46
    %p57 = scmp.eq.s32.totalorder %s16, 0
    %p58 = por %p56, %p57
    %p59 = scmp.ne.s32.totalorder %s45, %s46
    %p60 = scmp.eq.s32.totalorder %s17, 1
    %p61 = por %p59, %p60
    %p63 = scmp.ne.s32.totalorder %s46, %s62
    %p64 = scmp.eq.s32.totalorder %s17, 0
    %p65 = por %p63, %p64
    %s66 = ssub.s32 %s11, %s18
    %p67 = scmp.eq.s32.totalorder %s66, 0
    %s69 = sadd.s32 %s68, 1
    %s70 = scalar_select %p67, %s68, %s69
    %p73 = pneg %p67
    %p74 = scmp.eq.s32.totalorder %s11, 1
    %p75 = por %p73, %p74
    %p76 = scmp.ne.s32.totalorder %s68, %s71
    %p77 = scmp.eq.s32.totalorder %s11, 0
    %p78 = por %p76, %p77
    %p79 = scmp.ne.s32.totalorder %s68, %s71
    %p80 = scmp.eq.s32.totalorder %s16, 1
    %p81 = por %p79, %p80
    %p82 = scmp.ne.s32.totalorder %s71, %s72
    %p83 = scmp.eq.s32.totalorder %s16, 0
    %p84 = por %p82, %p83
    %p85 = scmp.ne.s32.totalorder %s71, %s72
    %p86 = scmp.eq.s32.totalorder %s17, 1
    %p87 = por %p85, %p86
    %p89 = scmp.ne.s32.totalorder %s72, %s88
    %p90 = scmp.eq.s32.totalorder %s17, 0
    %p91 = por %p89, %p90
    %s92 = ssub.s32 %s11, %s18
    %p93 = scmp.eq.s32.totalorder %s92, 0
    %s95 = sadd.s32 %s94, 1
    %s96 = scalar_select %p93, %s94, %s95
    %p99 = pneg %p93
    %p100 = scmp.eq.s32.totalorder %s11, 1
    %p101 = por %p99, %p100
    %p102 = scmp.ne.s32.totalorder %s94, %s97
    %p103 = scmp.eq.s32.totalorder %s11, 0
    %p104 = por %p102, %p103
    %p105 = scmp.ne.s32.totalorder %s94, %s97
    %p106 = scmp.eq.s32.totalorder %s16, 1
    %p107 = por %p105, %p106
    %p108 = scmp.ne.s32.totalorder %s97, %s98
    %p109 = scmp.eq.s32.totalorder %s16, 0
    %p110 = por %p108, %p109
    %p111 = scmp.ne.s32.totalorder %s97, %s98
    %p112 = scmp.eq.s32.totalorder %s17, 1
    %p113 = por %p111, %p112
    %p115 = scmp.ne.s32.totalorder %s98, %s114
    %p116 = scmp.eq.s32.totalorder %s17, 0
    %p117 = por %p115, %p116
    %s118 = ssub.s32 %s11, %s18
    %p119 = scmp.eq.s32.totalorder %s118, 0
    %s121 = sadd.s32 %s120, 1
    %s122 = scalar_select %p119, %s120, %s121
    %p125 = pneg %p119
    %p126 = scmp.eq.s32.totalorder %s11, 1
    %p127 = por %p125, %p126
    %p128 = scmp.ne.s32.totalorder %s120, %s123
    %p129 = scmp.eq.s32.totalorder %s11, 0
    %p130 = por %p128, %p129
    %p131 = scmp.ne.s32.totalorder %s120, %s123
    %p132 = scmp.eq.s32.totalorder %s16, 1
    %p133 = por %p131, %p132
    %p134 = scmp.ne.s32.totalorder %s123, %s124
    %p135 = scmp.eq.s32.totalorder %s16, 0
    %p136 = por %p134, %p135
    %p137 = scmp.ne.s32.totalorder %s123, %s124
    %p138 = scmp.eq.s32.totalorder %s17, 1
    %p139 = por %p137, %p138
    %p141 = scmp.ne.s32.totalorder %s124, %s140
    %p142 = scmp.eq.s32.totalorder %s17, 0
    %p143 = por %p141, %p142
    %p144 = scmp.le.s32.totalorder 1, %s11
    %p145 = scmp.lt.s32.totalorder %s11, 3
    %p146 = pnand %p144, %p145
    %p147 = pneg %p146
    // Predicated region
    $region9: #{lstm_forward.2} parent=5 // pred_check
      _
    $region10: #{lstm_forward.2} parent=5 // pred_check_branch
      %149 = sbr.rel (%p146) target = $region12
    $region11: #{lstm_forward.2} parent=5 // pred_region
      %s150 = ssub.s32 %s11, 1
      // Predicated region
      $region13: #{lstm_forward.2} parent=11 // pred_check
        %p151 = pneg %p32
      $region14: #{lstm_forward.2} parent=11 // pred_check_branch
        %153 = sbr.rel (%p151) target = $region16
      $region15: #{lstm_forward.2} parent=11 // pred_region
        _
      $region16: #{lstm_forward.2} parent=11 // pred_fallthru
        _
    $region12: #{lstm_forward.2} parent=5 // pred_fallthru
      _
    %p154 = scmp.lt.s32.totalorder %s11, 2
    // Predicated region
    $region17: #{lstm_forward.2} parent=5 // pred_check
      %p155 = pneg %p154
    $region18: #{lstm_forward.2} parent=5 // pred_check_branch
      %157 = sbr.rel (%p155) target = $region20
    $region19: #{lstm_forward.2} parent=5 // pred_region
      // Predicated region
      $region21: #{lstm_forward.2} parent=19 // pred_check
        %p158 = pneg %p52
      $region22: #{lstm_forward.2} parent=19 // pred_check_branch
        %160 = sbr.rel (%p158) target = $region24
      $region23: #{lstm_forward.2} parent=19 // pred_region
        %p161 = scmp.lt.s32.totalorder %s11, 1
        %s162 = scalar_select %p161, %s11, 1
        %s163 = smul.addr %s162, 8
        %s164 = smul.addr %s163, 8
        %s165 = scalar_lea.vmem %s1, %s164
      $region24: #{lstm_forward.2} parent=19 // pred_fallthru
        _
      // Predicated region
      $region25: #{lstm_forward.2} parent=19 // pred_check
        %p166 = pneg %p78
      $region26: #{lstm_forward.2} parent=19 // pred_check_branch
        %168 = sbr.rel (%p166) target = $region28
      $region27: #{lstm_forward.2} parent=19 // pred_region
        %p169 = scmp.lt.s32.totalorder %s11, 1
        %s170 = scalar_select %p169, %s11, 1
        %s171 = smul.addr %s170, 4
        %s172 = smul.addr %s171, 8
        %s173 = scalar_lea.vmem %s2, %s172
      $region28: #{lstm_forward.2} parent=19 // pred_fallthru
        _
    $region20: #{lstm_forward.2} parent=5 // pred_fallthru
      _
    %p174 = scmp.le.s32.totalorder 1, %s11
    %p175 = scmp.lt.s32.totalorder %s11, 3
    %p176 = pnand %p174, %p175
    %p177 = pneg %p176
    // Predicated region
    $region29: #{lstm_forward.2} parent=5 // pred_check
      _
    $region30: #{lstm_forward.2} parent=5 // pred_check_branch
      %179 = sbr.rel (%p176) target = $region32
    $region31: #{lstm_forward.2} parent=5 // pred_region
      %s180 = ssub.s32 %s11, 1
      %p181 = pneg %p32
      %p182 = pneg %p29
      %p183 = scmp.lt.s32.totalorder %s16, 1
      %s184 = scalar_select %p183, %s16, 1
      %s185 = smul.addr %s184, 8
      %s186 = smul.addr %s185, 8
      %s187 = scalar_lea.vmem %s1, %s186
      %p188 = pneg %p58
      %p189 = pneg %p55
      %p190 = scmp.lt.s32.totalorder %s16, 1
      %s191 = scalar_select %p190, %s16, 1
      %s192 = smul.addr %s191, 4
      %s193 = smul.addr %s192, 8
      %s194 = scalar_lea.vmem %s2, %s193
      %p195 = pneg %p84
      %p196 = pneg %p81
      %p197 = pneg %p110
      %p198 = pneg %p107
      %p199 = scmp.lt.s32.totalorder %s16, 1
      %s200 = scalar_select %p199, %s16, 1
      %s201 = smul.addr %s200, 8
      %s202 = smul.addr %s201, 8
      %s203 = scalar_lea.vmem %s3, %s202
      %p204 = pneg %p136
      %p205 = pneg %p133
      %p206 = scmp.lt.s32.totalorder %s16, 1
      %s207 = scalar_select %p206, %s16, 1
      %s208 = smul.addr %s207, 8
      %s209 = scalar_lea.vmem %s4, %s208
      %p210 = scmp.lt.s32.totalorder %s16, 1
      %s211 = scalar_select %p210, %s16, 1
      %s212 = smul.addr %s211, 8
      %s213 = smul.addr %s212, 8
      %s214 = scalar_lea.vmem %s1, %s213
      %p215 = scmp.lt.s32.totalorder %s16, 1
      %s216 = scalar_select %p215, %s16, 1
      %s217 = smul.addr %s216, 4
      %s218 = smul.addr %s217, 8
      %s219 = scalar_lea.vmem %s2, %s218
      %p220 = scmp.lt.s32.totalorder %s16, 1
      %s221 = scalar_select %p220, %s16, 1
      %s222 = smul.addr %s221, 8
      %s223 = smul.addr %s222, 8
      %s224 = scalar_lea.vmem %s3, %s223
      %p225 = scmp.lt.s32.totalorder %s16, 1
      %s226 = scalar_select %p225, %s16, 1
      %s227 = smul.addr %s226, 8
      %s228 = scalar_lea.vmem %s4, %s227
      %p229 = scmp.eq.s32.totalorder %s16, 1
      %v230 = vld [vmem:[%s0] sm:$0xff]
      %v231 = vld [vmem:[%s219] sm:$0xff]
      %v232 = vld [vmem:[%s219 + $0x8] sm:$0xff]
      %v233 = vld [vmem:[%s219 + $0x10] sm:$0xff]
      %v234 = vld [vmem:[%s219 + $0x18] sm:$0xff]
      %s235 = scalar_select %p229, 7, 0
      %s236 = smul.u32 %s235, 8
      %s237 = scalar_lea.vmem %s214, %s236
      %v238 = vld [vmem:[%s237] sm:$0xff]
      %vm239 = vcmask 261120
      %v241 = vsel %vm239, 0.0, 0
      %243 = vmatprep.subr.mxu0 0.0
      %244 = vmatpush1.msra.mxu0 %v231
      %245 = vmatprep.subr.mxu0 0.0
      %246 = vmatpush1.msra.mxu0 %v232
      %247 = vmatprep.subr.mxu0 0.0
      %248 = vmatpush1.msra.mxu0 %v233
      %249 = vmatprep.subr.mxu0 0.0
      %250 = vmatpush1.msra.mxu0 %v234
      %251 = vmatprep.subr.mxu0 0.0
      %252 = vmatpush1.msra.mxu0 0.0
      %253 = vmatprep.subr.mxu0 0.0
      %254 = vmatpush1.msra.mxu0 0.0
      %255 = vmatprep.subr.mxu0 0.0
      %256 = vmatpush1.msra.mxu0 0.0
      %257 = vmatprep.subr.mxu0 0.0
      %258 = vmatpush1.msra.mxu0 0.0
      %259 = vmatprep.subr.mxu0 0.0
      %260 = vmatpush1.msra.mxu0 0.0
      %261 = vmatprep.subr.mxu0 0.0
      %262 = vmatpush1.msra.mxu0 0.0
      %263 = vmatprep.subr.mxu0 0.0
      %264 = vmatpush1.msra.mxu0 0.0
      %265 = vmatprep.subr.mxu0 0.0
      %266 = vmatpush1.msra.mxu0 0.0
      %267 = vmatprep.subr.mxu0 0.0
      %268 = vmatpush1.msra.mxu0 0.0
      %269 = vmatprep.subr.mxu0 0.0
      %270 = vmatpush1.msra.mxu0 0.0
      %271 = vmatprep.subr.mxu0 0.0
      %272 = vmatpush1.msra.mxu0 0.0
      %273 = vmatprep.subr.mxu0 0.0
      %274 = vmatpush1.msra.mxu0 0.0
      %275 = vmatprep.subr.mxu0 0.0
      %276 = vmatpush1.msra.mxu0 0.0
      %277 = vmatprep.subr.mxu0 0.0
      %278 = vmatpush1.msra.mxu0 0.0
      %279 = vmatprep.subr.mxu0 0.0
      %280 = vmatpush1.msra.mxu0 0.0
      %281 = vmatprep.subr.mxu0 0.0
      %282 = vmatpush1.msra.mxu0 0.0
      %283 = vmatprep.subr.mxu0 0.0
      %284 = vmatpush1.msra.mxu0 0.0
      %285 = vmatprep.subr.mxu0 0.0
      %286 = vmatpush1.msra.mxu0 0.0
      %287 = vmatprep.subr.mxu0 0.0
      %288 = vmatpush1.msra.mxu0 0.0
      %289 = vmatprep.subr.mxu0 0.0
      %290 = vmatpush1.msra.mxu0 0.0
      %291 = vmatprep.subr.mxu0 0.0
      %292 = vmatpush1.msra.mxu0 0.0
      %293 = vmatprep.subr.mxu0 0.0
      %294 = vmatpush1.msra.mxu0 0.0
      %295 = vmatprep.subr.mxu0 0.0
      %296 = vmatpush1.msra.mxu0 0.0
      %297 = vmatprep.subr.mxu0 0.0
      %298 = vmatpush1.msra.mxu0 0.0
      %299 = vmatprep.subr.mxu0 0.0
      %300 = vmatpush1.msra.mxu0 0.0
      %301 = vmatprep.subr.mxu0 0.0
      %302 = vmatpush1.msra.mxu0 0.0
      %303 = vmatprep.subr.mxu0 0.0
      %304 = vmatpush1.msra.mxu0 0.0
      %305 = vmatprep.subr.mxu0 0.0
      %306 = vmatpush1.msra.mxu0 0.0
      %307 = vmatprep.mubr.f32.mxu0 0.0
      %308 = vmatmul.mubr.f32.gmra.mrb[0].mxu0 %v241
      %v309 = vpop.f32.mrb[0].mxu0
      %v310 = vadd.f32 0.0, %v309
      %v311 = vpop.f32.mrb[0].mxu0
      %312 = vdwg.mxu0
      %v313 = vadd.f32 %v238, %v310
      %v314 = vxor.u32 %v313, 2147483648
      %v315 = vmul.f32 %v314, 1.442695
      %v316 = vpow.pop %v315
      %v317 = vadd.f32 %v316, 1.0
      %v318 = vrcp.pop %v317
      %v319 = vmul.f32 1.0, %v318
      %v320 = vtanh.pop %v313
      %v321 = vmul.f32 %v319, 0.0
      %323 = vrot.lane.b32.xlu0 %v320, 64
      %v324 = vpop.permute.xlu0 %323
      %v326 = vmul.f32 %v319, %v324
      %328 = vrot.lane.b32.xlu0 %v326, 32
      %v329 = vpop.permute.xlu0 %328
      %v331 = vadd.f32 %v321, %v329
      %v332 = vtanh.pop %v331
      %334 = vrot.lane.b32.xlu0 %v332, 64
      %v335 = vpop.permute.xlu0 %334
      %v337 = vmul.f32 %v319, %v335
      %v338 = vstv %s235
      %vm339 = vcmp.lt.s32.totalorder %v338, %v230
      %v340 = vsel %vm339, 1, 0
      %v341 = vcvt.s32.f32 %v340
      %343 = vset.pattern.permute.xlu0 0
      %344 = vperm.xlu0 %343, %v341
      %v345 = vpop.permute.xlu0 %344
      %v347 = vmul.f32 %v345, %v337
      %v348 = vsub.f32 1.0, %v341
      %350 = vset.pattern.permute.xlu0 0
      %351 = vperm.xlu0 %350, %v348
      %v352 = vpop.permute.xlu0 %351
      %v354 = vmul.f32 %v352, 0.0
      %v355 = vadd.f32 %v347, %v354
      %v356 = vmul.f32 %v345, %v331
      %v357 = vadd.f32 %v356, %v354
      %359 = vrot.lane.b32.xlu0 %v347, 32
      %v360 = vpop.permute.xlu0 %359
      %s362 = scalar_lea.vmem %s224, %s236
      %363 = vst.msk [vmem:[%s362] sm:$0xff] %vm239, %v360
      %s364 = scalar_select %p229, 6, 1
      %s365 = smul.u32 %s364, 8
      %s366 = scalar_lea.vmem %s214, %s365
      %v367 = vld [vmem:[%s366] sm:$0xff]
      %369 = vrot.lane.b32.xlu0 %v355, 32
      %v370 = vpop.permute.xlu0 %369
      %v371 = vsel %vm239, %v370, 0
      %373 = vmatprep.subr.mxu0 0.0
      %374 = vmatpush1.msra.mxu0 %v231
      %375 = vmatprep.subr.mxu0 0.0
      %376 = vmatpush1.msra.mxu0 %v232
      %377 = vmatprep.subr.mxu0 0.0
      %378 = vmatpush1.msra.mxu0 %v233
      %379 = vmatprep.subr.mxu0 0.0
      %380 = vmatpush1.msra.mxu0 %v234
      %381 = vmatprep.subr.mxu0 0.0
      %382 = vmatpush1.msra.mxu0 0.0
      %383 = vmatprep.subr.mxu0 0.0
      %384 = vmatpush1.msra.mxu0 0.0
      %385 = vmatprep.subr.mxu0 0.0
      %386 = vmatpush1.msra.mxu0 0.0
      %387 = vmatprep.subr.mxu0 0.0
      %388 = vmatpush1.msra.mxu0 0.0
      %389 = vmatprep.subr.mxu0 0.0
      %390 = vmatpush1.msra.mxu0 0.0
      %391 = vmatprep.subr.mxu0 0.0
      %392 = vmatpush1.msra.mxu0 0.0
      %393 = vmatprep.subr.mxu0 0.0
      %394 = vmatpush1.msra.mxu0 0.0
      %395 = vmatprep.subr.mxu0 0.0
      %396 = vmatpush1.msra.mxu0 0.0
      %397 = vmatprep.subr.mxu0 0.0
      %398 = vmatpush1.msra.mxu0 0.0
      %399 = vmatprep.subr.mxu0 0.0
      %400 = vmatpush1.msra.mxu0 0.0
      %401 = vmatprep.subr.mxu0 0.0
      %402 = vmatpush1.msra.mxu0 0.0
      %403 = vmatprep.subr.mxu0 0.0
      %404 = vmatpush1.msra.mxu0 0.0
      %405 = vmatprep.subr.mxu0 0.0
      %406 = vmatpush1.msra.mxu0 0.0
      %407 = vmatprep.subr.mxu0 0.0
      %408 = vmatpush1.msra.mxu0 0.0
      %409 = vmatprep.subr.mxu0 0.0
      %410 = vmatpush1.msra.mxu0 0.0
      %411 = vmatprep.subr.mxu0 0.0
      %412 = vmatpush1.msra.mxu0 0.0
      %413 = vmatprep.subr.mxu0 0.0
      %414 = vmatpush1.msra.mxu0 0.0
      %415 = vmatprep.subr.mxu0 0.0
      %416 = vmatpush1.msra.mxu0 0.0
      %417 = vmatprep.subr.mxu0 0.0
      %418 = vmatpush1.msra.mxu0 0.0
      %419 = vmatprep.subr.mxu0 0.0
      %420 = vmatpush1.msra.mxu0 0.0
      %421 = vmatprep.subr.mxu0 0.0
      %422 = vmatpush1.msra.mxu0 0.0
      %423 = vmatprep.subr.mxu0 0.0
      %424 = vmatpush1.msra.mxu0 0.0
      %425 = vmatprep.subr.mxu0 0.0
      %426 = vmatpush1.msra.mxu0 0.0
      %427 = vmatprep.subr.mxu0 0.0
      %428 = vmatpush1.msra.mxu0 0.0
      %429 = vmatprep.subr.mxu0 0.0
      %430 = vmatpush1.msra.mxu0 0.0
      %431 = vmatprep.subr.mxu0 0.0
      %432 = vmatpush1.msra.mxu0 0.0
      %433 = vmatprep.subr.mxu0 0.0
      %434 = vmatpush1.msra.mxu0 0.0
      %435 = vmatprep.subr.mxu0 0.0
      %436 = vmatpush1.msra.mxu0 0.0
      %437 = vmatprep.mubr.f32.mxu0 0.0
      %438 = vmatmul.mubr.f32.gmra.mrb[0].mxu0 %v371
      %v439 = vpop.f32.mrb[0].mxu0
      %v440 = vadd.f32 0.0, %v439
      %v441 = vpop.f32.mrb[0].mxu0
      %442 = vdwg.mxu0
      %v443 = vadd.f32 %v367, %v440
      %v444 = vxor.u32 %v443, 2147483648
      %v445 = vmul.f32 %v444, 1.442695
      %v446 = vpow.pop %v445
      %v447 = vadd.f32 %v446, 1.0
      %v448 = vrcp.pop %v447
      %v449 = vmul.f32 1.0, %v448
      %v450 = vtanh.pop %v443
      %v451 = vmul.f32 %v449, %v357
      %453 = vrot.lane.b32.xlu0 %v450, 64
      %v454 = vpop.permute.xlu0 %453
      %v456 = vmul.f32 %v449, %v454
      %458 = vrot.lane.b32.xlu0 %v456, 32
      %v459 = vpop.permute.xlu0 %458
      %v461 = vadd.f32 %v451, %v459
      %v462 = vtanh.pop %v461
      %464 = vrot.lane.b32.xlu0 %v462, 64
      %v465 = vpop.permute.xlu0 %464
      %v467 = vmul.f32 %v449, %v465
      %v468 = vstv %s364
      %vm469 = vcmp.lt.s32.totalorder %v468, %v230
      %v470 = vsel %vm469, 1, 0
      %v471 = vcvt.s32.f32 %v470
      %473 = vset.pattern.permute.xlu0 0
      %474 = vperm.xlu0 %473, %v471
      %v475 = vpop.permute.xlu0 %474
      %v477 = vmul.f32 %v475, %v467
      %v478 = vsub.f32 1.0, %v471
      %480 = vset.pattern.permute.xlu0 0
      %481 = vperm.xlu0 %480, %v478
      %v482 = vpop.permute.xlu0 %481
      %v484 = vmul.f32 %v482, %v355
      %v485 = vadd.f32 %v477, %v484
      %v486 = vmul.f32 %v475, %v461
      %v487 = vmul.f32 %v482, %v357
      %v488 = vadd.f32 %v486, %v487
      %490 = vrot.lane.b32.xlu0 %v477, 32
      %v491 = vpop.permute.xlu0 %490
      %s493 = scalar_lea.vmem %s224, %s365
      %494 = vst.msk [vmem:[%s493] sm:$0xff] %vm239, %v491
      %s495 = scalar_select %p229, 5, 2
      %s496 = smul.u32 %s495, 8
      %s497 = scalar_lea.vmem %s214, %s496
      %v498 = vld [vmem:[%s497] sm:$0xff]
      %500 = vrot.lane.b32.xlu0 %v485, 32
      %v501 = vpop.permute.xlu0 %500
      %v502 = vsel %vm239, %v501, 0
      %504 = vmatprep.subr.mxu0 0.0
      %505 = vmatpush1.msra.mxu0 %v231
      %506 = vmatprep.subr.mxu0 0.0
      %507 = vmatpush1.msra.mxu0 %v232
      %508 = vmatprep.subr.mxu0 0.0
      %509 = vmatpush1.msra.mxu0 %v233
      %510 = vmatprep.subr.mxu0 0.0
      %511 = vmatpush1.msra.mxu0 %v234
      %512 = vmatprep.subr.mxu0 0.0
      %513 = vmatpush1.msra.mxu0 0.0
      %514 = vmatprep.subr.mxu0 0.0
      %515 = vmatpush1.msra.mxu0 0.0
      %516 = vmatprep.subr.mxu0 0.0
      %517 = vmatpush1.msra.mxu0 0.0
      %518 = vmatprep.subr.mxu0 0.0
      %519 = vmatpush1.msra.mxu0 0.0
      %520 = vmatprep.subr.mxu0 0.0
      %521 = vmatpush1.msra.mxu0 0.0
      %522 = vmatprep.subr.mxu0 0.0
      %523 = vmatpush1.msra.mxu0 0.0
      %524 = vmatprep.subr.mxu0 0.0
      %525 = vmatpush1.msra.mxu0 0.0
      %526 = vmatprep.subr.mxu0 0.0
      %527 = vmatpush1.msra.mxu0 0.0
      %528 = vmatprep.subr.mxu0 0.0
      %529 = vmatpush1.msra.mxu0 0.0
      %530 = vmatprep.subr.mxu0 0.0
      %531 = vmatpush1.msra.mxu0 0.0
      %532 = vmatprep.subr.mxu0 0.0
      %533 = vmatpush1.msra.mxu0 0.0
      %534 = vmatprep.subr.mxu0 0.0
      %535 = vmatpush1.msra.mxu0 0.0
      %536 = vmatprep.subr.mxu0 0.0
      %537 = vmatpush1.msra.mxu0 0.0
      %538 = vmatprep.subr.mxu0 0.0
      %539 = vmatpush1.msra.mxu0 0.0
      %540 = vmatprep.subr.mxu0 0.0
      %541 = vmatpush1.msra.mxu0 0.0
      %542 = vmatprep.subr.mxu0 0.0
      %543 = vmatpush1.msra.mxu0 0.0
      %544 = vmatprep.subr.mxu0 0.0
      %545 = vmatpush1.msra.mxu0 0.0
      %546 = vmatprep.subr.mxu0 0.0
      %547 = vmatpush1.msra.mxu0 0.0
      %548 = vmatprep.subr.mxu0 0.0
      %549 = vmatpush1.msra.mxu0 0.0
      %550 = vmatprep.subr.mxu0 0.0
      %551 = vmatpush1.msra.mxu0 0.0
      %552 = vmatprep.subr.mxu0 0.0
      %553 = vmatpush1.msra.mxu0 0.0
      %554 = vmatprep.subr.mxu0 0.0
      %555 = vmatpush1.msra.mxu0 0.0
      %556 = vmatprep.subr.mxu0 0.0
      %557 = vmatpush1.msra.mxu0 0.0
      %558 = vmatprep.subr.mxu0 0.0
      %559 = vmatpush1.msra.mxu0 0.0
      %560 = vmatprep.subr.mxu0 0.0
      %561 = vmatpush1.msra.mxu0 0.0
      %562 = vmatprep.subr.mxu0 0.0
      %563 = vmatpush1.msra.mxu0 0.0
      %564 = vmatprep.subr.mxu0 0.0
      %565 = vmatpush1.msra.mxu0 0.0
      %566 = vmatprep.subr.mxu0 0.0
      %567 = vmatpush1.msra.mxu0 0.0
      %568 = vmatprep.mubr.f32.mxu0 0.0
      %569 = vmatmul.mubr.f32.gmra.mrb[0].mxu0 %v502
      %v570 = vpop.f32.mrb[0].mxu0
      %v571 = vadd.f32 0.0, %v570
      %v572 = vpop.f32.mrb[0].mxu0
      %573 = vdwg.mxu0
      %v574 = vadd.f32 %v498, %v571
      %v575 = vxor.u32 %v574, 2147483648
      %v576 = vmul.f32 %v575, 1.442695
      %v577 = vpow.pop %v576
      %v578 = vadd.f32 %v577, 1.0
      %v579 = vrcp.pop %v578
      %v580 = vmul.f32 1.0, %v579
      %v581 = vtanh.pop %v574
      %v582 = vmul.f32 %v580, %v488
      %584 = vrot.lane.b32.xlu0 %v581, 64
      %v585 = vpop.permute.xlu0 %584
      %v587 = vmul.f32 %v580, %v585
      %589 = vrot.lane.b32.xlu0 %v587, 32
      %v590 = vpop.permute.xlu0 %589
      %v592 = vadd.f32 %v582, %v590
      %v593 = vtanh.pop %v592
      %595 = vrot.lane.b32.xlu0 %v593, 64
      %v596 = vpop.permute.xlu0 %595
      %v598 = vmul.f32 %v580, %v596
      %v599 = vstv %s495
      %vm600 = vcmp.lt.s32.totalorder %v599, %v230
      %v601 = vsel %vm600, 1, 0
      %v602 = vcvt.s32.f32 %v601
      %604 = vset.pattern.permute.xlu0 0
      %605 = vperm.xlu0 %604, %v602
      %v606 = vpop.permute.xlu0 %605
      %v608 = vmul.f32 %v606, %v598
      %v609 = vsub.f32 1.0, %v602
      %611 = vset.pattern.permute.xlu0 0
      %612 = vperm.xlu0 %611, %v609
      %v613 = vpop.permute.xlu0 %612
      %v615 = vmul.f32 %v613, %v485
      %v616 = vadd.f32 %v608, %v615
      %v617 = vmul.f32 %v606, %v592
      %v618 = vmul.f32 %v613, %v488
      %v619 = vadd.f32 %v617, %v618
      %621 = vrot.lane.b32.xlu0 %v608, 32
      %v622 = vpop.permute.xlu0 %621
      %s624 = scalar_lea.vmem %s224, %s496
      %625 = vst.msk [vmem:[%s624] sm:$0xff] %vm239, %v622
      %s626 = scalar_select %p229, 4, 3
      %s627 = smul.u32 %s626, 8
      %s628 = scalar_lea.vmem %s214, %s627
      %v629 = vld [vmem:[%s628] sm:$0xff]
      %631 = vrot.lane.b32.xlu0 %v616, 32
      %v632 = vpop.permute.xlu0 %631
      %v633 = vsel %vm239, %v632, 0
      %635 = vmatprep.subr.mxu0 0.0
      %636 = vmatpush1.msra.mxu0 %v231
      %637 = vmatprep.subr.mxu0 0.0
      %638 = vmatpush1.msra.mxu0 %v232
      %639 = vmatprep.subr.mxu0 0.0
      %640 = vmatpush1.msra.mxu0 %v233
      %641 = vmatprep.subr.mxu0 0.0
      %642 = vmatpush1.msra.mxu0 %v234
      %643 = vmatprep.subr.mxu0 0.0
      %644 = vmatpush1.msra.mxu0 0.0
      %645 = vmatprep.subr.mxu0 0.0
      %646 = vmatpush1.msra.mxu0 0.0
      %647 = vmatprep.subr.mxu0 0.0
      %648 = vmatpush1.msra.mxu0 0.0
      %649 = vmatprep.subr.mxu0 0.0
      %650 = vmatpush1.msra.mxu0 0.0
      %651 = vmatprep.subr.mxu0 0.0
      %652 = vmatpush1.msra.mxu0 0.0
      %653 = vmatprep.subr.mxu0 0.0
      %654 = vmatpush1.msra.mxu0 0.0
      %655 = vmatprep.subr.mxu0 0.0
      %656 = vmatpush1.msra.mxu0 0.0
      %657 = vmatprep.subr.mxu0 0.0
      %658 = vmatpush1.msra.mxu0 0.0
      %659 = vmatprep.subr.mxu0 0.0
      %660 = vmatpush1.msra.mxu0 0.0
      %661 = vmatprep.subr.mxu0 0.0
      %662 = vmatpush1.msra.mxu0 0.0
      %663 = vmatprep.subr.mxu0 0.0
      %664 = vmatpush1.msra.mxu0 0.0
      %665 = vmatprep.subr.mxu0 0.0
      %666 = vmatpush1.msra.mxu0 0.0
      %667 = vmatprep.subr.mxu0 0.0
      %668 = vmatpush1.msra.mxu0 0.0
      %669 = vmatprep.subr.mxu0 0.0
      %670 = vmatpush1.msra.mxu0 0.0
      %671 = vmatprep.subr.mxu0 0.0
      %672 = vmatpush1.msra.mxu0 0.0
      %673 = vmatprep.subr.mxu0 0.0
      %674 = vmatpush1.msra.mxu0 0.0
      %675 = vmatprep.subr.mxu0 0.0
      %676 = vmatpush1.msra.mxu0 0.0
      %677 = vmatprep.subr.mxu0 0.0
      %678 = vmatpush1.msra.mxu0 0.0
      %679 = vmatprep.subr.mxu0 0.0
      %680 = vmatpush1.msra.mxu0 0.0
      %681 = vmatprep.subr.mxu0 0.0
      %682 = vmatpush1.msra.mxu0 0.0
      %683 = vmatprep.subr.mxu0 0.0
      %684 = vmatpush1.msra.mxu0 0.0
      %685 = vmatprep.subr.mxu0 0.0
      %686 = vmatpush1.msra.mxu0 0.0
      %687 = vmatprep.subr.mxu0 0.0
      %688 = vmatpush1.msra.mxu0 0.0
      %689 = vmatprep.subr.mxu0 0.0
      %690 = vmatpush1.msra.mxu0 0.0
      %691 = vmatprep.subr.mxu0 0.0
      %692 = vmatpush1.msra.mxu0 0.0
      %693 = vmatprep.subr.mxu0 0.0
      %694 = vmatpush1.msra.mxu0 0.0
      %695 = vmatprep.subr.mxu0 0.0
      %696 = vmatpush1.msra.mxu0 0.0
      %697 = vmatprep.subr.mxu0 0.0
      %698 = vmatpush1.msra.mxu0 0.0
      %699 = vmatprep.mubr.f32.mxu0 0.0
      %700 = vmatmul.mubr.f32.gmra.mrb[0].mxu0 %v633
      %v701 = vpop.f32.mrb[0].mxu0
      %v702 = vadd.f32 0.0, %v701
      %v703 = vpop.f32.mrb[0].mxu0
      %704 = vdwg.mxu0
      %v705 = vadd.f32 %v629, %v702
      %v706 = vxor.u32 %v705, 2147483648
      %v707 = vmul.f32 %v706, 1.442695
      %v708 = vpow.pop %v707
      %v709 = vadd.f32 %v708, 1.0
      %v710 = vrcp.pop %v709
      %v711 = vmul.f32 1.0, %v710
      %v712 = vtanh.pop %v705
      %v713 = vmul.f32 %v711, %v619
      %715 = vrot.lane.b32.xlu0 %v712, 64
      %v716 = vpop.permute.xlu0 %715
      %v718 = vmul.f32 %v711, %v716
      %720 = vrot.lane.b32.xlu0 %v718, 32
      %v721 = vpop.permute.xlu0 %720
      %v723 = vadd.f32 %v713, %v721
      %v724 = vtanh.pop %v723
      %726 = vrot.lane.b32.xlu0 %v724, 64
      %v727 = vpop.permute.xlu0 %726
      %v729 = vmul.f32 %v711, %v727
      %v730 = vstv %s626
      %vm731 = vcmp.lt.s32.totalorder %v730, %v230
      %v732 = vsel %vm731, 1, 0
      %v733 = vcvt.s32.f32 %v732
      %735 = vset.pattern.permute.xlu0 0
      %736 = vperm.xlu0 %735, %v733
      %v737 = vpop.permute.xlu0 %736
      %v739 = vmul.f32 %v737, %v729
      %v740 = vsub.f32 1.0, %v733
      %742 = vset.pattern.permute.xlu0 0
      %743 = vperm.xlu0 %742, %v740
      %v744 = vpop.permute.xlu0 %743
      %v746 = vmul.f32 %v744, %v616
      %v747 = vadd.f32 %v739, %v746
      %v748 = vmul.f32 %v737, %v723
      %v749 = vmul.f32 %v744, %v619
      %v750 = vadd.f32 %v748, %v749
      %752 = vrot.lane.b32.xlu0 %v739, 32
      %v753 = vpop.permute.xlu0 %752
      %s755 = scalar_lea.vmem %s224, %s627
      %756 = vst.msk [vmem:[%s755] sm:$0xff] %vm239, %v753
      %s757 = scalar_select %p229, 3, 4
      %s758 = smul.u32 %s757, 8
      %s759 = scalar_lea.vmem %s214, %s758
      %v760 = vld [vmem:[%s759] sm:$0xff]
      %762 = vrot.lane.b32.xlu0 %v747, 32
      %v763 = vpop.permute.xlu0 %762
      %v764 = vsel %vm239, %v763, 0
      %766 = vmatprep.subr.mxu0 0.0
      %767 = vmatpush1.msra.mxu0 %v231
      %768 = vmatprep.subr.mxu0 0.0
      %769 = vmatpush1.msra.mxu0 %v232
      %770 = vmatprep.subr.mxu0 0.0
      %771 = vmatpush1.msra.mxu0 %v233
      %772 = vmatprep.subr.mxu0 0.0
      %773 = vmatpush1.msra.mxu0 %v234
      %774 = vmatprep.subr.mxu0 0.0
      %775 = vmatpush1.msra.mxu0 0.0
      %776 = vmatprep.subr.mxu0 0.0
      %777 = vmatpush1.msra.mxu0 0.0
      %778 = vmatprep.subr.mxu0 0.0
      %779 = vmatpush1.msra.mxu0 0.0
      %780 = vmatprep.subr.mxu0 0.0
      %781 = vmatpush1.msra.mxu0 0.0
      %782 = vmatprep.subr.mxu0 0.0
      %783 = vmatpush1.msra.mxu0 0.0
      %784 = vmatprep.subr.mxu0 0.0
      %785 = vmatpush1.msra.mxu0 0.0
      %786 = vmatprep.subr.mxu0 0.0
      %787 = vmatpush1.msra.mxu0 0.0
      %788 = vmatprep.subr.mxu0 0.0
      %789 = vmatpush1.msra.mxu0 0.0
      %790 = vmatprep.subr.mxu0 0.0
      %791 = vmatpush1.msra.mxu0 0.0
      %792 = vmatprep.subr.mxu0 0.0
      %793 = vmatpush1.msra.mxu0 0.0
      %794 = vmatprep.subr.mxu0 0.0
      %795 = vmatpush1.msra.mxu0 0.0
      %796 = vmatprep.subr.mxu0 0.0
      %797 = vmatpush1.msra.mxu0 0.0
      %798 = vmatprep.subr.mxu0 0.0
      %799 = vmatpush1.msra.mxu0 0.0
      %800 = vmatprep.subr.mxu0 0.0
      %801 = vmatpush1.msra.mxu0 0.0
      %802 = vmatprep.subr.mxu0 0.0
      %803 = vmatpush1.msra.mxu0 0.0
      %804 = vmatprep.subr.mxu0 0.0
      %805 = vmatpush1.msra.mxu0 0.0
      %806 = vmatprep.subr.mxu0 0.0
      %807 = vmatpush1.msra.mxu0 0.0
      %808 = vmatprep.subr.mxu0 0.0
      %809 = vmatpush1.msra.mxu0 0.0
      %810 = vmatprep.subr.mxu0 0.0
      %811 = vmatpush1.msra.mxu0 0.0
      %812 = vmatprep.subr.mxu0 0.0
      %813 = vmatpush1.msra.mxu0 0.0
      %814 = vmatprep.subr.mxu0 0.0
      %815 = vmatpush1.msra.mxu0 0.0
      %816 = vmatprep.subr.mxu0 0.0
      %817 = vmatpush1.msra.mxu0 0.0
      %818 = vmatprep.subr.mxu0 0.0
      %819 = vmatpush1.msra.mxu0 0.0
      %820 = vmatprep.subr.mxu0 0.0
      %821 = vmatpush1.msra.mxu0 0.0
      %822 = vmatprep.subr.mxu0 0.0
      %823 = vmatpush1.msra.mxu0 0.0
      %824 = vmatprep.subr.mxu0 0.0
      %825 = vmatpush1.msra.mxu0 0.0
      %826 = vmatprep.subr.mxu0 0.0
      %827 = vmatpush1.msra.mxu0 0.0
      %828 = vmatprep.subr.mxu0 0.0
      %829 = vmatpush1.msra.mxu0 0.0
      %830 = vmatprep.mubr.f32.mxu0 0.0
      %831 = vmatmul.mubr.f32.gmra.mrb[0].mxu0 %v764
      %v832 = vpop.f32.mrb[0].mxu0
      %v833 = vadd.f32 0.0, %v832
      %v834 = vpop.f32.mrb[0].mxu0
      %835 = vdwg.mxu0
      %v836 = vadd.f32 %v760, %v833
      %v837 = vxor.u32 %v836, 2147483648
      %v838 = vmul.f32 %v837, 1.442695
      %v839 = vpow.pop %v838
      %v840 = vadd.f32 %v839, 1.0
      %v841 = vrcp.pop %v840
      %v842 = vmul.f32 1.0, %v841
      %v843 = vtanh.pop %v836
      %v844 = vmul.f32 %v842, %v750
      %846 = vrot.lane.b32.xlu0 %v843, 64
      %v847 = vpop.permute.xlu0 %846
      %v849 = vmul.f32 %v842, %v847
      %851 = vrot.lane.b32.xlu0 %v849, 32
      %v852 = vpop.permute.xlu0 %851
      %v854 = vadd.f32 %v844, %v852
      %v855 = vtanh.pop %v854
      %857 = vrot.lane.b32.xlu0 %v855, 64
      %v858 = vpop.permute.xlu0 %857
      %v860 = vmul.f32 %v842, %v858
      %v861 = vstv %s757
      %vm862 = vcmp.lt.s32.totalorder %v861, %v230
      %v863 = vsel %vm862, 1, 0
      %v864 = vcvt.s32.f32 %v863
      %866 = vset.pattern.permute.xlu0 0
      %867 = vperm.xlu0 %866, %v864
      %v868 = vpop.permute.xlu0 %867
      %v870 = vmul.f32 %v868, %v860
      %v871 = vsub.f32 1.0, %v864
      %873 = vset.pattern.permute.xlu0 0
      %874 = vperm.xlu0 %873, %v871
      %v875 = vpop.permute.xlu0 %874
      %v877 = vmul.f32 %v875, %v747
      %v878 = vadd.f32 %v870, %v877
      %v879 = vmul.f32 %v868, %v854
      %v880 = vmul.f32 %v875, %v750
      %v881 = vadd.f32 %v879, %v880
      %883 = vrot.lane.b32.xlu0 %v870, 32
      %v884 = vpop.permute.xlu0 %883
      %s886 = scalar_lea.vmem %s224, %s758
      %887 = vst.msk [vmem:[%s886] sm:$0xff] %vm239, %v884
      %s888 = scalar_select %p229, 2, 5
      %s889 = smul.u32 %s888, 8
      %s890 = scalar_lea.vmem %s214, %s889
      %v891 = vld [vmem:[%s890] sm:$0xff]
      %893 = vrot.lane.b32.xlu0 %v878, 32
      %v894 = vpop.permute.xlu0 %893
      %v895 = vsel %vm239, %v894, 0
      %897 = vmatprep.subr.mxu0 0.0
      %898 = vmatpush1.msra.mxu0 %v231
      %899 = vmatprep.subr.mxu0 0.0
      %900 = vmatpush1.msra.mxu0 %v232
      %901 = vmatprep.subr.mxu0 0.0
      %902 = vmatpush1.msra.mxu0 %v233
      %903 = vmatprep.subr.mxu0 0.0
      %904 = vmatpush1.msra.mxu0 %v234
      %905 = vmatprep.subr.mxu0 0.0
      %906 = vmatpush1.msra.mxu0 0.0
      %907 = vmatprep.subr.mxu0 0.0
      %908 = vmatpush1.msra.mxu0 0.0
      %909 = vmatprep.subr.mxu0 0.0
      %910 = vmatpush1.msra.mxu0 0.0
      %911 = vmatprep.subr.mxu0 0.0
      %912 = vmatpush1.msra.mxu0 0.0
      %913 = vmatprep.subr.mxu0 0.0
      %914 = vmatpush1.msra.mxu0 0.0
      %915 = vmatprep.subr.mxu0 0.0
      %916 = vmatpush1.msra.mxu0 0.0
      %917 = vmatprep.subr.mxu0 0.0
      %918 = vmatpush1.msra.mxu0 0.0
      %919 = vmatprep.subr.mxu0 0.0
      %920 = vmatpush1.msra.mxu0 0.0
      %921 = vmatprep.subr.mxu0 0.0
      %922 = vmatpush1.msra.mxu0 0.0
      %923 = vmatprep.subr.mxu0 0.0
      %924 = vmatpush1.msra.mxu0 0.0
      %925 = vmatprep.subr.mxu0 0.0
      %926 = vmatpush1.msra.mxu0 0.0
      %927 = vmatprep.subr.mxu0 0.0
      %928 = vmatpush1.msra.mxu0 0.0
      %929 = vmatprep.subr.mxu0 0.0
      %930 = vmatpush1.msra.mxu0 0.0
      %931 = vmatprep.subr.mxu0 0.0
      %932 = vmatpush1.msra.mxu0 0.0
      %933 = vmatprep.subr.mxu0 0.0
      %934 = vmatpush1.msra.mxu0 0.0
      %935 = vmatprep.subr.mxu0 0.0
      %936 = vmatpush1.msra.mxu0 0.0
      %937 = vmatprep.subr.mxu0 0.0
      %938 = vmatpush1.msra.mxu0 0.0
      %939 = vmatprep.subr.mxu0 0.0
      %940 = vmatpush1.msra.mxu0 0.0
      %941 = vmatprep.subr.mxu0 0.0
      %942 = vmatpush1.msra.mxu0 0.0
      %943 = vmatprep.subr.mxu0 0.0
      %944 = vmatpush1.msra.mxu0 0.0
      %945 = vmatprep.subr.mxu0 0.0
      %946 = vmatpush1.msra.mxu0 0.0
      %947 = vmatprep.subr.mxu0 0.0
      %948 = vmatpush1.msra.mxu0 0.0
      %949 = vmatprep.subr.mxu0 0.0
      %950 = vmatpush1.msra.mxu0 0.0
      %951 = vmatprep.subr.mxu0 0.0
      %952 = vmatpush1.msra.mxu0 0.0
      %953 = vmatprep.subr.mxu0 0.0
      %954 = vmatpush1.msra.mxu0 0.0
      %955 = vmatprep.subr.mxu0 0.0
      %956 = vmatpush1.msra.mxu0 0.0
      %957 = vmatprep.subr.mxu0 0.0
      %958 = vmatpush1.msra.mxu0 0.0
      %959 = vmatprep.subr.mxu0 0.0
      %960 = vmatpush1.msra.mxu0 0.0
      %961 = vmatprep.mubr.f32.mxu0 0.0
      %962 = vmatmul.mubr.f32.gmra.mrb[0].mxu0 %v895
      %v963 = vpop.f32.mrb[0].mxu0
      %v964 = vadd.f32 0.0, %v963
      %v965 = vpop.f32.mrb[0].mxu0
      %966 = vdwg.mxu0
      %v967 = vadd.f32 %v891, %v964
      %v968 = vxor.u32 %v967, 2147483648
      %v969 = vmul.f32 %v968, 1.442695
      %v970 = vpow.pop %v969
      %v971 = vadd.f32 %v970, 1.0
      %v972 = vrcp.pop %v971
      %v973 = vmul.f32 1.0, %v972
      %v974 = vtanh.pop %v967
      %v975 = vmul.f32 %v973, %v881
      %977 = vrot.lane.b32.xlu0 %v974, 64
      %v978 = vpop.permute.xlu0 %977
      %v980 = vmul.f32 %v973, %v978
      %982 = vrot.lane.b32.xlu0 %v980, 32
      %v983 = vpop.permute.xlu0 %982
      %v985 = vadd.f32 %v975, %v983
      %v986 = vtanh.pop %v985
      %988 = vrot.lane.b32.xlu0 %v986, 64
      %v989 = vpop.permute.xlu0 %988
      %v991 = vmul.f32 %v973, %v989
      %v992 = vstv %s888
      %vm993 = vcmp.lt.s32.totalorder %v992, %v230
      %v994 = vsel %vm993, 1, 0
      %v995 = vcvt.s32.f32 %v994
      %997 = vset.pattern.permute.xlu0 0
      %998 = vperm.xlu0 %997, %v995
      %v999 = vpop.permute.xlu0 %998
      %v1001 = vmul.f32 %v999, %v991
      %v1002 = vsub.f32 1.0, %v995
      %1004 = vset.pattern.permute.xlu0 0
      %1005 = vperm.xlu0 %1004, %v1002
      %v1006 = vpop.permute.xlu0 %1005
      %v1008 = vmul.f32 %v1006, %v878
      %v1009 = vadd.f32 %v1001, %v1008
      %v1010 = vmul.f32 %v999, %v985
      %v1011 = vmul.f32 %v1006, %v881
      %v1012 = vadd.f32 %v1010, %v1011
      %1014 = vrot.lane.b32.xlu0 %v1001, 32
      %v1015 = vpop.permute.xlu0 %1014
      %s1017 = scalar_lea.vmem %s224, %s889
      %1018 = vst.msk [vmem:[%s1017] sm:$0xff] %vm239, %v1015
      %s1019 = scalar_select %p229, 1, 6
      %s1020 = smul.u32 %s1019, 8
      %s1021 = scalar_lea.vmem %s214, %s1020
      %v1022 = vld [vmem:[%s1021] sm:$0xff]
      %1024 = vrot.lane.b32.xlu0 %v1009, 32
      %v1025 = vpop.permute.xlu0 %1024
      %v1026 = vsel %vm239, %v1025, 0
      %1028 = vmatprep.subr.mxu0 0.0
      %1029 = vmatpush1.msra.mxu0 %v231
      %1030 = vmatprep.subr.mxu0 0.0
      %1031 = vmatpush1.msra.mxu0 %v232
      %1032 = vmatprep.subr.mxu0 0.0
      %1033 = vmatpush1.msra.mxu0 %v233
      %1034 = vmatprep.subr.mxu0 0.0
      %1035 = vmatpush1.msra.mxu0 %v234
      %1036 = vmatprep.subr.mxu0 0.0
      %1037 = vmatpush1.msra.mxu0 0.0
      %1038 = vmatprep.subr.mxu0 0.0
      %1039 = vmatpush1.msra.mxu0 0.0
      %1040 = vmatprep.subr.mxu0 0.0
      %1041 = vmatpush1.msra.mxu0 0.0
      %1042 = vmatprep.subr.mxu0 0.0
      %1043 = vmatpush1.msra.mxu0 0.0
      %1044 = vmatprep.subr.mxu0 0.0
      %1045 = vmatpush1.msra.mxu0 0.0
      %1046 = vmatprep.subr.mxu0 0.0
      %1047 = vmatpush1.msra.mxu0 0.0
      %1048 = vmatprep.subr.mxu0 0.0
      %1049 = vmatpush1.msra.mxu0 0.0
      %1050 = vmatprep.subr.mxu0 0.0
      %1051 = vmatpush1.msra.mxu0 0.0
      %1052 = vmatprep.subr.mxu0 0.0
      %1053 = vmatpush1.msra.mxu0 0.0
      %1054 = vmatprep.subr.mxu0 0.0
      %1055 = vmatpush1.msra.mxu0 0.0
      %1056 = vmatprep.subr.mxu0 0.0
      %1057 = vmatpush1.msra.mxu0 0.0
      %1058 = vmatprep.subr.mxu0 0.0
      %1059 = vmatpush1.msra.mxu0 0.0
      %1060 = vmatprep.subr.mxu0 0.0
      %1061 = vmatpush1.msra.mxu0 0.0
      %1062 = vmatprep.subr.mxu0 0.0
      %1063 = vmatpush1.msra.mxu0 0.0
      %1064 = vmatprep.subr.mxu0 0.0
      %1065 = vmatpush1.msra.mxu0 0.0
      %1066 = vmatprep.subr.mxu0 0.0
      %1067 = vmatpush1.msra.mxu0 0.0
      %1068 = vmatprep.subr.mxu0 0.0
      %1069 = vmatpush1.msra.mxu0 0.0
      %1070 = vmatprep.subr.mxu0 0.0
      %1071 = vmatpush1.msra.mxu0 0.0
      %1072 = vmatprep.subr.mxu0 0.0
      %1073 = vmatpush1.msra.mxu0 0.0
      %1074 = vmatprep.subr.mxu0 0.0
      %1075 = vmatpush1.msra.mxu0 0.0
      %1076 = vmatprep.subr.mxu0 0.0
      %1077 = vmatpush1.msra.mxu0 0.0
      %1078 = vmatprep.subr.mxu0 0.0
      %1079 = vmatpush1.msra.mxu0 0.0
      %1080 = vmatprep.subr.mxu0 0.0
      %1081 = vmatpush1.msra.mxu0 0.0
      %1082 = vmatprep.subr.mxu0 0.0
      %1083 = vmatpush1.msra.mxu0 0.0
      %1084 = vmatprep.subr.mxu0 0.0
      %1085 = vmatpush1.msra.mxu0 0.0
      %1086 = vmatprep.subr.mxu0 0.0
      %1087 = vmatpush1.msra.mxu0 0.0
      %1088 = vmatprep.subr.mxu0 0.0
      %1089 = vmatpush1.msra.mxu0 0.0
      %1090 = vmatprep.subr.mxu0 0.0
      %1091 = vmatpush1.msra.mxu0 0.0
      %1092 = vmatprep.mubr.f32.mxu0 0.0
      %1093 = vmatmul.mubr.f32.gmra.mrb[0].mxu0 %v1026
      %v1094 = vpop.f32.mrb[0].mxu0
      %v1095 = vadd.f32 0.0, %v1094
      %v1096 = vpop.f32.mrb[0].mxu0
      %1097 = vdwg.mxu0
      %v1098 = vadd.f32 %v1022, %v1095
      %v1099 = vxor.u32 %v1098, 2147483648
      %v1100 = vmul.f32 %v1099, 1.442695
      %v1101 = vpow.pop %v1100
      %v1102 = vadd.f32 %v1101, 1.0
      %v1103 = vrcp.pop %v1102
      %v1104 = vmul.f32 1.0, %v1103
      %v1105 = vtanh.pop %v1098
      %v1106 = vmul.f32 %v1104, %v1012
      %1108 = vrot.lane.b32.xlu0 %v1105, 64
      %v1109 = vpop.permute.xlu0 %1108
      %v1111 = vmul.f32 %v1104, %v1109
      %1113 = vrot.lane.b32.xlu0 %v1111, 32
      %v1114 = vpop.permute.xlu0 %1113
      %v1116 = vadd.f32 %v1106, %v1114
      %v1117 = vtanh.pop %v1116
      %1119 = vrot.lane.b32.xlu0 %v1117, 64
      %v1120 = vpop.permute.xlu0 %1119
      %v1122 = vmul.f32 %v1104, %v1120
      %v1123 = vstv %s1019
      %vm1124 = vcmp.lt.s32.totalorder %v1123, %v230
      %v1125 = vsel %vm1124, 1, 0
      %v1126 = vcvt.s32.f32 %v1125
      %1128 = vset.pattern.permute.xlu0 0
      %1129 = vperm.xlu0 %1128, %v1126
      %v1130 = vpop.permute.xlu0 %1129
      %v1132 = vmul.f32 %v1130, %v1122
      %v1133 = vsub.f32 1.0, %v1126
      %1135 = vset.pattern.permute.xlu0 0
      %1136 = vperm.xlu0 %1135, %v1133
      %v1137 = vpop.permute.xlu0 %1136
      %v1139 = vmul.f32 %v1137, %v1009
      %v1140 = vadd.f32 %v1132, %v1139
      %v1141 = vmul.f32 %v1130, %v1116
      %v1142 = vmul.f32 %v1137, %v1012
      %v1143 = vadd.f32 %v1141, %v1142
      %1145 = vrot.lane.b32.xlu0 %v1132, 32
      %v1146 = vpop.permute.xlu0 %1145
      %s1148 = scalar_lea.vmem %s224, %s1020
      %1149 = vst.msk [vmem:[%s1148] sm:$0xff] %vm239, %v1146
      %s1150 = scalar_select %p229, 0, 7
      %s1151 = smul.u32 %s1150, 8
      %s1152 = scalar_lea.vmem %s214, %s1151
      %v1153 = vld [vmem:[%s1152] sm:$0xff]
      %1155 = vrot.lane.b32.xlu0 %v1140, 32
      %v1156 = vpop.permute.xlu0 %1155
      %v1157 = vsel %vm239, %v1156, 0
      %1159 = vmatprep.subr.mxu0 0.0
      %1160 = vmatpush1.msra.mxu0 %v231
      %1161 = vmatprep.subr.mxu0 0.0
      %1162 = vmatpush1.msra.mxu0 %v232
      %1163 = vmatprep.subr.mxu0 0.0
      %1164 = vmatpush1.msra.mxu0 %v233
      %1165 = vmatprep.subr.mxu0 0.0
      %1166 = vmatpush1.msra.mxu0 %v234
      %1167 = vmatprep.subr.mxu0 0.0
      %1168 = vmatpush1.msra.mxu0 0.0
      %1169 = vmatprep.subr.mxu0 0.0
      %1170 = vmatpush1.msra.mxu0 0.0
      %1171 = vmatprep.subr.mxu0 0.0
      %1172 = vmatpush1.msra.mxu0 0.0
      %1173 = vmatprep.subr.mxu0 0.0
      %1174 = vmatpush1.msra.mxu0 0.0
      %1175 = vmatprep.subr.mxu0 0.0
      %1176 = vmatpush1.msra.mxu0 0.0
      %1177 = vmatprep.subr.mxu0 0.0
      %1178 = vmatpush1.msra.mxu0 0.0
      %1179 = vmatprep.subr.mxu0 0.0
      %1180 = vmatpush1.msra.mxu0 0.0
      %1181 = vmatprep.subr.mxu0 0.0
      %1182 = vmatpush1.msra.mxu0 0.0
      %1183 = vmatprep.subr.mxu0 0.0
      %1184 = vmatpush1.msra.mxu0 0.0
      %1185 = vmatprep.subr.mxu0 0.0
      %1186 = vmatpush1.msra.mxu0 0.0
      %1187 = vmatprep.subr.mxu0 0.0
      %1188 = vmatpush1.msra.mxu0 0.0
      %1189 = vmatprep.subr.mxu0 0.0
      %1190 = vmatpush1.msra.mxu0 0.0
      %1191 = vmatprep.subr.mxu0 0.0
      %1192 = vmatpush1.msra.mxu0 0.0
      %1193 = vmatprep.subr.mxu0 0.0
      %1194 = vmatpush1.msra.mxu0 0.0
      %1195 = vmatprep.subr.mxu0 0.0
      %1196 = vmatpush1.msra.mxu0 0.0
      %1197 = vmatprep.subr.mxu0 0.0
      %1198 = vmatpush1.msra.mxu0 0.0
      %1199 = vmatprep.subr.mxu0 0.0
      %1200 = vmatpush1.msra.mxu0 0.0
      %1201 = vmatprep.subr.mxu0 0.0
      %1202 = vmatpush1.msra.mxu0 0.0
      %1203 = vmatprep.subr.mxu0 0.0
      %1204 = vmatpush1.msra.mxu0 0.0
      %1205 = vmatprep.subr.mxu0 0.0
      %1206 = vmatpush1.msra.mxu0 0.0
      %1207 = vmatprep.subr.mxu0 0.0
      %1208 = vmatpush1.msra.mxu0 0.0
      %1209 = vmatprep.subr.mxu0 0.0
      %1210 = vmatpush1.msra.mxu0 0.0
      %1211 = vmatprep.subr.mxu0 0.0
      %1212 = vmatpush1.msra.mxu0 0.0
      %1213 = vmatprep.subr.mxu0 0.0
      %1214 = vmatpush1.msra.mxu0 0.0
      %1215 = vmatprep.subr.mxu0 0.0
      %1216 = vmatpush1.msra.mxu0 0.0
      %1217 = vmatprep.subr.mxu0 0.0
      %1218 = vmatpush1.msra.mxu0 0.0
      %1219 = vmatprep.subr.mxu0 0.0
      %1220 = vmatpush1.msra.mxu0 0.0
      %1221 = vmatprep.subr.mxu0 0.0
      %1222 = vmatpush1.msra.mxu0 0.0
      %1223 = vmatprep.mubr.f32.mxu0 0.0
      %1224 = vmatmul.mubr.f32.gmra.mrb[0].mxu0 %v1157
      %v1225 = vpop.f32.mrb[0].mxu0
      %v1226 = vadd.f32 0.0, %v1225
      %v1227 = vpop.f32.mrb[0].mxu0
      %1228 = vdwg.mxu0
      %v1229 = vadd.f32 %v1153, %v1226
      %v1230 = vxor.u32 %v1229, 2147483648
      %v1231 = vmul.f32 %v1230, 1.442695
      %v1232 = vpow.pop %v1231
      %v1233 = vadd.f32 %v1232, 1.0
      %v1234 = vrcp.pop %v1233
      %v1235 = vmul.f32 1.0, %v1234
      %v1236 = vtanh.pop %v1229
      %v1237 = vmul.f32 %v1235, %v1143
      %1239 = vrot.lane.b32.xlu0 %v1236, 64
      %v1240 = vpop.permute.xlu0 %1239
      %v1242 = vmul.f32 %v1235, %v1240
      %1244 = vrot.lane.b32.xlu0 %v1242, 32
      %v1245 = vpop.permute.xlu0 %1244
      %v1247 = vadd.f32 %v1237, %v1245
      %v1248 = vtanh.pop %v1247
      %1250 = vrot.lane.b32.xlu0 %v1248, 64
      %v1251 = vpop.permute.xlu0 %1250
      %v1253 = vmul.f32 %v1235, %v1251
      %v1254 = vstv %s1150
      %vm1255 = vcmp.lt.s32.totalorder %v1254, %v230
      %v1256 = vsel %vm1255, 1, 0
      %v1257 = vcvt.s32.f32 %v1256
      %1259 = vset.pattern.permute.xlu0 0
      %1260 = vperm.xlu0 %1259, %v1257
      %v1261 = vpop.permute.xlu0 %1260
      %v1263 = vmul.f32 %v1261, %v1253
      %v1264 = vsub.f32 1.0, %v1257
      %1266 = vset.pattern.permute.xlu0 0
      %1267 = vperm.xlu0 %1266, %v1264
      %v1268 = vpop.permute.xlu0 %1267
      %v1270 = vmul.f32 %v1268, %v1140
      %v1271 = vadd.f32 %v1263, %v1270
      %1273 = vrot.lane.b32.xlu0 %v1263, 32
      %v1274 = vpop.permute.xlu0 %1273
      %s1276 = scalar_lea.vmem %s224, %s1151
      %1277 = vst.msk [vmem:[%s1276] sm:$0xff] %vm239, %v1274
      %1279 = vrot.lane.b32.xlu0 %v1271, 32
      %v1280 = vpop.permute.xlu0 %1279
      %1282 = vst.msk [vmem:[%s228] sm:$0xff] %vm239, %v1280
      %p1283 = scmp.lt.s32.totalorder %s16, 1
      %s1284 = scalar_select %p1283, %s16, 1
      %s1285 = smul.addr %s1284, 8
      %s1286 = smul.addr %s1285, 8
      %s1287 = scalar_lea.vmem %s3, %s1286
      %p1288 = scmp.lt.s32.totalorder %s16, 1
      %s1289 = scalar_select %p1288, %s16, 1
      %s1290 = smul.addr %s1289, 8
      %s1291 = scalar_lea.vmem %s4, %s1290
      // Predicated region
      $region33: #{lstm_forward.2} parent=31 // pred_check
        %p1292 = pneg %p107
      $region34: #{lstm_forward.2} parent=31 // pred_check_branch
        %1294 = sbr.rel (%p1292) target = $region36
      $region35: #{lstm_forward.2} parent=31 // pred_region
        _
      $region36: #{lstm_forward.2} parent=31 // pred_fallthru
        _
      // Predicated region
      $region37: #{lstm_forward.2} parent=31 // pred_check
        %p1295 = pneg %p133
      $region38: #{lstm_forward.2} parent=31 // pred_check_branch
        %1297 = sbr.rel (%p1295) target = $region40
      $region39: #{lstm_forward.2} parent=31 // pred_region
        _
      $region40: #{lstm_forward.2} parent=31 // pred_fallthru
        _
    $region32: #{lstm_forward.2} parent=5 // pred_fallthru
      _
    %p1298 = scmp.le.s32.totalorder 2, %s11
    // Predicated region
    $region41: #{lstm_forward.2} parent=5 // pred_check
      %p1299 = pneg %p1298
    $region42: #{lstm_forward.2} parent=5 // pred_check_branch
      %1301 = sbr.rel (%p1299) target = $region44
    $region43: #{lstm_forward.2} parent=5 // pred_region
      %s1302 = ssub.s32 %s11, 2
      // Predicated region
      $region45: #{lstm_forward.2} parent=43 // pred_check
        %p1303 = pneg %p113
      $region46: #{lstm_forward.2} parent=43 // pred_check_branch
        %1305 = sbr.rel (%p1303) target = $region48
      $region47: #{lstm_forward.2} parent=43 // pred_region
        %p1306 = scmp.lt.s32.totalorder %s17, 1
        %s1307 = scalar_select %p1306, %s17, 1
        %s1308 = smul.addr %s1307, 8
        %s1309 = smul.addr %s1308, 8
        %s1310 = scalar_lea.vmem %s3, %s1309
      $region48: #{lstm_forward.2} parent=43 // pred_fallthru
        _
      // Predicated region
      $region49: #{lstm_forward.2} parent=43 // pred_check
        %p1311 = pneg %p139
      $region50: #{lstm_forward.2} parent=43 // pred_check_branch
        %1313 = sbr.rel (%p1311) target = $region52
      $region51: #{lstm_forward.2} parent=43 // pred_region
        %p1314 = scmp.lt.s32.totalorder %s17, 1
        %s1315 = scalar_select %p1314, %s17, 1
        %s1316 = smul.addr %s1315, 8
        %s1317 = scalar_lea.vmem %s4, %s1316
      $region52: #{lstm_forward.2} parent=43 // pred_fallthru
        _
    $region44: #{lstm_forward.2} parent=5 // pred_fallthru
      _
  $region6: #{lstm_forward.2} parent=0 // loop_footer
    %s15 = sadd.s32 1, %s11
  $region7: #{lstm_forward.2} parent=0 // loop_footer_branch
    %10 = sbr.rel target = $region3
  $region8: #{lstm_forward.2} parent=0 // loop_exit
    _

// kernel: lstm_forward.3
$region0: #{lstm_forward.3}
  #allocation0 [shape = 'u32[]', space=smem, size = 0x4, offset = 0x4, fixed_abs, tag = 'smem constant byte address 0x4 - core index']
  #allocation1 [shape = 'u32[144,128]{1,0:T(1,128)}', space=vmem, size = 0x12000, scoped, tag = 'internal scratch']
  %s0 = inlined_call_operand.vmem [shape: s32[8,1], index: 0, kind: input, shape index: {}]
  %s1 = inlined_call_operand.vmem [shape: f32[2,8,8,128], index: 1, kind: input, shape index: {}]
  %s2 = inlined_call_operand.vmem [shape: f32[2,32,128], index: 2, kind: input, shape index: {}]
  %s3 = inlined_call_operand.hbm [shape: f32[2,8,8,32], index: 3, kind: output, shape index: {0}]
  %s4 = inlined_call_operand.vmem [shape: f32[2,8,32], index: 4, kind: output, shape index: {1}]
  %5 = xla_tuple %s3, %s4
  %s6 = sld [smem:[#allocation0]]
  $region53: #{lstm_forward.3} parent=0
    _
  %s8 = ssub.s32 1, %s6
  %s9 = scalar_select 0, %s8, %s6
  $region1: #{lstm_forward.3} parent=0
    #allocation2 [shape = 'u8[65536]{0}', space=vmem, size = 0x10000, scoped, tag = 'output window, operand 0']
    #allocation3 [shape = 's32[2]{0}', space=sflag, size = 0x8, scoped, tag = 'scoped memory for lstm_forward.3']
    %10 = vsyncpa [#allocation3], 0
    %s11 = scalar_lea.sflag [#allocation3], 1
    %12 = vsyncpa %s11, 0
    loop: start=0, step=1, limit=4
    $region2: #{lstm_forward.3} parent=1 // loop_pre_header
      _
    $region3: #{lstm_forward.3} parent=1 // loop_header
      %s14 = sphi 0, %s18
      %p15 = scmp.ge.s32.totalorder %s14, 4
      %s22 = sphi 0, %s22
      %s24 = sphi 0, %s22
      %s25 = sphi 0, %s24
      %s39 = sphi 0, %s25
      %s45 = sphi 0, %s47
      %s48 = sphi 0, %s45
      %s49 = sphi 0, %s48
      %s65 = sphi 0, %s49
      %s71 = sphi 0, %s73
      %s74 = sphi 0, %s71
      %s75 = sphi 0, %s74
      %s91 = sphi 0, %s75
      %s97 = sphi 0, %s99
      %s100 = sphi 0, %s97
      %s101 = sphi 0, %s100
      %s117 = sphi 0, %s101
      %s123 = sphi 0, %s125
      %s126 = sphi 0, %s123
      %s127 = sphi 0, %s126
      %s143 = sphi 0, %s127
    $region4: #{lstm_forward.3} parent=1 // loop_header_branch
      %17 = sbr.rel (%p15) target = $region8
    $region5: #{lstm_forward.3} parent=1 // loop_body
      %s19 = ssub.s32 %s14, 1
      %s20 = ssub.s32 %s14, 2
      %s21 = sadd.s32 %s14, 1
      %s23 = sadd.s32 %s22, 1
      %p26 = scmp.eq.s32.totalorder %s14, 1
      %p27 = scmp.ne.s32.totalorder %s22, %s24
      %p28 = scmp.eq.s32.totalorder %s14, 0
      %p29 = por %p27, %p28
      %p30 = scmp.ne.s32.totalorder %s22, %s24
      %p31 = scmp.eq.s32.totalorder %s19, 1
      %p32 = por %p30, %p31
      %p33 = scmp.ne.s32.totalorder %s24, %s25
      %p34 = scmp.eq.s32.totalorder %s19, 0
      %p35 = por %p33, %p34
      %p36 = scmp.ne.s32.totalorder %s24, %s25
      %p37 = scmp.eq.s32.totalorder %s20, 1
      %p38 = por %p36, %p37
      %p40 = scmp.ne.s32.totalorder %s25, %s39
      %p41 = scmp.eq.s32.totalorder %s20, 0
      %p42 = por %p40, %p41
      %s43 = ssub.s32 %s14, %s21
      %p44 = scmp.eq.s32.totalorder %s43, 0
      %s46 = sadd.s32 %s45, 1
      %s47 = scalar_select %p44, %s45, %s46
      %p50 = pneg %p44
      %p51 = scmp.eq.s32.totalorder %s14, 1
      %p52 = por %p50, %p51
      %p53 = scmp.ne.s32.totalorder %s45, %s48
      %p54 = scmp.eq.s32.totalorder %s14, 0
      %p55 = por %p53, %p54
      %p56 = scmp.ne.s32.totalorder %s45, %s48
      %p57 = scmp.eq.s32.totalorder %s19, 1
      %p58 = por %p56, %p57
      %p59 = scmp.ne.s32.totalorder %s48, %s49
      %p60 = scmp.eq.s32.totalorder %s19, 0
      %p61 = por %p59, %p60
      %p62 = scmp.ne.s32.totalorder %s48, %s49
      %p63 = scmp.eq.s32.totalorder %s20, 1
      %p64 = por %p62, %p63
      %p66 = scmp.ne.s32.totalorder %s49, %s65
      %p67 = scmp.eq.s32.totalorder %s20, 0
      %p68 = por %p66, %p67
      %s69 = ssub.s32 %s14, %s21
      %p70 = scmp.eq.s32.totalorder %s69, 0
      %s72 = sadd.s32 %s71, 1
      %s73 = scalar_select %p70, %s71, %s72
      %p76 = pneg %p70
      %p77 = scmp.eq.s32.totalorder %s14, 1
      %p78 = por %p76, %p77
      %p79 = scmp.ne.s32.totalorder %s71, %s74
      %p80 = scmp.eq.s32.totalorder %s14, 0
      %p81 = por %p79, %p80
      %p82 = scmp.ne.s32.totalorder %s71, %s74
      %p83 = scmp.eq.s32.totalorder %s19, 1
      %p84 = por %p82, %p83
      %p85 = scmp.ne.s32.totalorder %s74, %s75
      %p86 = scmp.eq.s32.totalorder %s19, 0
      %p87 = por %p85, %p86
      %p88 = scmp.ne.s32.totalorder %s74, %s75
      %p89 = scmp.eq.s32.totalorder %s20, 1
      %p90 = por %p88, %p89
      %p92 = scmp.ne.s32.totalorder %s75, %s91
      %p93 = scmp.eq.s32.totalorder %s20, 0
      %p94 = por %p92, %p93
      %s95 = ssub.s32 %s14, %s21
      %p96 = scmp.eq.s32.totalorder %s95, 0
      %s98 = sadd.s32 %s97, 1
      %s99 = scalar_select %p96, %s97, %s98
      %p102 = pneg %p96
      %p103 = scmp.eq.s32.totalorder %s14, 1
      %p104 = por %p102, %p103
      %p105 = scmp.ne.s32.totalorder %s97, %s100
      %p106 = scmp.eq.s32.totalorder %s14, 0
      %p107 = por %p105, %p106
      %p108 = scmp.ne.s32.totalorder %s97, %s100
      %p109 = scmp.eq.s32.totalorder %s19, 1
      %p110 = por %p108, %p109
      %p111 = scmp.ne.s32.totalorder %s100, %s101
      %p112 = scmp.eq.s32.totalorder %s19, 0
      %p113 = por %p111, %p112
      %p114 = scmp.ne.s32.totalorder %s100, %s101
      %p115 = scmp.eq.s32.totalorder %s20, 1
      %p116 = por %p114, %p115
      %p118 = scmp.ne.s32.totalorder %s101, %s117
      %p119 = scmp.eq.s32.totalorder %s20, 0
      %p120 = por %p118, %p119
      %s121 = ssub.s32 %s14, %s21
      %p122 = scmp.eq.s32.totalorder %s121, 0
      %s124 = sadd.s32 %s123, 1
      %s125 = scalar_select %p122, %s123, %s124
      %p128 = pneg %p122
      %p129 = scmp.eq.s32.totalorder %s14, 1
      %p130 = por %p128, %p129
      %p131 = scmp.ne.s32.totalorder %s123, %s126
      %p132 = scmp.eq.s32.totalorder %s14, 0
      %p133 = por %p131, %p132
      %p134 = scmp.ne.s32.totalorder %s123, %s126
      %p135 = scmp.eq.s32.totalorder %s19, 1
      %p136 = por %p134, %p135
      %p137 = scmp.ne.s32.totalorder %s126, %s127
      %p138 = scmp.eq.s32.totalorder %s19, 0
      %p139 = por %p137, %p138
      %p140 = scmp.ne.s32.totalorder %s126, %s127
      %p141 = scmp.eq.s32.totalorder %s20, 1
      %p142 = por %p140, %p141
      %p144 = scmp.ne.s32.totalorder %s127, %s143
      %p145 = scmp.eq.s32.totalorder %s20, 0
      %p146 = por %p144, %p145
      %p147 = scmp.le.s32.totalorder 1, %s14
      %p148 = scmp.lt.s32.totalorder %s14, 3
      %p149 = pnand %p147, %p148
      %p150 = pneg %p149
      // Predicated region
      $region9: #{lstm_forward.3} parent=5 // pred_check
        _
      $region10: #{lstm_forward.3} parent=5 // pred_check_branch
        %152 = sbr.rel (%p149) target = $region12
      $region11: #{lstm_forward.3} parent=5 // pred_region
        %s153 = ssub.s32 %s14, 1
        // Predicated region
        $region13: #{lstm_forward.3} parent=11 // pred_check
          %p154 = pneg %p35
        $region14: #{lstm_forward.3} parent=11 // pred_check_branch
          %156 = sbr.rel (%p154) target = $region16
        $region15: #{lstm_forward.3} parent=11 // pred_region
          _
        $region16: #{lstm_forward.3} parent=11 // pred_fallthru
          _
      $region12: #{lstm_forward.3} parent=5 // pred_fallthru
        _
      %p157 = scmp.lt.s32.totalorder %s14, 2
      // Predicated region
      $region17: #{lstm_forward.3} parent=5 // pred_check
        %p158 = pneg %p157
      $region18: #{lstm_forward.3} parent=5 // pred_check_branch
        %160 = sbr.rel (%p158) target = $region20
      $region19: #{lstm_forward.3} parent=5 // pred_region
        // Predicated region
        $region21: #{lstm_forward.3} parent=19 // pred_check
          %p161 = pneg %p55
        $region22: #{lstm_forward.3} parent=19 // pred_check_branch
          %163 = sbr.rel (%p161) target = $region24
        $region23: #{lstm_forward.3} parent=19 // pred_region
          %p164 = scmp.lt.s32.totalorder %s14, 1
          %s165 = scalar_select %p164, %s14, 1
          %s166 = smul.addr %s165, 8
          %s167 = smul.addr %s166, 8
          %s168 = scalar_lea.vmem %s1, %s167
        $region24: #{lstm_forward.3} parent=19 // pred_fallthru
          _
        // Predicated region
        $region25: #{lstm_forward.3} parent=19 // pred_check
          %p169 = pneg %p81
        $region26: #{lstm_forward.3} parent=19 // pred_check_branch
          %171 = sbr.rel (%p169) target = $region28
        $region27: #{lstm_forward.3} parent=19 // pred_region
          %p172 = scmp.lt.s32.totalorder %s14, 1
          %s173 = scalar_select %p172, %s14, 1
          %s174 = smul.addr %s173, 4
          %s175 = smul.addr %s174, 8
          %s176 = scalar_lea.vmem %s2, %s175
        $region28: #{lstm_forward.3} parent=19 // pred_fallthru
          _
      $region20: #{lstm_forward.3} parent=5 // pred_fallthru
        _
      %p177 = scmp.le.s32.totalorder 1, %s14
      %p178 = scmp.lt.s32.totalorder %s14, 3
      %p179 = pnand %p177, %p178
      %p180 = pneg %p179
      // Predicated region
      $region29: #{lstm_forward.3} parent=5 // pred_check
        _
      $region30: #{lstm_forward.3} parent=5 // pred_check_branch
        %182 = sbr.rel (%p179) target = $region32
      $region31: #{lstm_forward.3} parent=5 // pred_region
        %s183 = ssub.s32 %s14, 1
        %p184 = pneg %p35
        %p185 = pneg %p32
        %p186 = scmp.lt.s32.totalorder %s19, 1
        %s187 = scalar_select %p186, %s19, 1
        %s188 = smul.addr %s187, 8
        %s189 = smul.addr %s188, 8
        %s190 = scalar_lea.vmem %s1, %s189
        %p191 = pneg %p61
        %p192 = pneg %p58
        %p193 = scmp.lt.s32.totalorder %s19, 1
        %s194 = scalar_select %p193, %s19, 1
        %s195 = smul.addr %s194, 4
        %s196 = smul.addr %s195, 8
        %s197 = scalar_lea.vmem %s2, %s196
        %p198 = pneg %p87
        %p199 = pneg %p84
        %p200 = pneg %p113
        %p201 = pneg %p110
        %s202 = sand.u32 %s100, 1
        %s203 = scalar_lea.sflag [#allocation3], %s202
        %s204 = sand.u32 %s100, 1
        %s205 = smul.addr %s204, 64
        %s206 = scalar_lea.vmem [#allocation2], %s205
        %p207 = pneg %p139
        %p208 = pneg %p136
        %p209 = scmp.lt.s32.totalorder %s19, 1
        %s210 = scalar_select %p209, %s19, 1
        %s211 = smul.addr %s210, 8
        %s212 = scalar_lea.vmem %s4, %s211
        %p213 = scmp.lt.s32.totalorder %s19, 1
        %s214 = scalar_select %p213, %s19, 1
        %s215 = smul.addr %s214, 8
        %s216 = smul.addr %s215, 8
        %s217 = scalar_lea.vmem %s1, %s216
        %p218 = scmp.lt.s32.totalorder %s19, 1
        %s219 = scalar_select %p218, %s19, 1
        %s220 = smul.addr %s219, 4
        %s221 = smul.addr %s220, 8
        %s222 = scalar_lea.vmem %s2, %s221
        %p223 = scmp.lt.s32.totalorder %s19, 1
        %s224 = scalar_select %p223, %s19, 1
        %s225 = smul.addr %s224, 8
        %s226 = scalar_lea.vmem %s4, %s225
        %p227 = scmp.eq.s32.totalorder %s19, 1
        %v228 = vld [vmem:[%s0] sm:$0xff]
        %v229 = vld [vmem:[%s222] sm:$0xff]
        %v230 = vld [vmem:[%s222 + $0x8] sm:$0xff]
        %v231 = vld [vmem:[%s222 + $0x10] sm:$0xff]
        %v232 = vld [vmem:[%s222 + $0x18] sm:$0xff]
        %s233 = scalar_select %p227, 7, 0
        %s234 = smul.u32 %s233, 8
        %s235 = scalar_lea.vmem %s217, %s234
        %v236 = vld [vmem:[%s235] sm:$0xff]
        %vm237 = vcmask 261120
        %v239 = vsel %vm237, 0.0, 0
        %241 = vmatprep.subr.mxu0 0.0
        %242 = vmatpush1.msra.mxu0 %v229
        %243 = vmatprep.subr.mxu0 0.0
        %244 = vmatpush1.msra.mxu0 %v230
        %245 = vmatprep.subr.mxu0 0.0
        %246 = vmatpush1.msra.mxu0 %v231
        %247 = vmatprep.subr.mxu0 0.0
        %248 = vmatpush1.msra.mxu0 %v232
        %249 = vmatprep.subr.mxu0 0.0
        %250 = vmatpush1.msra.mxu0 0.0
        %251 = vmatprep.subr.mxu0 0.0
        %252 = vmatpush1.msra.mxu0 0.0
        %253 = vmatprep.subr.mxu0 0.0
        %254 = vmatpush1.msra.mxu0 0.0
        %255 = vmatprep.subr.mxu0 0.0
        %256 = vmatpush1.msra.mxu0 0.0
        %257 = vmatprep.subr.mxu0 0.0
        %258 = vmatpush1.msra.mxu0 0.0
        %259 = vmatprep.subr.mxu0 0.0
        %260 = vmatpush1.msra.mxu0 0.0
        %261 = vmatprep.subr.mxu0 0.0
        %262 = vmatpush1.msra.mxu0 0.0
        %263 = vmatprep.subr.mxu0 0.0
        %264 = vmatpush1.msra.mxu0 0.0
        %265 = vmatprep.subr.mxu0 0.0
        %266 = vmatpush1.msra.mxu0 0.0
        %267 = vmatprep.subr.mxu0 0.0
        %268 = vmatpush1.msra.mxu0 0.0
        %269 = vmatprep.subr.mxu0 0.0
        %270 = vmatpush1.msra.mxu0 0.0
        %271 = vmatprep.subr.mxu0 0.0
        %272 = vmatpush1.msra.mxu0 0.0
        %273 = vmatprep.subr.mxu0 0.0
        %274 = vmatpush1.msra.mxu0 0.0
        %275 = vmatprep.subr.mxu0 0.0
        %276 = vmatpush1.msra.mxu0 0.0
        %277 = vmatprep.subr.mxu0 0.0
        %278 = vmatpush1.msra.mxu0 0.0
        %279 = vmatprep.subr.mxu0 0.0
        %280 = vmatpush1.msra.mxu0 0.0
        %281 = vmatprep.subr.mxu0 0.0
        %282 = vmatpush1.msra.mxu0 0.0
        %283 = vmatprep.subr.mxu0 0.0
        %284 = vmatpush1.msra.mxu0 0.0
        %285 = vmatprep.subr.mxu0 0.0
        %286 = vmatpush1.msra.mxu0 0.0
        %287 = vmatprep.subr.mxu0 0.0
        %288 = vmatpush1.msra.mxu0 0.0
        %289 = vmatprep.subr.mxu0 0.0
        %290 = vmatpush1.msra.mxu0 0.0
        %291 = vmatprep.subr.mxu0 0.0
        %292 = vmatpush1.msra.mxu0 0.0
        %293 = vmatprep.subr.mxu0 0.0
        %294 = vmatpush1.msra.mxu0 0.0
        %295 = vmatprep.subr.mxu0 0.0
        %296 = vmatpush1.msra.mxu0 0.0
        %297 = vmatprep.subr.mxu0 0.0
        %298 = vmatpush1.msra.mxu0 0.0
        %299 = vmatprep.subr.mxu0 0.0
        %300 = vmatpush1.msra.mxu0 0.0
        %301 = vmatprep.subr.mxu0 0.0
        %302 = vmatpush1.msra.mxu0 0.0
        %303 = vmatprep.subr.mxu0 0.0
        %304 = vmatpush1.msra.mxu0 0.0
        %305 = vmatprep.mubr.f32.mxu0 0.0
        %306 = vmatmul.mubr.f32.gmra.mrb[0].mxu0 %v239
        %v307 = vpop.f32.mrb[0].mxu0
        %v308 = vadd.f32 0.0, %v307
        %v309 = vpop.f32.mrb[0].mxu0
        %310 = vdwg.mxu0
        %v311 = vadd.f32 %v236, %v308
        %v312 = vxor.u32 %v311, 2147483648
        %v313 = vmul.f32 %v312, 1.442695
        %v314 = vpow.pop %v313
        %v315 = vadd.f32 %v314, 1.0
        %v316 = vrcp.pop %v315
        %v317 = vmul.f32 1.0, %v316
        %v318 = vtanh.pop %v311
        %v319 = vmul.f32 %v317, 0.0
        %321 = vrot.lane.b32.xlu0 %v318, 64
        %v322 = vpop.permute.xlu0 %321
        %v324 = vmul.f32 %v317, %v322
        %326 = vrot.lane.b32.xlu0 %v324, 32
        %v327 = vpop.permute.xlu0 %326
        %v329 = vadd.f32 %v319, %v327
        %v330 = vtanh.pop %v329
        %332 = vrot.lane.b32.xlu0 %v330, 64
        %v333 = vpop.permute.xlu0 %332
        %v335 = vmul.f32 %v317, %v333
        %v336 = vstv %s233
        %vm337 = vcmp.lt.s32.totalorder %v336, %v228
        %v338 = vsel %vm337, 1, 0
        %v339 = vcvt.s32.f32 %v338
        %341 = vset.pattern.permute.xlu0 0
        %342 = vperm.xlu0 %341, %v339
        %v343 = vpop.permute.xlu0 %342
        %v345 = vmul.f32 %v343, %v335
        %v346 = vsub.f32 1.0, %v339
        %348 = vset.pattern.permute.xlu0 0
        %349 = vperm.xlu0 %348, %v346
        %v350 = vpop.permute.xlu0 %349
        %v352 = vmul.f32 %v350, 0.0
        %v353 = vadd.f32 %v345, %v352
        %v354 = vmul.f32 %v343, %v329
        %v355 = vadd.f32 %v354, %v352
        %357 = vrot.lane.b32.xlu0 %v345, 32
        %v358 = vpop.permute.xlu0 %357
        %s360 = scalar_lea.vmem %s206, %s234 [#allocation2]
        %361 = vst.msk [vmem:[%s360] sm:$0xff] %vm237, %v358
        %s362 = scalar_select %p227, 6, 1
        %s363 = smul.u32 %s362, 8
        %s364 = scalar_lea.vmem %s217, %s363
        %v365 = vld [vmem:[%s364] sm:$0xff]
        %367 = vrot.lane.b32.xlu0 %v353, 32
        %v368 = vpop.permute.xlu0 %367
        %v369 = vsel %vm237, %v368, 0
        %371 = vmatprep.subr.mxu0 0.0
        %372 = vmatpush1.msra.mxu0 %v229
        %373 = vmatprep.subr.mxu0 0.0
        %374 = vmatpush1.msra.mxu0 %v230
        %375 = vmatprep.subr.mxu0 0.0
        %376 = vmatpush1.msra.mxu0 %v231
        %377 = vmatprep.subr.mxu0 0.0
        %378 = vmatpush1.msra.mxu0 %v232
        %379 = vmatprep.subr.mxu0 0.0
        %380 = vmatpush1.msra.mxu0 0.0
        %381 = vmatprep.subr.mxu0 0.0
        %382 = vmatpush1.msra.mxu0 0.0
        %383 = vmatprep.subr.mxu0 0.0
        %384 = vmatpush1.msra.mxu0 0.0
        %385 = vmatprep.subr.mxu0 0.0
        %386 = vmatpush1.msra.mxu0 0.0
        %387 = vmatprep.subr.mxu0 0.0
        %388 = vmatpush1.msra.mxu0 0.0
        %389 = vmatprep.subr.mxu0 0.0
        %390 = vmatpush1.msra.mxu0 0.0
        %391 = vmatprep.subr.mxu0 0.0
        %392 = vmatpush1.msra.mxu0 0.0
        %393 = vmatprep.subr.mxu0 0.0
        %394 = vmatpush1.msra.mxu0 0.0
        %395 = vmatprep.subr.mxu0 0.0
        %396 = vmatpush1.msra.mxu0 0.0
        %397 = vmatprep.subr.mxu0 0.0
        %398 = vmatpush1.msra.mxu0 0.0
        %399 = vmatprep.subr.mxu0 0.0
        %400 = vmatpush1.msra.mxu0 0.0
        %401 = vmatprep.subr.mxu0 0.0
        %402 = vmatpush1.msra.mxu0 0.0
        %403 = vmatprep.subr.mxu0 0.0
        %404 = vmatpush1.msra.mxu0 0.0
        %405 = vmatprep.subr.mxu0 0.0
        %406 = vmatpush1.msra.mxu0 0.0
        %407 = vmatprep.subr.mxu0 0.0
        %408 = vmatpush1.msra.mxu0 0.0
        %409 = vmatprep.subr.mxu0 0.0
        %410 = vmatpush1.msra.mxu0 0.0
        %411 = vmatprep.subr.mxu0 0.0
        %412 = vmatpush1.msra.mxu0 0.0
        %413 = vmatprep.subr.mxu0 0.0
        %414 = vmatpush1.msra.mxu0 0.0
        %415 = vmatprep.subr.mxu0 0.0
        %416 = vmatpush1.msra.mxu0 0.0
        %417 = vmatprep.subr.mxu0 0.0
        %418 = vmatpush1.msra.mxu0 0.0
        %419 = vmatprep.subr.mxu0 0.0
        %420 = vmatpush1.msra.mxu0 0.0
        %421 = vmatprep.subr.mxu0 0.0
        %422 = vmatpush1.msra.mxu0 0.0
        %423 = vmatprep.subr.mxu0 0.0
        %424 = vmatpush1.msra.mxu0 0.0
        %425 = vmatprep.subr.mxu0 0.0
        %426 = vmatpush1.msra.mxu0 0.0
        %427 = vmatprep.subr.mxu0 0.0
        %428 = vmatpush1.msra.mxu0 0.0
        %429 = vmatprep.subr.mxu0 0.0
        %430 = vmatpush1.msra.mxu0 0.0
        %431 = vmatprep.subr.mxu0 0.0
        %432 = vmatpush1.msra.mxu0 0.0
        %433 = vmatprep.subr.mxu0 0.0
        %434 = vmatpush1.msra.mxu0 0.0
        %435 = vmatprep.mubr.f32.mxu0 0.0
        %436 = vmatmul.mubr.f32.gmra.mrb[0].mxu0 %v369
        %v437 = vpop.f32.mrb[0].mxu0
        %v438 = vadd.f32 0.0, %v437
        %v439 = vpop.f32.mrb[0].mxu0
        %440 = vdwg.mxu0
        %v441 = vadd.f32 %v365, %v438
        %v442 = vxor.u32 %v441, 2147483648
        %v443 = vmul.f32 %v442, 1.442695
        %v444 = vpow.pop %v443
        %v445 = vadd.f32 %v444, 1.0
        %v446 = vrcp.pop %v445
        %v447 = vmul.f32 1.0, %v446
        %v448 = vtanh.pop %v441
        %v449 = vmul.f32 %v447, %v355
        %451 = vrot.lane.b32.xlu0 %v448, 64
        %v452 = vpop.permute.xlu0 %451
        %v454 = vmul.f32 %v447, %v452
        %456 = vrot.lane.b32.xlu0 %v454, 32
        %v457 = vpop.permute.xlu0 %456
        %v459 = vadd.f32 %v449, %v457
        %v460 = vtanh.pop %v459
        %462 = vrot.lane.b32.xlu0 %v460, 64
        %v463 = vpop.permute.xlu0 %462
        %v465 = vmul.f32 %v447, %v463
        %v466 = vstv %s362
        %vm467 = vcmp.lt.s32.totalorder %v466, %v228
        %v468 = vsel %vm467, 1, 0
        %v469 = vcvt.s32.f32 %v468
        %471 = vset.pattern.permute.xlu0 0
        %472 = vperm.xlu0 %471, %v469
        %v473 = vpop.permute.xlu0 %472
        %v475 = vmul.f32 %v473, %v465
        %v476 = vsub.f32 1.0, %v469
        %478 = vset.pattern.permute.xlu0 0
        %479 = vperm.xlu0 %478, %v476
        %v480 = vpop.permute.xlu0 %479
        %v482 = vmul.f32 %v480, %v353
        %v483 = vadd.f32 %v475, %v482
        %v484 = vmul.f32 %v473, %v459
        %v485 = vmul.f32 %v480, %v355
        %v486 = vadd.f32 %v484, %v485
        %488 = vrot.lane.b32.xlu0 %v475, 32
        %v489 = vpop.permute.xlu0 %488
        %s491 = scalar_lea.vmem %s206, %s363 [#allocation2]
        %492 = vst.msk [vmem:[%s491] sm:$0xff] %vm237, %v489
        %s493 = scalar_select %p227, 5, 2
        %s494 = smul.u32 %s493, 8
        %s495 = scalar_lea.vmem %s217, %s494
        %v496 = vld [vmem:[%s495] sm:$0xff]
        %498 = vrot.lane.b32.xlu0 %v483, 32
        %v499 = vpop.permute.xlu0 %498
        %v500 = vsel %vm237, %v499, 0
        %502 = vmatprep.subr.mxu0 0.0
        %503 = vmatpush1.msra.mxu0 %v229
        %504 = vmatprep.subr.mxu0 0.0
        %505 = vmatpush1.msra.mxu0 %v230
        %506 = vmatprep.subr.mxu0 0.0
        %507 = vmatpush1.msra.mxu0 %v231
        %508 = vmatprep.subr.mxu0 0.0
        %509 = vmatpush1.msra.mxu0 %v232
        %510 = vmatprep.subr.mxu0 0.0
        %511 = vmatpush1.msra.mxu0 0.0
        %512 = vmatprep.subr.mxu0 0.0
        %513 = vmatpush1.msra.mxu0 0.0
        %514 = vmatprep.subr.mxu0 0.0
        %515 = vmatpush1.msra.mxu0 0.0
        %516 = vmatprep.subr.mxu0 0.0
        %517 = vmatpush1.msra.mxu0 0.0
        %518 = vmatprep.subr.mxu0 0.0
        %519 = vmatpush1.msra.mxu0 0.0
        %520 = vmatprep.subr.mxu0 0.0
        %521 = vmatpush1.msra.mxu0 0.0
        %522 = vmatprep.subr.mxu0 0.0
        %523 = vmatpush1.msra.mxu0 0.0
        %524 = vmatprep.subr.mxu0 0.0
        %525 = vmatpush1.msra.mxu0 0.0
        %526 = vmatprep.subr.mxu0 0.0
        %527 = vmatpush1.msra.mxu0 0.0
        %528 = vmatprep.subr.mxu0 0.0
        %529 = vmatpush1.msra.mxu0 0.0
        %530 = vmatprep.subr.mxu0 0.0
        %531 = vmatpush1.msra.mxu0 0.0
        %532 = vmatprep.subr.mxu0 0.0
        %533 = vmatpush1.msra.mxu0 0.0
        %534 = vmatprep.subr.mxu0 0.0
        %535 = vmatpush1.msra.mxu0 0.0
        %536 = vmatprep.subr.mxu0 0.0
        %537 = vmatpush1.msra.mxu0 0.0
        %538 = vmatprep.subr.mxu0 0.0
        %539 = vmatpush1.msra.mxu0 0.0
        %540 = vmatprep.subr.mxu0 0.0
        %541 = vmatpush1.msra.mxu0 0.0
        %542 = vmatprep.subr.mxu0 0.0
        %543 = vmatpush1.msra.mxu0 0.0
        %544 = vmatprep.subr.mxu0 0.0
        %545 = vmatpush1.msra.mxu0 0.0
        %546 = vmatprep.subr.mxu0 0.0
        %547 = vmatpush1.msra.mxu0 0.0
        %548 = vmatprep.subr.mxu0 0.0
        %549 = vmatpush1.msra.mxu0 0.0
        %550 = vmatprep.subr.mxu0 0.0
        %551 = vmatpush1.msra.mxu0 0.0
        %552 = vmatprep.subr.mxu0 0.0
        %553 = vmatpush1.msra.mxu0 0.0
        %554 = vmatprep.subr.mxu0 0.0
        %555 = vmatpush1.msra.mxu0 0.0
        %556 = vmatprep.subr.mxu0 0.0
        %557 = vmatpush1.msra.mxu0 0.0
        %558 = vmatprep.subr.mxu0 0.0
        %559 = vmatpush1.msra.mxu0 0.0
        %560 = vmatprep.subr.mxu0 0.0
        %561 = vmatpush1.msra.mxu0 0.0
        %562 = vmatprep.subr.mxu0 0.0
        %563 = vmatpush1.msra.mxu0 0.0
        %564 = vmatprep.subr.mxu0 0.0
        %565 = vmatpush1.msra.mxu0 0.0
        %566 = vmatprep.mubr.f32.mxu0 0.0
        %567 = vmatmul.mubr.f32.gmra.mrb[0].mxu0 %v500
        %v568 = vpop.f32.mrb[0].mxu0
        %v569 = vadd.f32 0.0, %v568
        %v570 = vpop.f32.mrb[0].mxu0
        %571 = vdwg.mxu0
        %v572 = vadd.f32 %v496, %v569
        %v573 = vxor.u32 %v572, 2147483648
        %v574 = vmul.f32 %v573, 1.442695
        %v575 = vpow.pop %v574
        %v576 = vadd.f32 %v575, 1.0
        %v577 = vrcp.pop %v576
        %v578 = vmul.f32 1.0, %v577
        %v579 = vtanh.pop %v572
        %v580 = vmul.f32 %v578, %v486
        %582 = vrot.lane.b32.xlu0 %v579, 64
        %v583 = vpop.permute.xlu0 %582
        %v585 = vmul.f32 %v578, %v583
        %587 = vrot.lane.b32.xlu0 %v585, 32
        %v588 = vpop.permute.xlu0 %587
        %v590 = vadd.f32 %v580, %v588
        %v591 = vtanh.pop %v590
        %593 = vrot.lane.b32.xlu0 %v591, 64
        %v594 = vpop.permute.xlu0 %593
        %v596 = vmul.f32 %v578, %v594
        %v597 = vstv %s493
        %vm598 = vcmp.lt.s32.totalorder %v597, %v228
        %v599 = vsel %vm598, 1, 0
        %v600 = vcvt.s32.f32 %v599
        %602 = vset.pattern.permute.xlu0 0
        %603 = vperm.xlu0 %602, %v600
        %v604 = vpop.permute.xlu0 %603
        %v606 = vmul.f32 %v604, %v596
        %v607 = vsub.f32 1.0, %v600
        %609 = vset.pattern.permute.xlu0 0
        %610 = vperm.xlu0 %609, %v607
        %v611 = vpop.permute.xlu0 %610
        %v613 = vmul.f32 %v611, %v483
        %v614 = vadd.f32 %v606, %v613
        %v615 = vmul.f32 %v604, %v590
        %v616 = vmul.f32 %v611, %v486
        %v617 = vadd.f32 %v615, %v616
        %619 = vrot.lane.b32.xlu0 %v606, 32
        %v620 = vpop.permute.xlu0 %619
        %s622 = scalar_lea.vmem %s206, %s494 [#allocation2]
        %623 = vst.msk [vmem:[%s622] sm:$0xff] %vm237, %v620
        %s624 = scalar_select %p227, 4, 3
        %s625 = smul.u32 %s624, 8
        %s626 = scalar_lea.vmem %s217, %s625
        %v627 = vld [vmem:[%s626] sm:$0xff]
        %629 = vrot.lane.b32.xlu0 %v614, 32
        %v630 = vpop.permute.xlu0 %629
        %v631 = vsel %vm237, %v630, 0
        %633 = vmatprep.subr.mxu0 0.0
        %634 = vmatpush1.msra.mxu0 %v229
        %635 = vmatprep.subr.mxu0 0.0
        %636 = vmatpush1.msra.mxu0 %v230
        %637 = vmatprep.subr.mxu0 0.0
        %638 = vmatpush1.msra.mxu0 %v231
        %639 = vmatprep.subr.mxu0 0.0
        %640 = vmatpush1.msra.mxu0 %v232
        %641 = vmatprep.subr.mxu0 0.0
        %642 = vmatpush1.msra.mxu0 0.0
        %643 = vmatprep.subr.mxu0 0.0
        %644 = vmatpush1.msra.mxu0 0.0
        %645 = vmatprep.subr.mxu0 0.0
        %646 = vmatpush1.msra.mxu0 0.0
        %647 = vmatprep.subr.mxu0 0.0
        %648 = vmatpush1.msra.mxu0 0.0
        %649 = vmatprep.subr.mxu0 0.0
        %650 = vmatpush1.msra.mxu0 0.0
        %651 = vmatprep.subr.mxu0 0.0
        %652 = vmatpush1.msra.mxu0 0.0
        %653 = vmatprep.subr.mxu0 0.0
        %654 = vmatpush1.msra.mxu0 0.0
        %655 = vmatprep.subr.mxu0 0.0
        %656 = vmatpush1.msra.mxu0 0.0
        %657 = vmatprep.subr.mxu0 0.0
        %658 = vmatpush1.msra.mxu0 0.0
        %659 = vmatprep.subr.mxu0 0.0
        %660 = vmatpush1.msra.mxu0 0.0
        %661 = vmatprep.subr.mxu0 0.0
        %662 = vmatpush1.msra.mxu0 0.0
        %663 = vmatprep.subr.mxu0 0.0
        %664 = vmatpush1.msra.mxu0 0.0
        %665 = vmatprep.subr.mxu0 0.0
        %666 = vmatpush1.msra.mxu0 0.0
        %667 = vmatprep.subr.mxu0 0.0
        %668 = vmatpush1.msra.mxu0 0.0
        %669 = vmatprep.subr.mxu0 0.0
        %670 = vmatpush1.msra.mxu0 0.0
        %671 = vmatprep.subr.mxu0 0.0
        %672 = vmatpush1.msra.mxu0 0.0
        %673 = vmatprep.subr.mxu0 0.0
        %674 = vmatpush1.msra.mxu0 0.0
        %675 = vmatprep.subr.mxu0 0.0
        %676 = vmatpush1.msra.mxu0 0.0
        %677 = vmatprep.subr.mxu0 0.0
        %678 = vmatpush1.msra.mxu0 0.0
        %679 = vmatprep.subr.mxu0 0.0
        %680 = vmatpush1.msra.mxu0 0.0
        %681 = vmatprep.subr.mxu0 0.0
        %682 = vmatpush1.msra.mxu0 0.0
        %683 = vmatprep.subr.mxu0 0.0
        %684 = vmatpush1.msra.mxu0 0.0
        %685 = vmatprep.subr.mxu0 0.0
        %686 = vmatpush1.msra.mxu0 0.0
        %687 = vmatprep.subr.mxu0 0.0
        %688 = vmatpush1.msra.mxu0 0.0
        %689 = vmatprep.subr.mxu0 0.0
        %690 = vmatpush1.msra.mxu0 0.0
        %691 = vmatprep.subr.mxu0 0.0
        %692 = vmatpush1.msra.mxu0 0.0
        %693 = vmatprep.subr.mxu0 0.0
        %694 = vmatpush1.msra.mxu0 0.0
        %695 = vmatprep.subr.mxu0 0.0
        %696 = vmatpush1.msra.mxu0 0.0
        %697 = vmatprep.mubr.f32.mxu0 0.0
        %698 = vmatmul.mubr.f32.gmra.mrb[0].mxu0 %v631
        %v699 = vpop.f32.mrb[0].mxu0
        %v700 = vadd.f32 0.0, %v699
        %v701 = vpop.f32.mrb[0].mxu0
        %702 = vdwg.mxu0
        %v703 = vadd.f32 %v627, %v700
        %v704 = vxor.u32 %v703, 2147483648
        %v705 = vmul.f32 %v704, 1.442695
        %v706 = vpow.pop %v705
        %v707 = vadd.f32 %v706, 1.0
        %v708 = vrcp.pop %v707
        %v709 = vmul.f32 1.0, %v708
        %v710 = vtanh.pop %v703
        %v711 = vmul.f32 %v709, %v617
        %713 = vrot.lane.b32.xlu0 %v710, 64
        %v714 = vpop.permute.xlu0 %713
        %v716 = vmul.f32 %v709, %v714
        %718 = vrot.lane.b32.xlu0 %v716, 32
        %v719 = vpop.permute.xlu0 %718
        %v721 = vadd.f32 %v711, %v719
        %v722 = vtanh.pop %v721
        %724 = vrot.lane.b32.xlu0 %v722, 64
        %v725 = vpop.permute.xlu0 %724
        %v727 = vmul.f32 %v709, %v725
        %v728 = vstv %s624
        %vm729 = vcmp.lt.s32.totalorder %v728, %v228
        %v730 = vsel %vm729, 1, 0
        %v731 = vcvt.s32.f32 %v730
        %733 = vset.pattern.permute.xlu0 0
        %734 = vperm.xlu0 %733, %v731
        %v735 = vpop.permute.xlu0 %734
        %v737 = vmul.f32 %v735, %v727
        %v738 = vsub.f32 1.0, %v731
        %740 = vset.pattern.permute.xlu0 0
        %741 = vperm.xlu0 %740, %v738
        %v742 = vpop.permute.xlu0 %741
        %v744 = vmul.f32 %v742, %v614
        %v745 = vadd.f32 %v737, %v744
        %v746 = vmul.f32 %v735, %v721
        %v747 = vmul.f32 %v742, %v617
        %v748 = vadd.f32 %v746, %v747
        %750 = vrot.lane.b32.xlu0 %v737, 32
        %v751 = vpop.permute.xlu0 %750
        %s753 = scalar_lea.vmem %s206, %s625 [#allocation2]
        %754 = vst.msk [vmem:[%s753] sm:$0xff] %vm237, %v751
        %s755 = scalar_select %p227, 3, 4
        %s756 = smul.u32 %s755, 8
        %s757 = scalar_lea.vmem %s217, %s756
        %v758 = vld [vmem:[%s757] sm:$0xff]
        %760 = vrot.lane.b32.xlu0 %v745, 32
        %v761 = vpop.permute.xlu0 %760
        %v762 = vsel %vm237, %v761, 0
        %764 = vmatprep.subr.mxu0 0.0
        %765 = vmatpush1.msra.mxu0 %v229
        %766 = vmatprep.subr.mxu0 0.0
        %767 = vmatpush1.msra.mxu0 %v230
        %768 = vmatprep.subr.mxu0 0.0
        %769 = vmatpush1.msra.mxu0 %v231
        %770 = vmatprep.subr.mxu0 0.0
        %771 = vmatpush1.msra.mxu0 %v232
        %772 = vmatprep.subr.mxu0 0.0
        %773 = vmatpush1.msra.mxu0 0.0
        %774 = vmatprep.subr.mxu0 0.0
        %775 = vmatpush1.msra.mxu0 0.0
        %776 = vmatprep.subr.mxu0 0.0
        %777 = vmatpush1.msra.mxu0 0.0
        %778 = vmatprep.subr.mxu0 0.0
        %779 = vmatpush1.msra.mxu0 0.0
        %780 = vmatprep.subr.mxu0 0.0
        %781 = vmatpush1.msra.mxu0 0.0
        %782 = vmatprep.subr.mxu0 0.0
        %783 = vmatpush1.msra.mxu0 0.0
        %784 = vmatprep.subr.mxu0 0.0
        %785 = vmatpush1.msra.mxu0 0.0
        %786 = vmatprep.subr.mxu0 0.0
        %787 = vmatpush1.msra.mxu0 0.0
        %788 = vmatprep.subr.mxu0 0.0
        %789 = vmatpush1.msra.mxu0 0.0
        %790 = vmatprep.subr.mxu0 0.0
        %791 = vmatpush1.msra.mxu0 0.0
        %792 = vmatprep.subr.mxu0 0.0
        %793 = vmatpush1.msra.mxu0 0.0
        %794 = vmatprep.subr.mxu0 0.0
        %795 = vmatpush1.msra.mxu0 0.0
        %796 = vmatprep.subr.mxu0 0.0
        %797 = vmatpush1.msra.mxu0 0.0
        %798 = vmatprep.subr.mxu0 0.0
        %799 = vmatpush1.msra.mxu0 0.0
        %800 = vmatprep.subr.mxu0 0.0
        %801 = vmatpush1.msra.mxu0 0.0
        %802 = vmatprep.subr.mxu0 0.0
        %803 = vmatpush1.msra.mxu0 0.0
        %804 = vmatprep.subr.mxu0 0.0
        %805 = vmatpush1.msra.mxu0 0.0
        %806 = vmatprep.subr.mxu0 0.0
        %807 = vmatpush1.msra.mxu0 0.0
        %808 = vmatprep.subr.mxu0 0.0
        %809 = vmatpush1.msra.mxu0 0.0
        %810 = vmatprep.subr.mxu0 0.0
        %811 = vmatpush1.msra.mxu0 0.0
        %812 = vmatprep.subr.mxu0 0.0
        %813 = vmatpush1.msra.mxu0 0.0
        %814 = vmatprep.subr.mxu0 0.0
        %815 = vmatpush1.msra.mxu0 0.0
        %816 = vmatprep.subr.mxu0 0.0
        %817 = vmatpush1.msra.mxu0 0.0
        %818 = vmatprep.subr.mxu0 0.0
        %819 = vmatpush1.msra.mxu0 0.0
        %820 = vmatprep.subr.mxu0 0.0
        %821 = vmatpush1.msra.mxu0 0.0
        %822 = vmatprep.subr.mxu0 0.0
        %823 = vmatpush1.msra.mxu0 0.0
        %824 = vmatprep.subr.mxu0 0.0
        %825 = vmatpush1.msra.mxu0 0.0
        %826 = vmatprep.subr.mxu0 0.0
        %827 = vmatpush1.msra.mxu0 0.0
        %828 = vmatprep.mubr.f32.mxu0 0.0
        %829 = vmatmul.mubr.f32.gmra.mrb[0].mxu0 %v762
        %v830 = vpop.f32.mrb[0].mxu0
        %v831 = vadd.f32 0.0, %v830
        %v832 = vpop.f32.mrb[0].mxu0
        %833 = vdwg.mxu0
        %v834 = vadd.f32 %v758, %v831
        %v835 = vxor.u32 %v834, 2147483648
        %v836 = vmul.f32 %v835, 1.442695
        %v837 = vpow.pop %v836
        %v838 = vadd.f32 %v837, 1.0
        %v839 = vrcp.pop %v838
        %v840 = vmul.f32 1.0, %v839
        %v841 = vtanh.pop %v834
        %v842 = vmul.f32 %v840, %v748
        %844 = vrot.lane.b32.xlu0 %v841, 64
        %v845 = vpop.permute.xlu0 %844
        %v847 = vmul.f32 %v840, %v845
        %849 = vrot.lane.b32.xlu0 %v847, 32
        %v850 = vpop.permute.xlu0 %849
        %v852 = vadd.f32 %v842, %v850
        %v853 = vtanh.pop %v852
        %855 = vrot.lane.b32.xlu0 %v853, 64
        %v856 = vpop.permute.xlu0 %855
        %v858 = vmul.f32 %v840, %v856
        %v859 = vstv %s755
        %vm860 = vcmp.lt.s32.totalorder %v859, %v228
        %v861 = vsel %vm860, 1, 0
        %v862 = vcvt.s32.f32 %v861
        %864 = vset.pattern.permute.xlu0 0
        %865 = vperm.xlu0 %864, %v862
        %v866 = vpop.permute.xlu0 %865
        %v868 = vmul.f32 %v866, %v858
        %v869 = vsub.f32 1.0, %v862
        %871 = vset.pattern.permute.xlu0 0
        %872 = vperm.xlu0 %871, %v869
        %v873 = vpop.permute.xlu0 %872
        %v875 = vmul.f32 %v873, %v745
        %v876 = vadd.f32 %v868, %v875
        %v877 = vmul.f32 %v866, %v852
        %v878 = vmul.f32 %v873, %v748
        %v879 = vadd.f32 %v877, %v878
        %881 = vrot.lane.b32.xlu0 %v868, 32
        %v882 = vpop.permute.xlu0 %881
        %s884 = scalar_lea.vmem %s206, %s756 [#allocation2]
        %885 = vst.msk [vmem:[%s884] sm:$0xff] %vm237, %v882
        %s886 = scalar_select %p227, 2, 5
        %s887 = smul.u32 %s886, 8
        %s888 = scalar_lea.vmem %s217, %s887
        %v889 = vld [vmem:[%s888] sm:$0xff]
        %891 = vrot.lane.b32.xlu0 %v876, 32
        %v892 = vpop.permute.xlu0 %891
        %v893 = vsel %vm237, %v892, 0
        %895 = vmatprep.subr.mxu0 0.0
        %896 = vmatpush1.msra.mxu0 %v229
        %897 = vmatprep.subr.mxu0 0.0
        %898 = vmatpush1.msra.mxu0 %v230
        %899 = vmatprep.subr.mxu0 0.0
        %900 = vmatpush1.msra.mxu0 %v231
        %901 = vmatprep.subr.mxu0 0.0
        %902 = vmatpush1.msra.mxu0 %v232
        %903 = vmatprep.subr.mxu0 0.0
        %904 = vmatpush1.msra.mxu0 0.0
        %905 = vmatprep.subr.mxu0 0.0
        %906 = vmatpush1.msra.mxu0 0.0
        %907 = vmatprep.subr.mxu0 0.0
        %908 = vmatpush1.msra.mxu0 0.0
        %909 = vmatprep.subr.mxu0 0.0
        %910 = vmatpush1.msra.mxu0 0.0
        %911 = vmatprep.subr.mxu0 0.0
        %912 = vmatpush1.msra.mxu0 0.0
        %913 = vmatprep.subr.mxu0 0.0
        %914 = vmatpush1.msra.mxu0 0.0
        %915 = vmatprep.subr.mxu0 0.0
        %916 = vmatpush1.msra.mxu0 0.0
        %917 = vmatprep.subr.mxu0 0.0
        %918 = vmatpush1.msra.mxu0 0.0
        %919 = vmatprep.subr.mxu0 0.0
        %920 = vmatpush1.msra.mxu0 0.0
        %921 = vmatprep.subr.mxu0 0.0
        %922 = vmatpush1.msra.mxu0 0.0
        %923 = vmatprep.subr.mxu0 0.0
        %924 = vmatpush1.msra.mxu0 0.0
        %925 = vmatprep.subr.mxu0 0.0
        %926 = vmatpush1.msra.mxu0 0.0
        %927 = vmatprep.subr.mxu0 0.0
        %928 = vmatpush1.msra.mxu0 0.0
        %929 = vmatprep.subr.mxu0 0.0
        %930 = vmatpush1.msra.mxu0 0.0
        %931 = vmatprep.subr.mxu0 0.0
        %932 = vmatpush1.msra.mxu0 0.0
        %933 = vmatprep.subr.mxu0 0.0
        %934 = vmatpush1.msra.mxu0 0.0
        %935 = vmatprep.subr.mxu0 0.0
        %936 = vmatpush1.msra.mxu0 0.0
        %937 = vmatprep.subr.mxu0 0.0
        %938 = vmatpush1.msra.mxu0 0.0
        %939 = vmatprep.subr.mxu0 0.0
        %940 = vmatpush1.msra.mxu0 0.0
        %941 = vmatprep.subr.mxu0 0.0
        %942 = vmatpush1.msra.mxu0 0.0
        %943 = vmatprep.subr.mxu0 0.0
        %944 = vmatpush1.msra.mxu0 0.0
        %945 = vmatprep.subr.mxu0 0.0
        %946 = vmatpush1.msra.mxu0 0.0
        %947 = vmatprep.subr.mxu0 0.0
        %948 = vmatpush1.msra.mxu0 0.0
        %949 = vmatprep.subr.mxu0 0.0
        %950 = vmatpush1.msra.mxu0 0.0
        %951 = vmatprep.subr.mxu0 0.0
        %952 = vmatpush1.msra.mxu0 0.0
        %953 = vmatprep.subr.mxu0 0.0
        %954 = vmatpush1.msra.mxu0 0.0
        %955 = vmatprep.subr.mxu0 0.0
        %956 = vmatpush1.msra.mxu0 0.0
        %957 = vmatprep.subr.mxu0 0.0
        %958 = vmatpush1.msra.mxu0 0.0
        %959 = vmatprep.mubr.f32.mxu0 0.0
        %960 = vmatmul.mubr.f32.gmra.mrb[0].mxu0 %v893
        %v961 = vpop.f32.mrb[0].mxu0
        %v962 = vadd.f32 0.0, %v961
        %v963 = vpop.f32.mrb[0].mxu0
        %964 = vdwg.mxu0
        %v965 = vadd.f32 %v889, %v962
        %v966 = vxor.u32 %v965, 2147483648
        %v967 = vmul.f32 %v966, 1.442695
        %v968 = vpow.pop %v967
        %v969 = vadd.f32 %v968, 1.0
        %v970 = vrcp.pop %v969
        %v971 = vmul.f32 1.0, %v970
        %v972 = vtanh.pop %v965
        %v973 = vmul.f32 %v971, %v879
        %975 = vrot.lane.b32.xlu0 %v972, 64
        %v976 = vpop.permute.xlu0 %975
        %v978 = vmul.f32 %v971, %v976
        %980 = vrot.lane.b32.xlu0 %v978, 32
        %v981 = vpop.permute.xlu0 %980
        %v983 = vadd.f32 %v973, %v981
        %v984 = vtanh.pop %v983
        %986 = vrot.lane.b32.xlu0 %v984, 64
        %v987 = vpop.permute.xlu0 %986
        %v989 = vmul.f32 %v971, %v987
        %v990 = vstv %s886
        %vm991 = vcmp.lt.s32.totalorder %v990, %v228
        %v992 = vsel %vm991, 1, 0
        %v993 = vcvt.s32.f32 %v992
        %995 = vset.pattern.permute.xlu0 0
        %996 = vperm.xlu0 %995, %v993
        %v997 = vpop.permute.xlu0 %996
        %v999 = vmul.f32 %v997, %v989
        %v1000 = vsub.f32 1.0, %v993
        %1002 = vset.pattern.permute.xlu0 0
        %1003 = vperm.xlu0 %1002, %v1000
        %v1004 = vpop.permute.xlu0 %1003
        %v1006 = vmul.f32 %v1004, %v876
        %v1007 = vadd.f32 %v999, %v1006
        %v1008 = vmul.f32 %v997, %v983
        %v1009 = vmul.f32 %v1004, %v879
        %v1010 = vadd.f32 %v1008, %v1009
        %1012 = vrot.lane.b32.xlu0 %v999, 32
        %v1013 = vpop.permute.xlu0 %1012
        %s1015 = scalar_lea.vmem %s206, %s887 [#allocation2]
        %1016 = vst.msk [vmem:[%s1015] sm:$0xff] %vm237, %v1013
        %s1017 = scalar_select %p227, 1, 6
        %s1018 = smul.u32 %s1017, 8
        %s1019 = scalar_lea.vmem %s217, %s1018
        %v1020 = vld [vmem:[%s1019] sm:$0xff]
        %1022 = vrot.lane.b32.xlu0 %v1007, 32
        %v1023 = vpop.permute.xlu0 %1022
        %v1024 = vsel %vm237, %v1023, 0
        %1026 = vmatprep.subr.mxu0 0.0
        %1027 = vmatpush1.msra.mxu0 %v229
        %1028 = vmatprep.subr.mxu0 0.0
        %1029 = vmatpush1.msra.mxu0 %v230
        %1030 = vmatprep.subr.mxu0 0.0
        %1031 = vmatpush1.msra.mxu0 %v231
        %1032 = vmatprep.subr.mxu0 0.0
        %1033 = vmatpush1.msra.mxu0 %v232
        %1034 = vmatprep.subr.mxu0 0.0
        %1035 = vmatpush1.msra.mxu0 0.0
        %1036 = vmatprep.subr.mxu0 0.0
        %1037 = vmatpush1.msra.mxu0 0.0
        %1038 = vmatprep.subr.mxu0 0.0
        %1039 = vmatpush1.msra.mxu0 0.0
        %1040 = vmatprep.subr.mxu0 0.0
        %1041 = vmatpush1.msra.mxu0 0.0
        %1042 = vmatprep.subr.mxu0 0.0
        %1043 = vmatpush1.msra.mxu0 0.0
        %1044 = vmatprep.subr.mxu0 0.0
        %1045 = vmatpush1.msra.mxu0 0.0
        %1046 = vmatprep.subr.mxu0 0.0
        %1047 = vmatpush1.msra.mxu0 0.0
        %1048 = vmatprep.subr.mxu0 0.0
        %1049 = vmatpush1.msra.mxu0 0.0
        %1050 = vmatprep.subr.mxu0 0.0
        %1051 = vmatpush1.msra.mxu0 0.0
        %1052 = vmatprep.subr.mxu0 0.0
        %1053 = vmatpush1.msra.mxu0 0.0
        %1054 = vmatprep.subr.mxu0 0.0
        %1055 = vmatpush1.msra.mxu0 0.0
        %1056 = vmatprep.subr.mxu0 0.0
        %1057 = vmatpush1.msra.mxu0 0.0
        %1058 = vmatprep.subr.mxu0 0.0
        %1059 = vmatpush1.msra.mxu0 0.0
        %1060 = vmatprep.subr.mxu0 0.0
        %1061 = vmatpush1.msra.mxu0 0.0
        %1062 = vmatprep.subr.mxu0 0.0
        %1063 = vmatpush1.msra.mxu0 0.0
        %1064 = vmatprep.subr.mxu0 0.0
        %1065 = vmatpush1.msra.mxu0 0.0
        %1066 = vmatprep.subr.mxu0 0.0
        %1067 = vmatpush1.msra.mxu0 0.0
        %1068 = vmatprep.subr.mxu0 0.0
        %1069 = vmatpush1.msra.mxu0 0.0
        %1070 = vmatprep.subr.mxu0 0.0
        %1071 = vmatpush1.msra.mxu0 0.0
        %1072 = vmatprep.subr.mxu0 0.0
        %1073 = vmatpush1.msra.mxu0 0.0
        %1074 = vmatprep.subr.mxu0 0.0
        %1075 = vmatpush1.msra.mxu0 0.0
        %1076 = vmatprep.subr.mxu0 0.0
        %1077 = vmatpush1.msra.mxu0 0.0
        %1078 = vmatprep.subr.mxu0 0.0
        %1079 = vmatpush1.msra.mxu0 0.0
        %1080 = vmatprep.subr.mxu0 0.0
        %1081 = vmatpush1.msra.mxu0 0.0
        %1082 = vmatprep.subr.mxu0 0.0
        %1083 = vmatpush1.msra.mxu0 0.0
        %1084 = vmatprep.subr.mxu0 0.0
        %1085 = vmatpush1.msra.mxu0 0.0
        %1086 = vmatprep.subr.mxu0 0.0
        %1087 = vmatpush1.msra.mxu0 0.0
        %1088 = vmatprep.subr.mxu0 0.0
        %1089 = vmatpush1.msra.mxu0 0.0
        %1090 = vmatprep.mubr.f32.mxu0 0.0
        %1091 = vmatmul.mubr.f32.gmra.mrb[0].mxu0 %v1024
        %v1092 = vpop.f32.mrb[0].mxu0
        %v1093 = vadd.f32 0.0, %v1092
        %v1094 = vpop.f32.mrb[0].mxu0
        %1095 = vdwg.mxu0
        %v1096 = vadd.f32 %v1020, %v1093
        %v1097 = vxor.u32 %v1096, 2147483648
        %v1098 = vmul.f32 %v1097, 1.442695
        %v1099 = vpow.pop %v1098
        %v1100 = vadd.f32 %v1099, 1.0
        %v1101 = vrcp.pop %v1100
        %v1102 = vmul.f32 1.0, %v1101
        %v1103 = vtanh.pop %v1096
        %v1104 = vmul.f32 %v1102, %v1010
        %1106 = vrot.lane.b32.xlu0 %v1103, 64
        %v1107 = vpop.permute.xlu0 %1106
        %v1109 = vmul.f32 %v1102, %v1107
        %1111 = vrot.lane.b32.xlu0 %v1109, 32
        %v1112 = vpop.permute.xlu0 %1111
        %v1114 = vadd.f32 %v1104, %v1112
        %v1115 = vtanh.pop %v1114
        %1117 = vrot.lane.b32.xlu0 %v1115, 64
        %v1118 = vpop.permute.xlu0 %1117
        %v1120 = vmul.f32 %v1102, %v1118
        %v1121 = vstv %s1017
        %vm1122 = vcmp.lt.s32.totalorder %v1121, %v228
        %v1123 = vsel %vm1122, 1, 0
        %v1124 = vcvt.s32.f32 %v1123
        %1126 = vset.pattern.permute.xlu0 0
        %1127 = vperm.xlu0 %1126, %v1124
        %v1128 = vpop.permute.xlu0 %1127
        %v1130 = vmul.f32 %v1128, %v1120
        %v1131 = vsub.f32 1.0, %v1124
        %1133 = vset.pattern.permute.xlu0 0
        %1134 = vperm.xlu0 %1133, %v1131
        %v1135 = vpop.permute.xlu0 %1134
        %v1137 = vmul.f32 %v1135, %v1007
        %v1138 = vadd.f32 %v1130, %v1137
        %v1139 = vmul.f32 %v1128, %v1114
        %v1140 = vmul.f32 %v1135, %v1010
        %v1141 = vadd.f32 %v1139, %v1140
        %1143 = vrot.lane.b32.xlu0 %v1130, 32
        %v1144 = vpop.permute.xlu0 %1143
        %s1146 = scalar_lea.vmem %s206, %s1018 [#allocation2]
        %1147 = vst.msk [vmem:[%s1146] sm:$0xff] %vm237, %v1144
        %s1148 = scalar_select %p227, 0, 7
        %s1149 = smul.u32 %s1148, 8
        %s1150 = scalar_lea.vmem %s217, %s1149
        %v1151 = vld [vmem:[%s1150] sm:$0xff]
        %1153 = vrot.lane.b32.xlu0 %v1138, 32
        %v1154 = vpop.permute.xlu0 %1153
        %v1155 = vsel %vm237, %v1154, 0
        %1157 = vmatprep.subr.mxu0 0.0
        %1158 = vmatpush1.msra.mxu0 %v229
        %1159 = vmatprep.subr.mxu0 0.0
        %1160 = vmatpush1.msra.mxu0 %v230
        %1161 = vmatprep.subr.mxu0 0.0
        %1162 = vmatpush1.msra.mxu0 %v231
        %1163 = vmatprep.subr.mxu0 0.0
        %1164 = vmatpush1.msra.mxu0 %v232
        %1165 = vmatprep.subr.mxu0 0.0
        %1166 = vmatpush1.msra.mxu0 0.0
        %1167 = vmatprep.subr.mxu0 0.0
        %1168 = vmatpush1.msra.mxu0 0.0
        %1169 = vmatprep.subr.mxu0 0.0
        %1170 = vmatpush1.msra.mxu0 0.0
        %1171 = vmatprep.subr.mxu0 0.0
        %1172 = vmatpush1.msra.mxu0 0.0
        %1173 = vmatprep.subr.mxu0 0.0
        %1174 = vmatpush1.msra.mxu0 0.0
        %1175 = vmatprep.subr.mxu0 0.0
        %1176 = vmatpush1.msra.mxu0 0.0
        %1177 = vmatprep.subr.mxu0 0.0
        %1178 = vmatpush1.msra.mxu0 0.0
        %1179 = vmatprep.subr.mxu0 0.0
        %1180 = vmatpush1.msra.mxu0 0.0
        %1181 = vmatprep.subr.mxu0 0.0
        %1182 = vmatpush1.msra.mxu0 0.0
        %1183 = vmatprep.subr.mxu0 0.0
        %1184 = vmatpush1.msra.mxu0 0.0
        %1185 = vmatprep.subr.mxu0 0.0
        %1186 = vmatpush1.msra.mxu0 0.0
        %1187 = vmatprep.subr.mxu0 0.0
        %1188 = vmatpush1.msra.mxu0 0.0
        %1189 = vmatprep.subr.mxu0 0.0
        %1190 = vmatpush1.msra.mxu0 0.0
        %1191 = vmatprep.subr.mxu0 0.0
        %1192 = vmatpush1.msra.mxu0 0.0
        %1193 = vmatprep.subr.mxu0 0.0
        %1194 = vmatpush1.msra.mxu0 0.0
        %1195 = vmatprep.subr.mxu0 0.0
        %1196 = vmatpush1.msra.mxu0 0.0
        %1197 = vmatprep.subr.mxu0 0.0
        %1198 = vmatpush1.msra.mxu0 0.0
        %1199 = vmatprep.subr.mxu0 0.0
        %1200 = vmatpush1.msra.mxu0 0.0
        %1201 = vmatprep.subr.mxu0 0.0
        %1202 = vmatpush1.msra.mxu0 0.0
        %1203 = vmatprep.subr.mxu0 0.0
        %1204 = vmatpush1.msra.mxu0 0.0
        %1205 = vmatprep.subr.mxu0 0.0
        %1206 = vmatpush1.msra.mxu0 0.0
        %1207 = vmatprep.subr.mxu0 0.0
        %1208 = vmatpush1.msra.mxu0 0.0
        %1209 = vmatprep.subr.mxu0 0.0
        %1210 = vmatpush1.msra.mxu0 0.0
        %1211 = vmatprep.subr.mxu0 0.0
        %1212 = vmatpush1.msra.mxu0 0.0
        %1213 = vmatprep.subr.mxu0 0.0
        %1214 = vmatpush1.msra.mxu0 0.0
        %1215 = vmatprep.subr.mxu0 0.0
        %1216 = vmatpush1.msra.mxu0 0.0
        %1217 = vmatprep.subr.mxu0 0.0
        %1218 = vmatpush1.msra.mxu0 0.0
        %1219 = vmatprep.subr.mxu0 0.0
        %1220 = vmatpush1.msra.mxu0 0.0
        %1221 = vmatprep.mubr.f32.mxu0 0.0
        %1222 = vmatmul.mubr.f32.gmra.mrb[0].mxu0 %v1155
        %v1223 = vpop.f32.mrb[0].mxu0
        %v1224 = vadd.f32 0.0, %v1223
        %v1225 = vpop.f32.mrb[0].mxu0
        %1226 = vdwg.mxu0
        %v1227 = vadd.f32 %v1151, %v1224
        %v1228 = vxor.u32 %v1227, 2147483648
        %v1229 = vmul.f32 %v1228, 1.442695
        %v1230 = vpow.pop %v1229
        %v1231 = vadd.f32 %v1230, 1.0
        %v1232 = vrcp.pop %v1231
        %v1233 = vmul.f32 1.0, %v1232
        %v1234 = vtanh.pop %v1227
        %v1235 = vmul.f32 %v1233, %v1141
        %1237 = vrot.lane.b32.xlu0 %v1234, 64
        %v1238 = vpop.permute.xlu0 %1237
        %v1240 = vmul.f32 %v1233, %v1238
        %1242 = vrot.lane.b32.xlu0 %v1240, 32
        %v1243 = vpop.permute.xlu0 %1242
        %v1245 = vadd.f32 %v1235, %v1243
        %v1246 = vtanh.pop %v1245
        %1248 = vrot.lane.b32.xlu0 %v1246, 64
        %v1249 = vpop.permute.xlu0 %1248
        %v1251 = vmul.f32 %v1233, %v1249
        %v1252 = vstv %s1148
        %vm1253 = vcmp.lt.s32.totalorder %v1252, %v228
        %v1254 = vsel %vm1253, 1, 0
        %v1255 = vcvt.s32.f32 %v1254
        %1257 = vset.pattern.permute.xlu0 0
        %1258 = vperm.xlu0 %1257, %v1255
        %v1259 = vpop.permute.xlu0 %1258
        %v1261 = vmul.f32 %v1259, %v1251
        %v1262 = vsub.f32 1.0, %v1255
        %1264 = vset.pattern.permute.xlu0 0
        %1265 = vperm.xlu0 %1264, %v1262
        %v1266 = vpop.permute.xlu0 %1265
        %v1268 = vmul.f32 %v1266, %v1138
        %v1269 = vadd.f32 %v1261, %v1268
        %1271 = vrot.lane.b32.xlu0 %v1261, 32
        %v1272 = vpop.permute.xlu0 %1271
        %s1274 = scalar_lea.vmem %s206, %s1149 [#allocation2]
        %1275 = vst.msk [vmem:[%s1274] sm:$0xff] %vm237, %v1272
        %1277 = vrot.lane.b32.xlu0 %v1269, 32
        %v1278 = vpop.permute.xlu0 %1277
        %1280 = vst.msk [vmem:[%s226] sm:$0xff] %vm237, %v1278
        %s1281 = sand.u32 %s100, 1
        %s1282 = scalar_lea.sflag [#allocation3], %s1281
        %s1283 = sand.u32 %s100, 1
        %s1284 = smul.addr %s1283, 64
        %s1285 = scalar_lea.vmem [#allocation2], %s1284
        %p1286 = scmp.lt.s32.totalorder %s19, 1
        %s1287 = scalar_select %p1286, %s19, 1
        %s1288 = smul.addr %s1287, 8
        %s1289 = scalar_lea.vmem %s4, %s1288
        // Predicated region
        $region33: #{lstm_forward.3} parent=31 // pred_check
          %p1290 = pneg %p110
        $region34: #{lstm_forward.3} parent=31 // pred_check_branch
          %1292 = sbr.rel (%p1290) target = $region36
        $region35: #{lstm_forward.3} parent=31 // pred_region
          %s1294 = ssub.s32 1024, 1024
          %1295 = vsyncadd %s1282, %s1294
          %s1296 = smul.addr %s19, 8
          %s1297 = smul.addr %s1296, 128
          %s1298 = scalar_lea.hbm %s3, %s1297
          %s1299 = sshll.u32 %s1285, 4
          %s1300 = int_to_ptr.vmem [resolvable:$true] %s1299
          %1305 = dma.vmem_to_hbm [thread:$0]  %s1300, 1024, %s1298, %s1282, 128, 128, 8
        $region36: #{lstm_forward.3} parent=31 // pred_fallthru
          _
        // Predicated region
        $region37: #{lstm_forward.3} parent=31 // pred_check
          %p1306 = pneg %p136
        $region38: #{lstm_forward.3} parent=31 // pred_check_branch
          %1308 = sbr.rel (%p1306) target = $region40
        $region39: #{lstm_forward.3} parent=31 // pred_region
          _
        $region40: #{lstm_forward.3} parent=31 // pred_fallthru
          _
      $region32: #{lstm_forward.3} parent=5 // pred_fallthru
        _
      %p1309 = scmp.le.s32.totalorder 2, %s14
      // Predicated region
      $region41: #{lstm_forward.3} parent=5 // pred_check
        %p1310 = pneg %p1309
      $region42: #{lstm_forward.3} parent=5 // pred_check_branch
        %1312 = sbr.rel (%p1310) target = $region44
      $region43: #{lstm_forward.3} parent=5 // pred_region
        %s1313 = ssub.s32 %s14, 2
        // Predicated region
        $region45: #{lstm_forward.3} parent=43 // pred_check
          %p1314 = pneg %p116
        $region46: #{lstm_forward.3} parent=43 // pred_check_branch
          %1316 = sbr.rel (%p1314) target = $region48
        $region47: #{lstm_forward.3} parent=43 // pred_region
          %s1317 = sand.u32 %s101, 1
          %s1318 = scalar_lea.sflag [#allocation3], %s1317
          %s1319 = sand.u32 %s101, 1
          %s1320 = smul.addr %s1319, 64
          %s1321 = scalar_lea.vmem [#allocation2], %s1320
          %1322 = dma.done %s1318, 1024
        $region48: #{lstm_forward.3} parent=43 // pred_fallthru
          _
        // Predicated region
        $region49: #{lstm_forward.3} parent=43 // pred_check
          %p1323 = pneg %p142
        $region50: #{lstm_forward.3} parent=43 // pred_check_branch
          %1325 = sbr.rel (%p1323) target = $region52
        $region51: #{lstm_forward.3} parent=43 // pred_region
          %p1326 = scmp.lt.s32.totalorder %s20, 1
          %s1327 = scalar_select %p1326, %s20, 1
          %s1328 = smul.addr %s1327, 8
          %s1329 = scalar_lea.vmem %s4, %s1328
        $region52: #{lstm_forward.3} parent=43 // pred_fallthru
          _
      $region44: #{lstm_forward.3} parent=5 // pred_fallthru
        _
    $region6: #{lstm_forward.3} parent=1 // loop_footer
      %s18 = sadd.s32 1, %s14
    $region7: #{lstm_forward.3} parent=1 // loop_footer_branch
      %13 = sbr.rel target = $region3
    $region8: #{lstm_forward.3} parent=1 // loop_exit
      _
    %1330 = vsyncpa [#allocation3], 1
    %s1331 = scalar_lea.sflag [#allocation3], 1
    %1332 = vsyncpa %s1331, 1

</llo_original>
